<compile_context>
chip_gen: v6e
topology: v6e:2x2x1
jax: 0.10.0
libtpu: 0.0.40
codegen_flags: <defaults>
</compile_context>

<pallas_src>
import jax
import jax.numpy as jnp
from jax.experimental import pallas as pl
from jax.experimental.pallas import tpu as pltpu

NPAD = 128  # lane-dense output width for every kernel


# ----------------------------- helpers --------------------------------------

def _round_up(x, m):
    return ((x + m - 1) // m) * m


def _tile_rows(m, max_tile=512):
    """Row tile (multiple of 16, bf16-friendly) and padded row count.

    Keeps at least 2 grid blocks whenever m allows it so a 'parallel' grid
    axis can be sharded across both v7x TensorCores, while still growing the
    tile toward max_tile for per-step-overhead amortization.
    """
    mp = _round_up(m, 16)
    if mp <= 16:
        tile = mp
    else:
        tile = min(max_tile, _round_up(mp // 2, 16))
    return tile, _round_up(m, tile)


# ----------------------------- Pallas kernels -------------------------------

def _conv_pool_kernel(p_ref, w_ref, b_ref, o_ref):
    """Fused conv(+bias)+ReLU+2x2-maxpool.

    p_ref: (4, tile_m, Kpad) bf16 -- the four im2col matrices (one per pool
    position) stacked so the tile arrives in a single DMA stream.
    pool(relu(conv+b)) == relu(max(conv)+b) because the per-channel bias is
    shared and ReLU is monotone.  Running max keeps <=2 f32 tiles live.
    """
    w = w_ref[...]                                        # (Kpad, 128) bf16
    acc = jnp.dot(p_ref[0], w, preferred_element_type=jnp.float32)
    acc = jnp.maximum(acc, jnp.dot(p_ref[1], w,
                                   preferred_element_type=jnp.float32))
    acc = jnp.maximum(acc, jnp.dot(p_ref[2], w,
                                   preferred_element_type=jnp.float32))
    acc = jnp.maximum(acc, jnp.dot(p_ref[3], w,
                                   preferred_element_type=jnp.float32))
    acc = jnp.maximum(acc + b_ref[...], 0.0)              # f32 bias + ReLU
    o_ref[...] = acc.astype(o_ref.dtype)                  # bf16, lane-dense


def _fc_fused_kernel(x_ref, w1_ref, b1_ref, w2_ref, b2_ref, w3_ref, b3_ref,
                     o_ref):
    """fc1 -> ReLU -> fc2 -> ReLU -> fc3, all in one VMEM-resident body.

    bf16 operands on the MXU, f32 accumulation, bias/ReLU in f32.
    """
    h = jnp.dot(x_ref[...], w1_ref[...], preferred_element_type=jnp.float32)
    h = jnp.maximum(h + b1_ref[...], 0.0).astype(jnp.bfloat16)
    h = jnp.dot(h, w2_ref[...], preferred_element_type=jnp.float32)
    h = jnp.maximum(h + b2_ref[...], 0.0).astype(jnp.bfloat16)
    h = jnp.dot(h, w3_ref[...], preferred_element_type=jnp.float32)
    o_ref[...] = (h + b3_ref[...]).astype(o_ref.dtype)


# ------------------------------- host glue ----------------------------------

def _pool_patches_stacked(x_nhwc, kh, kw, kpad, mpad):
    """Stacked im2col tensor (4, mpad, kpad), one slab per 2x2-pool position.

    out[dy*2+dx, n*PH*PW + ph*PW + pw, (i*kw+j)*C + c]
        = x[n, 2*ph + dy + i, 2*pw + dx + j, c]
    Column order (kh, kw, C) matches the conv-weight flattening below.
    """
    N, H, W, C = x_nhwc.shape
    OH, OW = H - kh + 1, W - kw + 1
    PH, PW = OH // 2, OW // 2
    M, K = N * PH * PW, kh * kw * C
    mats = []
    for dy in range(2):
        for dx in range(2):
            cols = [
                x_nhwc[:, dy + i: dy + i + 2 * PH: 2,
                          dx + j: dx + j + 2 * PW: 2, :]
                for i in range(kh) for j in range(kw)
            ]
            p = jnp.stack(cols, axis=3)                    # (N,PH,PW,kh*kw,C)
            mats.append(p.reshape(M, K))
    stacked = jnp.stack(mats, axis=0)                      # (4, M, K)
    return jnp.pad(stacked, ((0, 0), (0, mpad - M), (0, kpad - K)))


def conv_relu_pool(x_nhwc, w2d_pad, b_pad, kh, kw):
    """x: (N,H,W,C) bf16 -> padded pooled output (Mpad, 128) bf16 + metadata.

    Row n*PH*PW + ph*PW + pw holds pooled position (n, ph, pw); column c holds
    output channel c (columns >= cout and padded-K contributions are zero).
    """
    N, H, W, C = x_nhwc.shape
    K = kh * kw * C
    Kpad = w2d_pad.shape[0]
    OH, OW = H - kh + 1, W - kw + 1
    PH, PW = OH // 2, OW // 2
    M = N * PH * PW
    tile_m, Mpad = _tile_rows(M, max_tile=512)

    patches = _pool_patches_stacked(x_nhwc, kh, kw, Kpad, Mpad)  # bf16

    flops = 2 * 4 * Mpad * Kpad * NPAD
    bytes_accessed = (4 * Mpad * Kpad * 2 + Kpad * NPAD * 2
                      + NPAD * 4 + Mpad * NPAD * 2)

    out = pl.pallas_call(
        _conv_pool_kernel,
        out_shape=jax.ShapeDtypeStruct((Mpad, NPAD), jnp.bfloat16),
        grid=(Mpad // tile_m,),
        in_specs=[pl.BlockSpec((4, tile_m, Kpad), lambda i: (0, i, 0)),
                  pl.BlockSpec((Kpad, NPAD), lambda i: (0, 0)),
                  pl.BlockSpec((1, NPAD), lambda i: (0, 0))],
        out_specs=pl.BlockSpec((tile_m, NPAD), lambda i: (i, 0)),
        compiler_params=pltpu.CompilerParams(
            dimension_semantics=("parallel",),
            vmem_limit_bytes=8 * 1024 * 1024),
        cost_estimate=pl.CostEstimate(flops=flops, transcendentals=0,
                                      bytes_accessed=bytes_accessed),
    )(patches, w2d_pad, b_pad)

    return out, (M, PH, PW)


def fc_fused(x_bf16, w1, b1, w2, b2, w3, b3, n_out):
    """x: (N, K) bf16 -> (N, n_out) f32 via one fused 3-layer MLP kernel."""
    M, K = x_bf16.shape
    tile_m, Mpad = _tile_rows(M, max_tile=256)
    xp = jnp.pad(x_bf16, ((0, Mpad - M), (0, 0)))
    H1, H2, NO = w1.shape[1], w2.shape[1], w3.shape[1]

    flops = 2 * Mpad * (K * H1 + H1 * H2 + H2 * NO)
    bytes_accessed = (Mpad * K * 2 + (K * H1 + H1 * H2 + H2 * NO) * 2
                      + (H1 + H2 + NO) * 4 + Mpad * NO * 4)

    out = pl.pallas_call(
        _fc_fused_kernel,
        out_shape=jax.ShapeDtypeStruct((Mpad, NO), jnp.float32),
        grid=(Mpad // tile_m,),
        in_specs=[pl.BlockSpec((tile_m, K), lambda i: (i, 0)),
                  pl.BlockSpec((K, H1), lambda i: (0, 0)),
                  pl.BlockSpec((1, H1), lambda i: (0, 0)),
                  pl.BlockSpec((H1, H2), lambda i: (0, 0)),
                  pl.BlockSpec((1, H2), lambda i: (0, 0)),
                  pl.BlockSpec((H2, NO), lambda i: (0, 0)),
                  pl.BlockSpec((1, NO), lambda i: (0, 0))],
        out_specs=pl.BlockSpec((tile_m, NO), lambda i: (i, 0)),
        compiler_params=pltpu.CompilerParams(
            dimension_semantics=("parallel",),
            vmem_limit_bytes=8 * 1024 * 1024),
        cost_estimate=pl.CostEstimate(flops=flops, transcendentals=0,
                                      bytes_accessed=bytes_accessed),
    )(xp, w1, b1, w2, b2, w3, b3)

    return out[:M, :n_out]


# --------------------------- params & forward --------------------------------

def init_params(key):
    ks = jax.random.split(key, 10)
    s = 0.1
    return {
        "conv1_w": s * jax.random.normal(ks[0], (6, 3, 5, 5), jnp.float32),
        "conv1_b": s * jax.random.normal(ks[1], (6,), jnp.float32),
        "conv2_w": s * jax.random.normal(ks[2], (16, 6, 5, 5), jnp.float32),
        "conv2_b": s * jax.random.normal(ks[3], (16,), jnp.float32),
        "fc1_w": s * jax.random.normal(ks[4], (120, 400), jnp.float32),
        "fc1_b": s * jax.random.normal(ks[5], (120,), jnp.float32),
        "fc2_w": s * jax.random.normal(ks[6], (84, 120), jnp.float32),
        "fc2_b": s * jax.random.normal(ks[7], (84,), jnp.float32),
        "fc3_w": s * jax.random.normal(ks[8], (10, 84), jnp.float32),
        "fc3_b": s * jax.random.normal(ks[9], (10,), jnp.float32),
    }


def prepare_params(p):
    """One-time weight prep: reshape/transpose, pad to lane-dense widths,
    cast MXU operands to bf16, and fold PyTorch's NCHW flatten permutation
    into fc1's weight rows so conv2's padded output feeds fc1 directly."""

    def conv_prep(w_oihw, b):
        cout, cin, kh, kw = w_oihw.shape
        k = kh * kw * cin
        kpad = _round_up(k, 16)
        w2d = jnp.transpose(w_oihw, (2, 3, 1, 0)).reshape(k, cout)
        w2d = jnp.pad(w2d, ((0, kpad - k), (0, NPAD - cout))).astype(jnp.bfloat16)
        bp = jnp.pad(b, (0, NPAD - cout)).astype(jnp.float32).reshape(1, NPAD)
        return w2d, bp

    def fc1_prep(w, b, cin=16, pos=25):
        # PyTorch flatten index k = c*pos + p (NCHW); conv2 kernel emits the
        # activation as rows (n, p) x 128 padded channels, so permute the
        # weight rows to index q = p*128 + c and zero-pad c in [cin, 128).
        nout, k = w.shape                                  # (120, 400)
        wt = w.T.reshape(cin, pos, nout)                   # [c, p, j]
        w2 = jnp.zeros((pos, NPAD, nout), jnp.float32)
        w2 = w2.at[:, :cin, :].set(jnp.transpose(wt, (1, 0, 2)))  # [p, c, j]
        w2 = w2.reshape(pos * NPAD, nout)
        w2 = jnp.pad(w2, ((0, 0), (0, NPAD - nout))).astype(jnp.bfloat16)
        bp = jnp.pad(b, (0, NPAD - nout)).astype(jnp.float32).reshape(1, NPAD)
        return w2, bp

    def fc_prep(w_nk, b, kpad, npad):
        n, k = w_nk.shape
        wt = jnp.pad(w_nk.T, ((0, kpad - k), (0, npad - n))).astype(jnp.bfloat16)
        bp = jnp.pad(b, (0, npad - n)).astype(jnp.float32).reshape(1, npad)
        return wt, bp

    c1w, c1b = conv_prep(p["conv1_w"], p["conv1_b"])       # K=75  -> 80
    c2w, c2b = conv_prep(p["conv2_w"], p["conv2_b"])       # K=150 -> 160
    f1w, f1b = fc1_prep(p["fc1_w"], p["fc1_b"])            # (3200, 128)
    f2w, f2b = fc_prep(p["fc2_w"], p["fc2_b"], kpad=128, npad=128)
    f3w, f3b = fc_prep(p["fc3_w"], p["fc3_b"], kpad=128, npad=128)
    return {"conv1_w": c1w, "conv1_b": c1b, "conv2_w": c2w, "conv2_b": c2b,
            "fc1_w": f1w, "fc1_b": f1b, "fc2_w": f2w, "fc2_b": f2b,
            "fc3_w": f3w, "fc3_b": f3b}


def net_forward(prep, x_nchw):
    N = x_nchw.shape[0]
    x = jnp.transpose(x_nchw, (0, 2, 3, 1)).astype(jnp.bfloat16)   # NHWC bf16

    o1, (M1, PH1, PW1) = conv_relu_pool(x, prep["conv1_w"], prep["conv1_b"],
                                        5, 5)                      # bf16
    a1 = o1[:M1, :6].reshape(N, PH1, PW1, 6)                       # (N,14,14,6)

    o2, (M2, PH2, PW2) = conv_relu_pool(a1, prep["conv2_w"], prep["conv2_b"],
                                        5, 5)                      # (M2pad,128)

    # fc1's weight rows were permuted/zero-padded at prep time, so the plain
    # row-major flatten of the padded conv2 output is the fc1 input (no NCHW
    # transpose, no channel slice).
    flat = o2[:M2].reshape(N, PH2 * PW2 * NPAD)                    # (N, 3200)

    return fc_fused(flat,
                    prep["fc1_w"], prep["fc1_b"],
                    prep["fc2_w"], prep["fc2_b"],
                    prep["fc3_w"], prep["fc3_b"], 10)              # (N, 10)


# --------------------------- pure-JAX f32 reference --------------------------

def net_reference(params, x_nchw):
    def conv(x, w, b):
        y = jax.lax.conv_general_dilated(
            x, w, (1, 1), "VALID", dimension_numbers=("NCHW", "OIHW", "NCHW"))
        return jax.nn.relu(y + b[None, :, None, None])

    def pool(x):
        n, c, h, w = x.shape
        return x.reshape(n, c, h // 2, 2, w // 2, 2).max(axis=(3, 5))

    x = pool(conv(x_nchw, params["conv1_w"], params["conv1_b"]))
    x = pool(conv(x, params["conv2_w"], params["conv2_b"]))
    x = x.reshape(x.shape[0], -1)                                  # NCHW flatten
    x = jax.nn.relu(x @ params["fc1_w"].T + params["fc1_b"])
    x = jax.nn.relu(x @ params["fc2_w"].T + params["fc2_b"])
    return x @ params["fc3_w"].T + params["fc3_b"]


if __name__ == "__main__":
    key = jax.random.PRNGKey(0)
    pkey, xkey = jax.random.split(key)
    params = init_params(pkey)
    prep = prepare_params(params)
    x = jax.random.normal(xkey, (2, 3, 32, 32), jnp.float32)  # NCHW, like PyTorch

    fwd = jax.jit(net_forward)
    out = jax.block_until_ready(fwd(prep, x))
    assert out.shape == (2, 10) and out.dtype == jnp.float32

    ref = net_reference(params, x)
    err = float(jnp.max(jnp.abs(out - ref)))
    assert err < 0.25, f"mismatch vs f32 reference: {err}"
    print("KERNEL_OK")
</pallas_src>

<mosaic_0001>
module attributes {stable_mosaic.version = 11 : i64} {
  func.func @_conv_pool_kernel(%arg0: i32, %arg1: memref<4x208x80xbf16, #tpu.memory_space<vmem>>, %arg2: memref<80x128xbf16, #tpu.memory_space<vmem>>, %arg3: memref<1x128xf32, #tpu.memory_space<vmem>>, %arg4: memref<208x128xbf16, #tpu.memory_space<vmem>>) attributes {dimension_semantics = [#tpu.dimension_semantics<parallel>], iteration_bounds = array<i64: 2>, scalar_prefetch = 0 : i64, scratch_operands = 0 : i64, tpu.core_type = #tpu.core_type<tc>, window_params = [{transform_indices = @transform_0, window_bounds = array<i64: 4, 208, 80>}, {pipeline_mode = #tpu.pipeline_mode<synchronous>, transform_indices = @transform_1, window_bounds = array<i64: 80, 128>}, {pipeline_mode = #tpu.pipeline_mode<synchronous>, transform_indices = @transform_2, window_bounds = array<i64: 1, 128>}, {transform_indices = @transform_3, window_bounds = array<i64: 208, 128>}]} {
    %c0 = arith.constant 0 : index
    %c0_0 = arith.constant 0 : index
    %0 = vector.load %arg2[%c0, %c0_0] : memref<80x128xbf16, #tpu.memory_space<vmem>>, vector<80x128xbf16>
    %c0_1 = arith.constant 0 : index
    %c0_2 = arith.constant 0 : index
    %c0_3 = arith.constant 0 : index
    %1 = vector.load %arg1[%c0_1, %c0_2, %c0_3] : memref<4x208x80xbf16, #tpu.memory_space<vmem>>, vector<1x208x80xbf16>
    %2 = vector.shape_cast %1 : vector<1x208x80xbf16> to vector<208x80xbf16>
    %cst = arith.constant dense<0.000000e+00> : vector<208x128xf32>
    %3 = tpu.matmul %2, %0, %cst {dimension_numbers = #tpu.dot_dimension_numbers<[1], [0], [0], [1], [0, 0, 1, 1], [], []>} : vector<208x80xbf16>, vector<80x128xbf16>, vector<208x128xf32> -> vector<208x128xf32>
    %c1 = arith.constant 1 : index
    %c0_4 = arith.constant 0 : index
    %c0_5 = arith.constant 0 : index
    %4 = vector.load %arg1[%c1, %c0_4, %c0_5] : memref<4x208x80xbf16, #tpu.memory_space<vmem>>, vector<1x208x80xbf16>
    %5 = vector.shape_cast %4 : vector<1x208x80xbf16> to vector<208x80xbf16>
    %cst_6 = arith.constant dense<0.000000e+00> : vector<208x128xf32>
    %6 = tpu.matmul %5, %0, %cst_6 {dimension_numbers = #tpu.dot_dimension_numbers<[1], [0], [0], [1], [0, 0, 1, 1], [], []>} : vector<208x80xbf16>, vector<80x128xbf16>, vector<208x128xf32> -> vector<208x128xf32>
    %7 = arith.maximumf %3, %6 : vector<208x128xf32>
    %c2 = arith.constant 2 : index
    %c0_7 = arith.constant 0 : index
    %c0_8 = arith.constant 0 : index
    %8 = vector.load %arg1[%c2, %c0_7, %c0_8] : memref<4x208x80xbf16, #tpu.memory_space<vmem>>, vector<1x208x80xbf16>
    %9 = vector.shape_cast %8 : vector<1x208x80xbf16> to vector<208x80xbf16>
    %cst_9 = arith.constant dense<0.000000e+00> : vector<208x128xf32>
    %10 = tpu.matmul %9, %0, %cst_9 {dimension_numbers = #tpu.dot_dimension_numbers<[1], [0], [0], [1], [0, 0, 1, 1], [], []>} : vector<208x80xbf16>, vector<80x128xbf16>, vector<208x128xf32> -> vector<208x128xf32>
    %11 = arith.maximumf %7, %10 : vector<208x128xf32>
    %c3 = arith.constant 3 : index
    %c0_10 = arith.constant 0 : index
    %c0_11 = arith.constant 0 : index
    %12 = vector.load %arg1[%c3, %c0_10, %c0_11] : memref<4x208x80xbf16, #tpu.memory_space<vmem>>, vector<1x208x80xbf16>
    %13 = vector.shape_cast %12 : vector<1x208x80xbf16> to vector<208x80xbf16>
    %cst_12 = arith.constant dense<0.000000e+00> : vector<208x128xf32>
    %14 = tpu.matmul %13, %0, %cst_12 {dimension_numbers = #tpu.dot_dimension_numbers<[1], [0], [0], [1], [0, 0, 1, 1], [], []>} : vector<208x80xbf16>, vector<80x128xbf16>, vector<208x128xf32> -> vector<208x128xf32>
    %15 = arith.maximumf %11, %14 : vector<208x128xf32>
    %c0_13 = arith.constant 0 : index
    %c0_14 = arith.constant 0 : index
    %16 = vector.load %arg3[%c0_13, %c0_14] : memref<1x128xf32, #tpu.memory_space<vmem>>, vector<1x128xf32>
    %17 = vector.broadcast %16 : vector<1x128xf32> to vector<208x128xf32>
    %18 = arith.addf %15, %17 : vector<208x128xf32>
    %cst_15 = arith.constant 0.000000e+00 : f32
    %19 = vector.broadcast %cst_15 : f32 to vector<208x128xf32>
    %20 = arith.maximumf %18, %19 : vector<208x128xf32>
    %21 = arith.truncf %20 : vector<208x128xf32> to vector<208x128xbf16>
    %c0_16 = arith.constant 0 : index
    %c0_17 = arith.constant 0 : index
    %22 = vector.load %arg4[%c0_16, %c0_17] : memref<208x128xbf16, #tpu.memory_space<vmem>>, vector<208x128xbf16>
    tpu.vector_store %arg4[%c0_16, %c0_17], %21 {strides = array<i32>} : memref<208x128xbf16, #tpu.memory_space<vmem>>, vector<208x128xbf16>,
    return
  }
  func.func @transform_0(%arg0: i32) -> (i32, i32, i32) {
    %c0_i32 = arith.constant 0 : i32
    %c0_i32_0 = arith.constant 0 : i32
    %c0_i32_1 = arith.constant 0 : i32
    return %c0_i32, %arg0, %c0_i32_0 : i32, i32, i32
  }
  func.func @transform_1(%arg0: i32) -> (i32, i32) {
    %c0_i32 = arith.constant 0 : i32
    %c0_i32_0 = arith.constant 0 : i32
    %c0_i32_1 = arith.constant 0 : i32
    return %c0_i32, %c0_i32_0 : i32, i32
  }
  func.func @transform_2(%arg0: i32) -> (i32, i32) {
    %c0_i32 = arith.constant 0 : i32
    %c0_i32_0 = arith.constant 0 : i32
    %c0_i32_1 = arith.constant 0 : i32
    return %c0_i32, %c0_i32_0 : i32, i32
  }
  func.func @transform_3(%arg0: i32) -> (i32, i32) {
    %c0_i32 = arith.constant 0 : i32
    %c0_i32_0 = arith.constant 0 : i32
    return %arg0, %c0_i32 : i32, i32
  }
}

module attributes {stable_mosaic.version = 11 : i64} {
  func.func @_conv_pool_kernel(%arg0: i32, %arg1: memref<4x32x160xbf16, #tpu.memory_space<vmem>>, %arg2: memref<160x128xbf16, #tpu.memory_space<vmem>>, %arg3: memref<1x128xf32, #tpu.memory_space<vmem>>, %arg4: memref<32x128xbf16, #tpu.memory_space<vmem>>) attributes {dimension_semantics = [#tpu.dimension_semantics<parallel>], iteration_bounds = array<i64: 2>, scalar_prefetch = 0 : i64, scratch_operands = 0 : i64, tpu.core_type = #tpu.core_type<tc>, window_params = [{transform_indices = @transform_0, window_bounds = array<i64: 4, 32, 160>}, {pipeline_mode = #tpu.pipeline_mode<synchronous>, transform_indices = @transform_1, window_bounds = array<i64: 160, 128>}, {pipeline_mode = #tpu.pipeline_mode<synchronous>, transform_indices = @transform_2, window_bounds = array<i64: 1, 128>}, {transform_indices = @transform_3, window_bounds = array<i64: 32, 128>}]} {
    %c0 = arith.constant 0 : index
    %c0_0 = arith.constant 0 : index
    %0 = vector.load %arg2[%c0, %c0_0] : memref<160x128xbf16, #tpu.memory_space<vmem>>, vector<160x128xbf16>
    %c0_1 = arith.constant 0 : index
    %c0_2 = arith.constant 0 : index
    %c0_3 = arith.constant 0 : index
    %1 = vector.load %arg1[%c0_1, %c0_2, %c0_3] : memref<4x32x160xbf16, #tpu.memory_space<vmem>>, vector<1x32x160xbf16>
    %2 = vector.shape_cast %1 : vector<1x32x160xbf16> to vector<32x160xbf16>
    %cst = arith.constant dense<0.000000e+00> : vector<32x128xf32>
    %3 = tpu.matmul %2, %0, %cst {dimension_numbers = #tpu.dot_dimension_numbers<[1], [0], [0], [1], [0, 0, 1, 1], [], []>} : vector<32x160xbf16>, vector<160x128xbf16>, vector<32x128xf32> -> vector<32x128xf32>
    %c1 = arith.constant 1 : index
    %c0_4 = arith.constant 0 : index
    %c0_5 = arith.constant 0 : index
    %4 = vector.load %arg1[%c1, %c0_4, %c0_5] : memref<4x32x160xbf16, #tpu.memory_space<vmem>>, vector<1x32x160xbf16>
    %5 = vector.shape_cast %4 : vector<1x32x160xbf16> to vector<32x160xbf16>
    %cst_6 = arith.constant dense<0.000000e+00> : vector<32x128xf32>
    %6 = tpu.matmul %5, %0, %cst_6 {dimension_numbers = #tpu.dot_dimension_numbers<[1], [0], [0], [1], [0, 0, 1, 1], [], []>} : vector<32x160xbf16>, vector<160x128xbf16>, vector<32x128xf32> -> vector<32x128xf32>
    %7 = arith.maximumf %3, %6 : vector<32x128xf32>
    %c2 = arith.constant 2 : index
    %c0_7 = arith.constant 0 : index
    %c0_8 = arith.constant 0 : index
    %8 = vector.load %arg1[%c2, %c0_7, %c0_8] : memref<4x32x160xbf16, #tpu.memory_space<vmem>>, vector<1x32x160xbf16>
    %9 = vector.shape_cast %8 : vector<1x32x160xbf16> to vector<32x160xbf16>
    %cst_9 = arith.constant dense<0.000000e+00> : vector<32x128xf32>
    %10 = tpu.matmul %9, %0, %cst_9 {dimension_numbers = #tpu.dot_dimension_numbers<[1], [0], [0], [1], [0, 0, 1, 1], [], []>} : vector<32x160xbf16>, vector<160x128xbf16>, vector<32x128xf32> -> vector<32x128xf32>
    %11 = arith.maximumf %7, %10 : vector<32x128xf32>
    %c3 = arith.constant 3 : index
    %c0_10 = arith.constant 0 : index
    %c0_11 = arith.constant 0 : index
    %12 = vector.load %arg1[%c3, %c0_10, %c0_11] : memref<4x32x160xbf16, #tpu.memory_space<vmem>>, vector<1x32x160xbf16>
    %13 = vector.shape_cast %12 : vector<1x32x160xbf16> to vector<32x160xbf16>
    %cst_12 = arith.constant dense<0.000000e+00> : vector<32x128xf32>
    %14 = tpu.matmul %13, %0, %cst_12 {dimension_numbers = #tpu.dot_dimension_numbers<[1], [0], [0], [1], [0, 0, 1, 1], [], []>} : vector<32x160xbf16>, vector<160x128xbf16>, vector<32x128xf32> -> vector<32x128xf32>
    %15 = arith.maximumf %11, %14 : vector<32x128xf32>
    %c0_13 = arith.constant 0 : index
    %c0_14 = arith.constant 0 : index
    %16 = vector.load %arg3[%c0_13, %c0_14] : memref<1x128xf32, #tpu.memory_space<vmem>>, vector<1x128xf32>
    %17 = vector.broadcast %16 : vector<1x128xf32> to vector<32x128xf32>
    %18 = arith.addf %15, %17 : vector<32x128xf32>
    %cst_15 = arith.constant 0.000000e+00 : f32
    %19 = vector.broadcast %cst_15 : f32 to vector<32x128xf32>
    %20 = arith.maximumf %18, %19 : vector<32x128xf32>
    %21 = arith.truncf %20 : vector<32x128xf32> to vector<32x128xbf16>
    %c0_16 = arith.constant 0 : index
    %c0_17 = arith.constant 0 : index
    %22 = vector.load %arg4[%c0_16, %c0_17] : memref<32x128xbf16, #tpu.memory_space<vmem>>, vector<32x128xbf16>
    tpu.vector_store %arg4[%c0_16, %c0_17], %21 {strides = array<i32>} : memref<32x128xbf16, #tpu.memory_space<vmem>>, vector<32x128xbf16>,
    return
  }
  func.func @transform_0(%arg0: i32) -> (i32, i32, i32) {
    %c0_i32 = arith.constant 0 : i32
    %c0_i32_0 = arith.constant 0 : i32
    %c0_i32_1 = arith.constant 0 : i32
    return %c0_i32, %arg0, %c0_i32_0 : i32, i32, i32
  }
  func.func @transform_1(%arg0: i32) -> (i32, i32) {
    %c0_i32 = arith.constant 0 : i32
    %c0_i32_0 = arith.constant 0 : i32
    %c0_i32_1 = arith.constant 0 : i32
    return %c0_i32, %c0_i32_0 : i32, i32
  }
  func.func @transform_2(%arg0: i32) -> (i32, i32) {
    %c0_i32 = arith.constant 0 : i32
    %c0_i32_0 = arith.constant 0 : i32
    %c0_i32_1 = arith.constant 0 : i32
    return %c0_i32, %c0_i32_0 : i32, i32
  }
  func.func @transform_3(%arg0: i32) -> (i32, i32) {
    %c0_i32 = arith.constant 0 : i32
    %c0_i32_0 = arith.constant 0 : i32
    return %arg0, %c0_i32 : i32, i32
  }
}

module attributes {stable_mosaic.version = 11 : i64} {
  func.func @_fc_fused_kernel(%arg0: i32, %arg1: memref<16x3200xbf16, #tpu.memory_space<vmem>>, %arg2: memref<3200x128xbf16, #tpu.memory_space<vmem>>, %arg3: memref<1x128xf32, #tpu.memory_space<vmem>>, %arg4: memref<128x128xbf16, #tpu.memory_space<vmem>>, %arg5: memref<1x128xf32, #tpu.memory_space<vmem>>, %arg6: memref<128x128xbf16, #tpu.memory_space<vmem>>, %arg7: memref<1x128xf32, #tpu.memory_space<vmem>>, %arg8: memref<16x128xf32, #tpu.memory_space<vmem>>) attributes {dimension_semantics = [#tpu.dimension_semantics<parallel>], iteration_bounds = array<i64: 1>, scalar_prefetch = 0 : i64, scratch_operands = 0 : i64, tpu.core_type = #tpu.core_type<tc>, window_params = [{transform_indices = @transform_0, window_bounds = array<i64: 16, 3200>}, {pipeline_mode = #tpu.pipeline_mode<synchronous>, transform_indices = @transform_1, window_bounds = array<i64: 3200, 128>}, {pipeline_mode = #tpu.pipeline_mode<synchronous>, transform_indices = @transform_2, window_bounds = array<i64: 1, 128>}, {pipeline_mode = #tpu.pipeline_mode<synchronous>, transform_indices = @transform_3, window_bounds = array<i64: 128, 128>}, {pipeline_mode = #tpu.pipeline_mode<synchronous>, transform_indices = @transform_4, window_bounds = array<i64: 1, 128>}, {pipeline_mode = #tpu.pipeline_mode<synchronous>, transform_indices = @transform_5, window_bounds = array<i64: 128, 128>}, {pipeline_mode = #tpu.pipeline_mode<synchronous>, transform_indices = @transform_6, window_bounds = array<i64: 1, 128>}, {transform_indices = @transform_7, window_bounds = array<i64: 16, 128>}]} {
    %c0 = arith.constant 0 : index
    %c0_0 = arith.constant 0 : index
    %0 = vector.load %arg1[%c0, %c0_0] : memref<16x3200xbf16, #tpu.memory_space<vmem>>, vector<16x3200xbf16>
    %c0_1 = arith.constant 0 : index
    %c0_2 = arith.constant 0 : index
    %1 = vector.load %arg2[%c0_1, %c0_2] : memref<3200x128xbf16, #tpu.memory_space<vmem>>, vector<3200x128xbf16>
    %cst = arith.constant dense<0.000000e+00> : vector<16x128xf32>
    %2 = tpu.matmul %0, %1, %cst {dimension_numbers = #tpu.dot_dimension_numbers<[1], [0], [0], [1], [0, 0, 1, 1], [], []>} : vector<16x3200xbf16>, vector<3200x128xbf16>, vector<16x128xf32> -> vector<16x128xf32>
    %c0_3 = arith.constant 0 : index
    %c0_4 = arith.constant 0 : index
    %3 = vector.load %arg3[%c0_3, %c0_4] : memref<1x128xf32, #tpu.memory_space<vmem>>, vector<1x128xf32>
    %4 = vector.broadcast %3 : vector<1x128xf32> to vector<16x128xf32>
    %5 = arith.addf %2, %4 : vector<16x128xf32>
    %cst_5 = arith.constant 0.000000e+00 : f32
    %6 = vector.broadcast %cst_5 : f32 to vector<16x128xf32>
    %7 = arith.maximumf %5, %6 : vector<16x128xf32>
    %8 = arith.truncf %7 : vector<16x128xf32> to vector<16x128xbf16>
    %c0_6 = arith.constant 0 : index
    %c0_7 = arith.constant 0 : index
    %9 = vector.load %arg4[%c0_6, %c0_7] : memref<128x128xbf16, #tpu.memory_space<vmem>>, vector<128x128xbf16>
    %cst_8 = arith.constant dense<0.000000e+00> : vector<16x128xf32>
    %10 = tpu.matmul %8, %9, %cst_8 {dimension_numbers = #tpu.dot_dimension_numbers<[1], [0], [0], [1], [0, 0, 1, 1], [], []>} : vector<16x128xbf16>, vector<128x128xbf16>, vector<16x128xf32> -> vector<16x128xf32>
    %c0_9 = arith.constant 0 : index
    %c0_10 = arith.constant 0 : index
    %11 = vector.load %arg5[%c0_9, %c0_10] : memref<1x128xf32, #tpu.memory_space<vmem>>, vector<1x128xf32>
    %12 = vector.broadcast %11 : vector<1x128xf32> to vector<16x128xf32>
    %13 = arith.addf %10, %12 : vector<16x128xf32>
    %cst_11 = arith.constant 0.000000e+00 : f32
    %14 = vector.broadcast %cst_11 : f32 to vector<16x128xf32>
    %15 = arith.maximumf %13, %14 : vector<16x128xf32>
    %16 = arith.truncf %15 : vector<16x128xf32> to vector<16x128xbf16>
    %c0_12 = arith.constant 0 : index
    %c0_13 = arith.constant 0 : index
    %17 = vector.load %arg6[%c0_12, %c0_13] : memref<128x128xbf16, #tpu.memory_space<vmem>>, vector<128x128xbf16>
    %cst_14 = arith.constant dense<0.000000e+00> : vector<16x128xf32>
    %18 = tpu.matmul %16, %17, %cst_14 {dimension_numbers = #tpu.dot_dimension_numbers<[1], [0], [0], [1], [0, 0, 1, 1], [], []>} : vector<16x128xbf16>, vector<128x128xbf16>, vector<16x128xf32> -> vector<16x128xf32>
    %c0_15 = arith.constant 0 : index
    %c0_16 = arith.constant 0 : index
    %19 = vector.load %arg7[%c0_15, %c0_16] : memref<1x128xf32, #tpu.memory_space<vmem>>, vector<1x128xf32>
    %20 = vector.broadcast %19 : vector<1x128xf32> to vector<16x128xf32>
    %21 = arith.addf %18, %20 : vector<16x128xf32>
    %c0_17 = arith.constant 0 : index
    %c0_18 = arith.constant 0 : index
    %22 = vector.load %arg8[%c0_17, %c0_18] : memref<16x128xf32, #tpu.memory_space<vmem>>, vector<16x128xf32>
    tpu.vector_store %arg8[%c0_17, %c0_18], %21 {strides = array<i32>} : memref<16x128xf32, #tpu.memory_space<vmem>>, vector<16x128xf32>,
    return
  }
  func.func @transform_0(%arg0: i32) -> (i32, i32) {
    %c0_i32 = arith.constant 0 : i32
    %c0_i32_0 = arith.constant 0 : i32
    return %arg0, %c0_i32 : i32, i32
  }
  func.func @transform_1(%arg0: i32) -> (i32, i32) {
    %c0_i32 = arith.constant 0 : i32
    %c0_i32_0 = arith.constant 0 : i32
    %c0_i32_1 = arith.constant 0 : i32
    return %c0_i32, %c0_i32_0 : i32, i32
  }
  func.func @transform_2(%arg0: i32) -> (i32, i32) {
    %c0_i32 = arith.constant 0 : i32
    %c0_i32_0 = arith.constant 0 : i32
    %c0_i32_1 = arith.constant 0 : i32
    return %c0_i32, %c0_i32_0 : i32, i32
  }
  func.func @transform_3(%arg0: i32) -> (i32, i32) {
    %c0_i32 = arith.constant 0 : i32
    %c0_i32_0 = arith.constant 0 : i32
    %c0_i32_1 = arith.constant 0 : i32
    return %c0_i32, %c0_i32_0 : i32, i32
  }
  func.func @transform_4(%arg0: i32) -> (i32, i32) {
    %c0_i32 = arith.constant 0 : i32
    %c0_i32_0 = arith.constant 0 : i32
    %c0_i32_1 = arith.constant 0 : i32
    return %c0_i32, %c0_i32_0 : i32, i32
  }
  func.func @transform_5(%arg0: i32) -> (i32, i32) {
    %c0_i32 = arith.constant 0 : i32
    %c0_i32_0 = arith.constant 0 : i32
    %c0_i32_1 = arith.constant 0 : i32
    return %c0_i32, %c0_i32_0 : i32, i32
  }
  func.func @transform_6(%arg0: i32) -> (i32, i32) {
    %c0_i32 = arith.constant 0 : i32
    %c0_i32_0 = arith.constant 0 : i32
    %c0_i32_1 = arith.constant 0 : i32
    return %c0_i32, %c0_i32_0 : i32, i32
  }
  func.func @transform_7(%arg0: i32) -> (i32, i32) {
    %c0_i32 = arith.constant 0 : i32
    %c0_i32_0 = arith.constant 0 : i32
    return %arg0, %c0_i32 : i32, i32
  }
}

</mosaic_0001>

<llo_original>
// kernel: net_forward.3
$region0: #{net_forward.3}
  #allocation0 [shape = 'u32[]', space=smem, size = 0x4, offset = 0x4, fixed_abs, tag = 'smem constant byte address 0x4 - core index']
  #allocation1 [shape = 'u32[144,128]{1,0:T(1,128)}', space=vmem, size = 0x12000, scoped, tag = 'internal scratch']
  %s0 = inlined_call_operand.vmem [shape: bf16[4,416,80], index: 0, kind: input, shape index: {}]
  %s1 = inlined_call_operand.vmem [shape: bf16[80,128], index: 1, kind: input, shape index: {}]
  %s2 = inlined_call_operand.vmem [shape: f32[1,128], index: 2, kind: input, shape index: {}]
  %s3 = inlined_call_operand.vmem [shape: bf16[416,128], index: 3, kind: output, shape index: {}]
  %s4 = sld [smem:[#allocation0]]
  $region86: #{net_forward.3} parent=0
    _
  %s6 = ssub.s32 1, %s4
  %s7 = scalar_select 0, %s6, %s4
  $region1: #{net_forward.3} parent=0
    #allocation2 [shape = 'u8[425984]{0}', space=vmem, size = 0x68000, scoped, tag = 'input window, operand 0']
    loop: start=0, step=1, limit=4
    $region2: #{net_forward.3} parent=1 // loop_pre_header
      _
    $region3: #{net_forward.3} parent=1 // loop_header
      %s9 = sphi 0, %s13
      %p10 = scmp.ge.s32.totalorder %s9, 4
      %s19 = sphi 0, %s21
      %s22 = sphi 0, %s19
      %s23 = sphi 0, %s22
      %s39 = sphi 0, %s23
      %s43 = sphi 0, %s43
      %s45 = sphi 0, %s43
      %s46 = sphi 0, %s45
      %s60 = sphi 0, %s46
      %s64 = sphi 0, %s64
      %s66 = sphi 0, %s64
      %s67 = sphi 0, %s66
      %s81 = sphi 0, %s67
      %s87 = sphi 0, %s89
      %s90 = sphi 0, %s87
      %s91 = sphi 0, %s90
      %s107 = sphi 0, %s91
    $region4: #{net_forward.3} parent=1 // loop_header_branch
      %12 = sbr.rel (%p10) target = $region8
    $region5: #{net_forward.3} parent=1 // loop_body
      %s14 = ssub.s32 %s9, 1
      %s15 = ssub.s32 %s9, 2
      %s16 = sadd.s32 %s9, 1
      %s17 = ssub.s32 %s9, %s16
      %p18 = scmp.eq.s32.totalorder %s17, 0
      %s20 = sadd.s32 %s19, 1
      %s21 = scalar_select %p18, %s19, %s20
      %p24 = pneg %p18
      %p25 = scmp.eq.s32.totalorder %s9, 1
      %p26 = por %p24, %p25
      %p27 = scmp.ne.s32.totalorder %s19, %s22
      %p28 = scmp.eq.s32.totalorder %s9, 0
      %p29 = por %p27, %p28
      %p30 = scmp.ne.s32.totalorder %s19, %s22
      %p31 = scmp.eq.s32.totalorder %s14, 1
      %p32 = por %p30, %p31
      %p33 = scmp.ne.s32.totalorder %s22, %s23
      %p34 = scmp.eq.s32.totalorder %s14, 0
      %p35 = por %p33, %p34
      %p36 = scmp.ne.s32.totalorder %s22, %s23
      %p37 = scmp.eq.s32.totalorder %s15, 1
      %p38 = por %p36, %p37
      %p40 = scmp.ne.s32.totalorder %s23, %s39
      %p41 = scmp.eq.s32.totalorder %s15, 0
      %p42 = por %p40, %p41
      %s44 = sadd.s32 %s43, 1
      %p47 = scmp.eq.s32.totalorder %s9, 1
      %p48 = scmp.ne.s32.totalorder %s43, %s45
      %p49 = scmp.eq.s32.totalorder %s9, 0
      %p50 = por %p48, %p49
      %p51 = scmp.ne.s32.totalorder %s43, %s45
      %p52 = scmp.eq.s32.totalorder %s14, 1
      %p53 = por %p51, %p52
      %p54 = scmp.ne.s32.totalorder %s45, %s46
      %p55 = scmp.eq.s32.totalorder %s14, 0
      %p56 = por %p54, %p55
      %p57 = scmp.ne.s32.totalorder %s45, %s46
      %p58 = scmp.eq.s32.totalorder %s15, 1
      %p59 = por %p57, %p58
      %p61 = scmp.ne.s32.totalorder %s46, %s60
      %p62 = scmp.eq.s32.totalorder %s15, 0
      %p63 = por %p61, %p62
      %s65 = sadd.s32 %s64, 1
      %p68 = scmp.eq.s32.totalorder %s9, 1
      %p69 = scmp.ne.s32.totalorder %s64, %s66
      %p70 = scmp.eq.s32.totalorder %s9, 0
      %p71 = por %p69, %p70
      %p72 = scmp.ne.s32.totalorder %s64, %s66
      %p73 = scmp.eq.s32.totalorder %s14, 1
      %p74 = por %p72, %p73
      %p75 = scmp.ne.s32.totalorder %s66, %s67
      %p76 = scmp.eq.s32.totalorder %s14, 0
      %p77 = por %p75, %p76
      %p78 = scmp.ne.s32.totalorder %s66, %s67
      %p79 = scmp.eq.s32.totalorder %s15, 1
      %p80 = por %p78, %p79
      %p82 = scmp.ne.s32.totalorder %s67, %s81
      %p83 = scmp.eq.s32.totalorder %s15, 0
      %p84 = por %p82, %p83
      %s85 = ssub.s32 %s9, %s16
      %p86 = scmp.eq.s32.totalorder %s85, 0
      %s88 = sadd.s32 %s87, 1
      %s89 = scalar_select %p86, %s87, %s88
      %p92 = pneg %p86
      %p93 = scmp.eq.s32.totalorder %s9, 1
      %p94 = por %p92, %p93
      %p95 = scmp.ne.s32.totalorder %s87, %s90
      %p96 = scmp.eq.s32.totalorder %s9, 0
      %p97 = por %p95, %p96
      %p98 = scmp.ne.s32.totalorder %s87, %s90
      %p99 = scmp.eq.s32.totalorder %s14, 1
      %p100 = por %p98, %p99
      %p101 = scmp.ne.s32.totalorder %s90, %s91
      %p102 = scmp.eq.s32.totalorder %s14, 0
      %p103 = por %p101, %p102
      %p104 = scmp.ne.s32.totalorder %s90, %s91
      %p105 = scmp.eq.s32.totalorder %s15, 1
      %p106 = por %p104, %p105
      %p108 = scmp.ne.s32.totalorder %s91, %s107
      %p109 = scmp.eq.s32.totalorder %s15, 0
      %p110 = por %p108, %p109
      %p111 = scmp.le.s32.totalorder 1, %s9
      %p112 = scmp.lt.s32.totalorder %s9, 3
      %p113 = pnand %p111, %p112
      %p114 = pneg %p113
      // Predicated region
      $region9: #{net_forward.3} parent=5 // pred_check
        _
      $region10: #{net_forward.3} parent=5 // pred_check_branch
        %116 = sbr.rel (%p113) target = $region12
      $region11: #{net_forward.3} parent=5 // pred_region
        %s117 = ssub.s32 %s9, 1
        // Predicated region
        $region13: #{net_forward.3} parent=11 // pred_check
          %p118 = pneg %p56
        $region14: #{net_forward.3} parent=11 // pred_check_branch
          %120 = sbr.rel (%p118) target = $region16
        $region15: #{net_forward.3} parent=11 // pred_region
          _
        $region16: #{net_forward.3} parent=11 // pred_fallthru
          _
        // Predicated region
        $region17: #{net_forward.3} parent=11 // pred_check
          %p121 = pneg %p77
        $region18: #{net_forward.3} parent=11 // pred_check_branch
          %123 = sbr.rel (%p121) target = $region20
        $region19: #{net_forward.3} parent=11 // pred_region
          _
        $region20: #{net_forward.3} parent=11 // pred_fallthru
          _
      $region12: #{net_forward.3} parent=5 // pred_fallthru
        _
      %p124 = scmp.lt.s32.totalorder %s9, 2
      // Predicated region
      $region21: #{net_forward.3} parent=5 // pred_check
        %p125 = pneg %p124
      $region22: #{net_forward.3} parent=5 // pred_check_branch
        %127 = sbr.rel (%p125) target = $region24
      $region23: #{net_forward.3} parent=5 // pred_region
        // Predicated region
        $region25: #{net_forward.3} parent=23 // pred_check
          %p128 = pneg %p29
        $region26: #{net_forward.3} parent=23 // pred_check_branch
          %130 = sbr.rel (%p128) target = $region28
        $region27: #{net_forward.3} parent=23 // pred_region
          %s131 = sand.u32 %s19, 1
          %s132 = sand.u32 %s19, 1
          %s133 = smul.addr %s132, 416
          %s134 = scalar_lea.vmem [#allocation2], %s133
          %s135 = smul.u32 26, %s9
          %s136 = smul.addr %s135, 4
          %s137 = scalar_lea.vmem %s0, %s136
          // Predicated region
          $region29: #{net_forward.3} parent=27 // pred_check
            _
          $region30: #{net_forward.3} parent=27 // pred_check_branch
            %139 = sbr.rel (0) target = $region32
          $region31: #{net_forward.3} parent=27 // pred_region
            // Predicated region
            $region33: #{net_forward.3} parent=31 // pred_check
              _
            $region34: #{net_forward.3} parent=31 // pred_check_branch
              %141 = sbr.rel target = $region36
            $region35: #{net_forward.3} parent=31 // pred_region
              // Predicated region
              $region48: #{net_forward.3} parent=35 // pred_check
                _
              $region49: #{net_forward.3} parent=35 // pred_check_branch
                %363 = sbr.rel (0) target = $region51
              $region50: #{net_forward.3} parent=35 // pred_region
                loop: start=0, step=1, limit=1
                $region52: #{net_forward.3} parent=50 // loop_pre_header
                  _
                $region53: #{net_forward.3} parent=50 // loop_header
                  %s365 = sphi 0, %s369
                  %p366 = scmp.ge.s32.totalorder %s365, 1
                  %s370 = sphi %s137, %s137
                  %s371 = sphi %s134, %s134
                $region54: #{net_forward.3} parent=50 // loop_header_branch
                  %368 = sbr.rel (%p366) target = $region58
                $region55: #{net_forward.3} parent=50 // loop_body
                  _
                $region56: #{net_forward.3} parent=50 // loop_footer
                  %s369 = sadd.s32 1, %s365
                $region57: #{net_forward.3} parent=50 // loop_footer_branch
                  %364 = sbr.rel target = $region53
                $region58: #{net_forward.3} parent=50 // loop_exit
                  _
                %s373 = ssub.s32 16, 1
                loop: start=0, step=1, limit=1
                $region59: #{net_forward.3} parent=50 // loop_pre_header
                  _
                $region60: #{net_forward.3} parent=50 // loop_header
                  %s375 = sphi 0, %s379
                  %p376 = scmp.ge.s32.totalorder %s375, 1
                  %s380 = sphi %s137, %s137
                  %s381 = sphi %s134, %s134
                $region61: #{net_forward.3} parent=50 // loop_header_branch
                  %378 = sbr.rel (%p376) target = $region65
                $region62: #{net_forward.3} parent=50 // loop_body
                  %v382 = vld [vmem:[%s380] sm:%s373]
                  %383 = vst [vmem:[%s381] sm:%s373] %v382
                  %v384 = vld [vmem:[%s380 + $0x4] sm:%s373]
                  %385 = vst [vmem:[%s381 + $0x4] sm:%s373] %v384
                  %v386 = vld [vmem:[%s380 + $0x8] sm:%s373]
                  %387 = vst [vmem:[%s381 + $0x8] sm:%s373] %v386
                  %v388 = vld [vmem:[%s380 + $0xc] sm:%s373]
                  %389 = vst [vmem:[%s381 + $0xc] sm:%s373] %v388
                  %v390 = vld [vmem:[%s380 + $0x10] sm:%s373]
                  %391 = vst [vmem:[%s381 + $0x10] sm:%s373] %v390
                  %v392 = vld [vmem:[%s380 + $0x14] sm:%s373]
                  %393 = vst [vmem:[%s381 + $0x14] sm:%s373] %v392
                  %v394 = vld [vmem:[%s380 + $0x18] sm:%s373]
                  %395 = vst [vmem:[%s381 + $0x18] sm:%s373] %v394
                  %v396 = vld [vmem:[%s380 + $0x1c] sm:%s373]
                  %397 = vst [vmem:[%s381 + $0x1c] sm:%s373] %v396
                  %v398 = vld [vmem:[%s380 + $0x20] sm:%s373]
                  %399 = vst [vmem:[%s381 + $0x20] sm:%s373] %v398
                  %v400 = vld [vmem:[%s380 + $0x24] sm:%s373]
                  %401 = vst [vmem:[%s381 + $0x24] sm:%s373] %v400
                  %v402 = vld [vmem:[%s380 + $0x28] sm:%s373]
                  %403 = vst [vmem:[%s381 + $0x28] sm:%s373] %v402
                  %v404 = vld [vmem:[%s380 + $0x2c] sm:%s373]
                  %405 = vst [vmem:[%s381 + $0x2c] sm:%s373] %v404
                  %v406 = vld [vmem:[%s380 + $0x30] sm:%s373]
                  %407 = vst [vmem:[%s381 + $0x30] sm:%s373] %v406
                  %v408 = vld [vmem:[%s380 + $0x34] sm:%s373]
                  %409 = vst [vmem:[%s381 + $0x34] sm:%s373] %v408
                  %v410 = vld [vmem:[%s380 + $0x38] sm:%s373]
                  %411 = vst [vmem:[%s381 + $0x38] sm:%s373] %v410
                  %v412 = vld [vmem:[%s380 + $0x3c] sm:%s373]
                  %413 = vst [vmem:[%s381 + $0x3c] sm:%s373] %v412
                  %v414 = vld [vmem:[%s380 + $0x40] sm:%s373]
                  %415 = vst [vmem:[%s381 + $0x40] sm:%s373] %v414
                  %v416 = vld [vmem:[%s380 + $0x44] sm:%s373]
                  %417 = vst [vmem:[%s381 + $0x44] sm:%s373] %v416
                  %v418 = vld [vmem:[%s380 + $0x48] sm:%s373]
                  %419 = vst [vmem:[%s381 + $0x48] sm:%s373] %v418
                  %v420 = vld [vmem:[%s380 + $0x4c] sm:%s373]
                  %421 = vst [vmem:[%s381 + $0x4c] sm:%s373] %v420
                  %v422 = vld [vmem:[%s380 + $0x50] sm:%s373]
                  %423 = vst [vmem:[%s381 + $0x50] sm:%s373] %v422
                  %v424 = vld [vmem:[%s380 + $0x54] sm:%s373]
                  %425 = vst [vmem:[%s381 + $0x54] sm:%s373] %v424
                  %v426 = vld [vmem:[%s380 + $0x58] sm:%s373]
                  %427 = vst [vmem:[%s381 + $0x58] sm:%s373] %v426
                  %v428 = vld [vmem:[%s380 + $0x5c] sm:%s373]
                  %429 = vst [vmem:[%s381 + $0x5c] sm:%s373] %v428
                  %v430 = vld [vmem:[%s380 + $0x60] sm:%s373]
                  %431 = vst [vmem:[%s381 + $0x60] sm:%s373] %v430
                  %v432 = vld [vmem:[%s380 + $0x64] sm:%s373]
                  %433 = vst [vmem:[%s381 + $0x64] sm:%s373] %v432
                  %v434 = vld [vmem:[%s380 + $0xd0] sm:%s373]
                  %435 = vst [vmem:[%s381 + $0x68] sm:%s373] %v434
                  %v436 = vld [vmem:[%s380 + $0xd4] sm:%s373]
                  %437 = vst [vmem:[%s381 + $0x6c] sm:%s373] %v436
                  %v438 = vld [vmem:[%s380 + $0xd8] sm:%s373]
                  %439 = vst [vmem:[%s381 + $0x70] sm:%s373] %v438
                  %v440 = vld [vmem:[%s380 + $0xdc] sm:%s373]
                  %441 = vst [vmem:[%s381 + $0x74] sm:%s373] %v440
                  %v442 = vld [vmem:[%s380 + $0xe0] sm:%s373]
                  %443 = vst [vmem:[%s381 + $0x78] sm:%s373] %v442
                  %v444 = vld [vmem:[%s380 + $0xe4] sm:%s373]
                  %445 = vst [vmem:[%s381 + $0x7c] sm:%s373] %v444
                  %v446 = vld [vmem:[%s380 + $0xe8] sm:%s373]
                  %447 = vst [vmem:[%s381 + $0x80] sm:%s373] %v446
                  %v448 = vld [vmem:[%s380 + $0xec] sm:%s373]
                  %449 = vst [vmem:[%s381 + $0x84] sm:%s373] %v448
                  %v450 = vld [vmem:[%s380 + $0xf0] sm:%s373]
                  %451 = vst [vmem:[%s381 + $0x88] sm:%s373] %v450
                  %v452 = vld [vmem:[%s380 + $0xf4] sm:%s373]
                  %453 = vst [vmem:[%s381 + $0x8c] sm:%s373] %v452
                  %v454 = vld [vmem:[%s380 + $0xf8] sm:%s373]
                  %455 = vst [vmem:[%s381 + $0x90] sm:%s373] %v454
                  %v456 = vld [vmem:[%s380 + $0xfc] sm:%s373]
                  %457 = vst [vmem:[%s381 + $0x94] sm:%s373] %v456
                  %v458 = vld [vmem:[%s380 + $0x100] sm:%s373]
                  %459 = vst [vmem:[%s381 + $0x98] sm:%s373] %v458
                  %v460 = vld [vmem:[%s380 + $0x104] sm:%s373]
                  %461 = vst [vmem:[%s381 + $0x9c] sm:%s373] %v460
                  %v462 = vld [vmem:[%s380 + $0x108] sm:%s373]
                  %463 = vst [vmem:[%s381 + $0xa0] sm:%s373] %v462
                  %v464 = vld [vmem:[%s380 + $0x10c] sm:%s373]
                  %465 = vst [vmem:[%s381 + $0xa4] sm:%s373] %v464
                  %v466 = vld [vmem:[%s380 + $0x110] sm:%s373]
                  %467 = vst [vmem:[%s381 + $0xa8] sm:%s373] %v466
                  %v468 = vld [vmem:[%s380 + $0x114] sm:%s373]
                  %469 = vst [vmem:[%s381 + $0xac] sm:%s373] %v468
                  %v470 = vld [vmem:[%s380 + $0x118] sm:%s373]
                  %471 = vst [vmem:[%s381 + $0xb0] sm:%s373] %v470
                  %v472 = vld [vmem:[%s380 + $0x11c] sm:%s373]
                  %473 = vst [vmem:[%s381 + $0xb4] sm:%s373] %v472
                  %v474 = vld [vmem:[%s380 + $0x120] sm:%s373]
                  %475 = vst [vmem:[%s381 + $0xb8] sm:%s373] %v474
                  %v476 = vld [vmem:[%s380 + $0x124] sm:%s373]
                  %477 = vst [vmem:[%s381 + $0xbc] sm:%s373] %v476
                  %v478 = vld [vmem:[%s380 + $0x128] sm:%s373]
                  %479 = vst [vmem:[%s381 + $0xc0] sm:%s373] %v478
                  %v480 = vld [vmem:[%s380 + $0x12c] sm:%s373]
                  %481 = vst [vmem:[%s381 + $0xc4] sm:%s373] %v480
                  %v482 = vld [vmem:[%s380 + $0x130] sm:%s373]
                  %483 = vst [vmem:[%s381 + $0xc8] sm:%s373] %v482
                  %v484 = vld [vmem:[%s380 + $0x134] sm:%s373]
                  %485 = vst [vmem:[%s381 + $0xcc] sm:%s373] %v484
                  %v486 = vld [vmem:[%s380 + $0x1a0] sm:%s373]
                  %487 = vst [vmem:[%s381 + $0xd0] sm:%s373] %v486
                  %v488 = vld [vmem:[%s380 + $0x1a4] sm:%s373]
                  %489 = vst [vmem:[%s381 + $0xd4] sm:%s373] %v488
                  %v490 = vld [vmem:[%s380 + $0x1a8] sm:%s373]
                  %491 = vst [vmem:[%s381 + $0xd8] sm:%s373] %v490
                  %v492 = vld [vmem:[%s380 + $0x1ac] sm:%s373]
                  %493 = vst [vmem:[%s381 + $0xdc] sm:%s373] %v492
                  %v494 = vld [vmem:[%s380 + $0x1b0] sm:%s373]
                  %495 = vst [vmem:[%s381 + $0xe0] sm:%s373] %v494
                  %v496 = vld [vmem:[%s380 + $0x1b4] sm:%s373]
                  %497 = vst [vmem:[%s381 + $0xe4] sm:%s373] %v496
                  %v498 = vld [vmem:[%s380 + $0x1b8] sm:%s373]
                  %499 = vst [vmem:[%s381 + $0xe8] sm:%s373] %v498
                  %v500 = vld [vmem:[%s380 + $0x1bc] sm:%s373]
                  %501 = vst [vmem:[%s381 + $0xec] sm:%s373] %v500
                  %v502 = vld [vmem:[%s380 + $0x1c0] sm:%s373]
                  %503 = vst [vmem:[%s381 + $0xf0] sm:%s373] %v502
                  %v504 = vld [vmem:[%s380 + $0x1c4] sm:%s373]
                  %505 = vst [vmem:[%s381 + $0xf4] sm:%s373] %v504
                  %v506 = vld [vmem:[%s380 + $0x1c8] sm:%s373]
                  %507 = vst [vmem:[%s381 + $0xf8] sm:%s373] %v506
                  %v508 = vld [vmem:[%s380 + $0x1cc] sm:%s373]
                  %509 = vst [vmem:[%s381 + $0xfc] sm:%s373] %v508
                  %v510 = vld [vmem:[%s380 + $0x1d0] sm:%s373]
                  %511 = vst [vmem:[%s381 + $0x100] sm:%s373] %v510
                  %v512 = vld [vmem:[%s380 + $0x1d4] sm:%s373]
                  %513 = vst [vmem:[%s381 + $0x104] sm:%s373] %v512
                  %v514 = vld [vmem:[%s380 + $0x1d8] sm:%s373]
                  %515 = vst [vmem:[%s381 + $0x108] sm:%s373] %v514
                  %v516 = vld [vmem:[%s380 + $0x1dc] sm:%s373]
                  %517 = vst [vmem:[%s381 + $0x10c] sm:%s373] %v516
                  %v518 = vld [vmem:[%s380 + $0x1e0] sm:%s373]
                  %519 = vst [vmem:[%s381 + $0x110] sm:%s373] %v518
                  %v520 = vld [vmem:[%s380 + $0x1e4] sm:%s373]
                  %521 = vst [vmem:[%s381 + $0x114] sm:%s373] %v520
                  %v522 = vld [vmem:[%s380 + $0x1e8] sm:%s373]
                  %523 = vst [vmem:[%s381 + $0x118] sm:%s373] %v522
                  %v524 = vld [vmem:[%s380 + $0x1ec] sm:%s373]
                  %525 = vst [vmem:[%s381 + $0x11c] sm:%s373] %v524
                  %v526 = vld [vmem:[%s380 + $0x1f0] sm:%s373]
                  %527 = vst [vmem:[%s381 + $0x120] sm:%s373] %v526
                  %v528 = vld [vmem:[%s380 + $0x1f4] sm:%s373]
                  %529 = vst [vmem:[%s381 + $0x124] sm:%s373] %v528
                  %v530 = vld [vmem:[%s380 + $0x1f8] sm:%s373]
                  %531 = vst [vmem:[%s381 + $0x128] sm:%s373] %v530
                  %v532 = vld [vmem:[%s380 + $0x1fc] sm:%s373]
                  %533 = vst [vmem:[%s381 + $0x12c] sm:%s373] %v532
                  %v534 = vld [vmem:[%s380 + $0x200] sm:%s373]
                  %535 = vst [vmem:[%s381 + $0x130] sm:%s373] %v534
                  %v536 = vld [vmem:[%s380 + $0x204] sm:%s373]
                  %537 = vst [vmem:[%s381 + $0x134] sm:%s373] %v536
                  %v538 = vld [vmem:[%s380 + $0x270] sm:%s373]
                  %539 = vst [vmem:[%s381 + $0x138] sm:%s373] %v538
                  %v540 = vld [vmem:[%s380 + $0x274] sm:%s373]
                  %541 = vst [vmem:[%s381 + $0x13c] sm:%s373] %v540
                  %v542 = vld [vmem:[%s380 + $0x278] sm:%s373]
                  %543 = vst [vmem:[%s381 + $0x140] sm:%s373] %v542
                  %v544 = vld [vmem:[%s380 + $0x27c] sm:%s373]
                  %545 = vst [vmem:[%s381 + $0x144] sm:%s373] %v544
                  %v546 = vld [vmem:[%s380 + $0x280] sm:%s373]
                  %547 = vst [vmem:[%s381 + $0x148] sm:%s373] %v546
                  %v548 = vld [vmem:[%s380 + $0x284] sm:%s373]
                  %549 = vst [vmem:[%s381 + $0x14c] sm:%s373] %v548
                  %v550 = vld [vmem:[%s380 + $0x288] sm:%s373]
                  %551 = vst [vmem:[%s381 + $0x150] sm:%s373] %v550
                  %v552 = vld [vmem:[%s380 + $0x28c] sm:%s373]
                  %553 = vst [vmem:[%s381 + $0x154] sm:%s373] %v552
                  %v554 = vld [vmem:[%s380 + $0x290] sm:%s373]
                  %555 = vst [vmem:[%s381 + $0x158] sm:%s373] %v554
                  %v556 = vld [vmem:[%s380 + $0x294] sm:%s373]
                  %557 = vst [vmem:[%s381 + $0x15c] sm:%s373] %v556
                  %v558 = vld [vmem:[%s380 + $0x298] sm:%s373]
                  %559 = vst [vmem:[%s381 + $0x160] sm:%s373] %v558
                  %v560 = vld [vmem:[%s380 + $0x29c] sm:%s373]
                  %561 = vst [vmem:[%s381 + $0x164] sm:%s373] %v560
                  %v562 = vld [vmem:[%s380 + $0x2a0] sm:%s373]
                  %563 = vst [vmem:[%s381 + $0x168] sm:%s373] %v562
                  %v564 = vld [vmem:[%s380 + $0x2a4] sm:%s373]
                  %565 = vst [vmem:[%s381 + $0x16c] sm:%s373] %v564
                  %v566 = vld [vmem:[%s380 + $0x2a8] sm:%s373]
                  %567 = vst [vmem:[%s381 + $0x170] sm:%s373] %v566
                  %v568 = vld [vmem:[%s380 + $0x2ac] sm:%s373]
                  %569 = vst [vmem:[%s381 + $0x174] sm:%s373] %v568
                  %v570 = vld [vmem:[%s380 + $0x2b0] sm:%s373]
                  %571 = vst [vmem:[%s381 + $0x178] sm:%s373] %v570
                  %v572 = vld [vmem:[%s380 + $0x2b4] sm:%s373]
                  %573 = vst [vmem:[%s381 + $0x17c] sm:%s373] %v572
                  %v574 = vld [vmem:[%s380 + $0x2b8] sm:%s373]
                  %575 = vst [vmem:[%s381 + $0x180] sm:%s373] %v574
                  %v576 = vld [vmem:[%s380 + $0x2bc] sm:%s373]
                  %577 = vst [vmem:[%s381 + $0x184] sm:%s373] %v576
                  %v578 = vld [vmem:[%s380 + $0x2c0] sm:%s373]
                  %579 = vst [vmem:[%s381 + $0x188] sm:%s373] %v578
                  %v580 = vld [vmem:[%s380 + $0x2c4] sm:%s373]
                  %581 = vst [vmem:[%s381 + $0x18c] sm:%s373] %v580
                  %v582 = vld [vmem:[%s380 + $0x2c8] sm:%s373]
                  %583 = vst [vmem:[%s381 + $0x190] sm:%s373] %v582
                  %v584 = vld [vmem:[%s380 + $0x2cc] sm:%s373]
                  %585 = vst [vmem:[%s381 + $0x194] sm:%s373] %v584
                  %v586 = vld [vmem:[%s380 + $0x2d0] sm:%s373]
                  %587 = vst [vmem:[%s381 + $0x198] sm:%s373] %v586
                  %v588 = vld [vmem:[%s380 + $0x2d4] sm:%s373]
                  %589 = vst [vmem:[%s381 + $0x19c] sm:%s373] %v588
                $region63: #{net_forward.3} parent=50 // loop_footer
                  %s379 = sadd.s32 1, %s375
                $region64: #{net_forward.3} parent=50 // loop_footer_branch
                  %374 = sbr.rel target = $region60
                $region65: #{net_forward.3} parent=50 // loop_exit
                  _
              $region51: #{net_forward.3} parent=35 // pred_fallthru
                _
            $region36: #{net_forward.3} parent=31 // pred_fallthru
              _
            // Predicated region
            $region37: #{net_forward.3} parent=31 // pred_check
              _
            $region38: #{net_forward.3} parent=31 // pred_check_branch
              %143 = sbr.rel (0) target = $region40
            $region39: #{net_forward.3} parent=31 // pred_region
              %s145 = ssub.s32 16, 1
              loop: start=0, step=1, limit=1
              $region41: #{net_forward.3} parent=39 // loop_pre_header
                _
              $region42: #{net_forward.3} parent=39 // loop_header
                %s147 = sphi 0, %s151
                %p148 = scmp.ge.s32.totalorder %s147, 1
                %s152 = sphi %s137, %s137
                %s153 = sphi %s134, %s134
              $region43: #{net_forward.3} parent=39 // loop_header_branch
                %150 = sbr.rel (%p148) target = $region47
              $region44: #{net_forward.3} parent=39 // loop_body
                %v154 = vld [vmem:[%s152] sm:%s145]
                %155 = vst [vmem:[%s153] sm:%s145] %v154
                %v156 = vld [vmem:[%s152 + $0x4] sm:%s145]
                %157 = vst [vmem:[%s153 + $0x4] sm:%s145] %v156
                %v158 = vld [vmem:[%s152 + $0x8] sm:%s145]
                %159 = vst [vmem:[%s153 + $0x8] sm:%s145] %v158
                %v160 = vld [vmem:[%s152 + $0xc] sm:%s145]
                %161 = vst [vmem:[%s153 + $0xc] sm:%s145] %v160
                %v162 = vld [vmem:[%s152 + $0x10] sm:%s145]
                %163 = vst [vmem:[%s153 + $0x10] sm:%s145] %v162
                %v164 = vld [vmem:[%s152 + $0x14] sm:%s145]
                %165 = vst [vmem:[%s153 + $0x14] sm:%s145] %v164
                %v166 = vld [vmem:[%s152 + $0x18] sm:%s145]
                %167 = vst [vmem:[%s153 + $0x18] sm:%s145] %v166
                %v168 = vld [vmem:[%s152 + $0x1c] sm:%s145]
                %169 = vst [vmem:[%s153 + $0x1c] sm:%s145] %v168
                %v170 = vld [vmem:[%s152 + $0x20] sm:%s145]
                %171 = vst [vmem:[%s153 + $0x20] sm:%s145] %v170
                %v172 = vld [vmem:[%s152 + $0x24] sm:%s145]
                %173 = vst [vmem:[%s153 + $0x24] sm:%s145] %v172
                %v174 = vld [vmem:[%s152 + $0x28] sm:%s145]
                %175 = vst [vmem:[%s153 + $0x28] sm:%s145] %v174
                %v176 = vld [vmem:[%s152 + $0x2c] sm:%s145]
                %177 = vst [vmem:[%s153 + $0x2c] sm:%s145] %v176
                %v178 = vld [vmem:[%s152 + $0x30] sm:%s145]
                %179 = vst [vmem:[%s153 + $0x30] sm:%s145] %v178
                %v180 = vld [vmem:[%s152 + $0x34] sm:%s145]
                %181 = vst [vmem:[%s153 + $0x34] sm:%s145] %v180
                %v182 = vld [vmem:[%s152 + $0x38] sm:%s145]
                %183 = vst [vmem:[%s153 + $0x38] sm:%s145] %v182
                %v184 = vld [vmem:[%s152 + $0x3c] sm:%s145]
                %185 = vst [vmem:[%s153 + $0x3c] sm:%s145] %v184
                %v186 = vld [vmem:[%s152 + $0x40] sm:%s145]
                %187 = vst [vmem:[%s153 + $0x40] sm:%s145] %v186
                %v188 = vld [vmem:[%s152 + $0x44] sm:%s145]
                %189 = vst [vmem:[%s153 + $0x44] sm:%s145] %v188
                %v190 = vld [vmem:[%s152 + $0x48] sm:%s145]
                %191 = vst [vmem:[%s153 + $0x48] sm:%s145] %v190
                %v192 = vld [vmem:[%s152 + $0x4c] sm:%s145]
                %193 = vst [vmem:[%s153 + $0x4c] sm:%s145] %v192
                %v194 = vld [vmem:[%s152 + $0x50] sm:%s145]
                %195 = vst [vmem:[%s153 + $0x50] sm:%s145] %v194
                %v196 = vld [vmem:[%s152 + $0x54] sm:%s145]
                %197 = vst [vmem:[%s153 + $0x54] sm:%s145] %v196
                %v198 = vld [vmem:[%s152 + $0x58] sm:%s145]
                %199 = vst [vmem:[%s153 + $0x58] sm:%s145] %v198
                %v200 = vld [vmem:[%s152 + $0x5c] sm:%s145]
                %201 = vst [vmem:[%s153 + $0x5c] sm:%s145] %v200
                %v202 = vld [vmem:[%s152 + $0x60] sm:%s145]
                %203 = vst [vmem:[%s153 + $0x60] sm:%s145] %v202
                %v204 = vld [vmem:[%s152 + $0x64] sm:%s145]
                %205 = vst [vmem:[%s153 + $0x64] sm:%s145] %v204
                %v206 = vld [vmem:[%s152 + $0xd0] sm:%s145]
                %207 = vst [vmem:[%s153 + $0x68] sm:%s145] %v206
                %v208 = vld [vmem:[%s152 + $0xd4] sm:%s145]
                %209 = vst [vmem:[%s153 + $0x6c] sm:%s145] %v208
                %v210 = vld [vmem:[%s152 + $0xd8] sm:%s145]
                %211 = vst [vmem:[%s153 + $0x70] sm:%s145] %v210
                %v212 = vld [vmem:[%s152 + $0xdc] sm:%s145]
                %213 = vst [vmem:[%s153 + $0x74] sm:%s145] %v212
                %v214 = vld [vmem:[%s152 + $0xe0] sm:%s145]
                %215 = vst [vmem:[%s153 + $0x78] sm:%s145] %v214
                %v216 = vld [vmem:[%s152 + $0xe4] sm:%s145]
                %217 = vst [vmem:[%s153 + $0x7c] sm:%s145] %v216
                %v218 = vld [vmem:[%s152 + $0xe8] sm:%s145]
                %219 = vst [vmem:[%s153 + $0x80] sm:%s145] %v218
                %v220 = vld [vmem:[%s152 + $0xec] sm:%s145]
                %221 = vst [vmem:[%s153 + $0x84] sm:%s145] %v220
                %v222 = vld [vmem:[%s152 + $0xf0] sm:%s145]
                %223 = vst [vmem:[%s153 + $0x88] sm:%s145] %v222
                %v224 = vld [vmem:[%s152 + $0xf4] sm:%s145]
                %225 = vst [vmem:[%s153 + $0x8c] sm:%s145] %v224
                %v226 = vld [vmem:[%s152 + $0xf8] sm:%s145]
                %227 = vst [vmem:[%s153 + $0x90] sm:%s145] %v226
                %v228 = vld [vmem:[%s152 + $0xfc] sm:%s145]
                %229 = vst [vmem:[%s153 + $0x94] sm:%s145] %v228
                %v230 = vld [vmem:[%s152 + $0x100] sm:%s145]
                %231 = vst [vmem:[%s153 + $0x98] sm:%s145] %v230
                %v232 = vld [vmem:[%s152 + $0x104] sm:%s145]
                %233 = vst [vmem:[%s153 + $0x9c] sm:%s145] %v232
                %v234 = vld [vmem:[%s152 + $0x108] sm:%s145]
                %235 = vst [vmem:[%s153 + $0xa0] sm:%s145] %v234
                %v236 = vld [vmem:[%s152 + $0x10c] sm:%s145]
                %237 = vst [vmem:[%s153 + $0xa4] sm:%s145] %v236
                %v238 = vld [vmem:[%s152 + $0x110] sm:%s145]
                %239 = vst [vmem:[%s153 + $0xa8] sm:%s145] %v238
                %v240 = vld [vmem:[%s152 + $0x114] sm:%s145]
                %241 = vst [vmem:[%s153 + $0xac] sm:%s145] %v240
                %v242 = vld [vmem:[%s152 + $0x118] sm:%s145]
                %243 = vst [vmem:[%s153 + $0xb0] sm:%s145] %v242
                %v244 = vld [vmem:[%s152 + $0x11c] sm:%s145]
                %245 = vst [vmem:[%s153 + $0xb4] sm:%s145] %v244
                %v246 = vld [vmem:[%s152 + $0x120] sm:%s145]
                %247 = vst [vmem:[%s153 + $0xb8] sm:%s145] %v246
                %v248 = vld [vmem:[%s152 + $0x124] sm:%s145]
                %249 = vst [vmem:[%s153 + $0xbc] sm:%s145] %v248
                %v250 = vld [vmem:[%s152 + $0x128] sm:%s145]
                %251 = vst [vmem:[%s153 + $0xc0] sm:%s145] %v250
                %v252 = vld [vmem:[%s152 + $0x12c] sm:%s145]
                %253 = vst [vmem:[%s153 + $0xc4] sm:%s145] %v252
                %v254 = vld [vmem:[%s152 + $0x130] sm:%s145]
                %255 = vst [vmem:[%s153 + $0xc8] sm:%s145] %v254
                %v256 = vld [vmem:[%s152 + $0x134] sm:%s145]
                %257 = vst [vmem:[%s153 + $0xcc] sm:%s145] %v256
                %v258 = vld [vmem:[%s152 + $0x1a0] sm:%s145]
                %259 = vst [vmem:[%s153 + $0xd0] sm:%s145] %v258
                %v260 = vld [vmem:[%s152 + $0x1a4] sm:%s145]
                %261 = vst [vmem:[%s153 + $0xd4] sm:%s145] %v260
                %v262 = vld [vmem:[%s152 + $0x1a8] sm:%s145]
                %263 = vst [vmem:[%s153 + $0xd8] sm:%s145] %v262
                %v264 = vld [vmem:[%s152 + $0x1ac] sm:%s145]
                %265 = vst [vmem:[%s153 + $0xdc] sm:%s145] %v264
                %v266 = vld [vmem:[%s152 + $0x1b0] sm:%s145]
                %267 = vst [vmem:[%s153 + $0xe0] sm:%s145] %v266
                %v268 = vld [vmem:[%s152 + $0x1b4] sm:%s145]
                %269 = vst [vmem:[%s153 + $0xe4] sm:%s145] %v268
                %v270 = vld [vmem:[%s152 + $0x1b8] sm:%s145]
                %271 = vst [vmem:[%s153 + $0xe8] sm:%s145] %v270
                %v272 = vld [vmem:[%s152 + $0x1bc] sm:%s145]
                %273 = vst [vmem:[%s153 + $0xec] sm:%s145] %v272
                %v274 = vld [vmem:[%s152 + $0x1c0] sm:%s145]
                %275 = vst [vmem:[%s153 + $0xf0] sm:%s145] %v274
                %v276 = vld [vmem:[%s152 + $0x1c4] sm:%s145]
                %277 = vst [vmem:[%s153 + $0xf4] sm:%s145] %v276
                %v278 = vld [vmem:[%s152 + $0x1c8] sm:%s145]
                %279 = vst [vmem:[%s153 + $0xf8] sm:%s145] %v278
                %v280 = vld [vmem:[%s152 + $0x1cc] sm:%s145]
                %281 = vst [vmem:[%s153 + $0xfc] sm:%s145] %v280
                %v282 = vld [vmem:[%s152 + $0x1d0] sm:%s145]
                %283 = vst [vmem:[%s153 + $0x100] sm:%s145] %v282
                %v284 = vld [vmem:[%s152 + $0x1d4] sm:%s145]
                %285 = vst [vmem:[%s153 + $0x104] sm:%s145] %v284
                %v286 = vld [vmem:[%s152 + $0x1d8] sm:%s145]
                %287 = vst [vmem:[%s153 + $0x108] sm:%s145] %v286
                %v288 = vld [vmem:[%s152 + $0x1dc] sm:%s145]
                %289 = vst [vmem:[%s153 + $0x10c] sm:%s145] %v288
                %v290 = vld [vmem:[%s152 + $0x1e0] sm:%s145]
                %291 = vst [vmem:[%s153 + $0x110] sm:%s145] %v290
                %v292 = vld [vmem:[%s152 + $0x1e4] sm:%s145]
                %293 = vst [vmem:[%s153 + $0x114] sm:%s145] %v292
                %v294 = vld [vmem:[%s152 + $0x1e8] sm:%s145]
                %295 = vst [vmem:[%s153 + $0x118] sm:%s145] %v294
                %v296 = vld [vmem:[%s152 + $0x1ec] sm:%s145]
                %297 = vst [vmem:[%s153 + $0x11c] sm:%s145] %v296
                %v298 = vld [vmem:[%s152 + $0x1f0] sm:%s145]
                %299 = vst [vmem:[%s153 + $0x120] sm:%s145] %v298
                %v300 = vld [vmem:[%s152 + $0x1f4] sm:%s145]
                %301 = vst [vmem:[%s153 + $0x124] sm:%s145] %v300
                %v302 = vld [vmem:[%s152 + $0x1f8] sm:%s145]
                %303 = vst [vmem:[%s153 + $0x128] sm:%s145] %v302
                %v304 = vld [vmem:[%s152 + $0x1fc] sm:%s145]
                %305 = vst [vmem:[%s153 + $0x12c] sm:%s145] %v304
                %v306 = vld [vmem:[%s152 + $0x200] sm:%s145]
                %307 = vst [vmem:[%s153 + $0x130] sm:%s145] %v306
                %v308 = vld [vmem:[%s152 + $0x204] sm:%s145]
                %309 = vst [vmem:[%s153 + $0x134] sm:%s145] %v308
                %v310 = vld [vmem:[%s152 + $0x270] sm:%s145]
                %311 = vst [vmem:[%s153 + $0x138] sm:%s145] %v310
                %v312 = vld [vmem:[%s152 + $0x274] sm:%s145]
                %313 = vst [vmem:[%s153 + $0x13c] sm:%s145] %v312
                %v314 = vld [vmem:[%s152 + $0x278] sm:%s145]
                %315 = vst [vmem:[%s153 + $0x140] sm:%s145] %v314
                %v316 = vld [vmem:[%s152 + $0x27c] sm:%s145]
                %317 = vst [vmem:[%s153 + $0x144] sm:%s145] %v316
                %v318 = vld [vmem:[%s152 + $0x280] sm:%s145]
                %319 = vst [vmem:[%s153 + $0x148] sm:%s145] %v318
                %v320 = vld [vmem:[%s152 + $0x284] sm:%s145]
                %321 = vst [vmem:[%s153 + $0x14c] sm:%s145] %v320
                %v322 = vld [vmem:[%s152 + $0x288] sm:%s145]
                %323 = vst [vmem:[%s153 + $0x150] sm:%s145] %v322
                %v324 = vld [vmem:[%s152 + $0x28c] sm:%s145]
                %325 = vst [vmem:[%s153 + $0x154] sm:%s145] %v324
                %v326 = vld [vmem:[%s152 + $0x290] sm:%s145]
                %327 = vst [vmem:[%s153 + $0x158] sm:%s145] %v326
                %v328 = vld [vmem:[%s152 + $0x294] sm:%s145]
                %329 = vst [vmem:[%s153 + $0x15c] sm:%s145] %v328
                %v330 = vld [vmem:[%s152 + $0x298] sm:%s145]
                %331 = vst [vmem:[%s153 + $0x160] sm:%s145] %v330
                %v332 = vld [vmem:[%s152 + $0x29c] sm:%s145]
                %333 = vst [vmem:[%s153 + $0x164] sm:%s145] %v332
                %v334 = vld [vmem:[%s152 + $0x2a0] sm:%s145]
                %335 = vst [vmem:[%s153 + $0x168] sm:%s145] %v334
                %v336 = vld [vmem:[%s152 + $0x2a4] sm:%s145]
                %337 = vst [vmem:[%s153 + $0x16c] sm:%s145] %v336
                %v338 = vld [vmem:[%s152 + $0x2a8] sm:%s145]
                %339 = vst [vmem:[%s153 + $0x170] sm:%s145] %v338
                %v340 = vld [vmem:[%s152 + $0x2ac] sm:%s145]
                %341 = vst [vmem:[%s153 + $0x174] sm:%s145] %v340
                %v342 = vld [vmem:[%s152 + $0x2b0] sm:%s145]
                %343 = vst [vmem:[%s153 + $0x178] sm:%s145] %v342
                %v344 = vld [vmem:[%s152 + $0x2b4] sm:%s145]
                %345 = vst [vmem:[%s153 + $0x17c] sm:%s145] %v344
                %v346 = vld [vmem:[%s152 + $0x2b8] sm:%s145]
                %347 = vst [vmem:[%s153 + $0x180] sm:%s145] %v346
                %v348 = vld [vmem:[%s152 + $0x2bc] sm:%s145]
                %349 = vst [vmem:[%s153 + $0x184] sm:%s145] %v348
                %v350 = vld [vmem:[%s152 + $0x2c0] sm:%s145]
                %351 = vst [vmem:[%s153 + $0x188] sm:%s145] %v350
                %v352 = vld [vmem:[%s152 + $0x2c4] sm:%s145]
                %353 = vst [vmem:[%s153 + $0x18c] sm:%s145] %v352
                %v354 = vld [vmem:[%s152 + $0x2c8] sm:%s145]
                %355 = vst [vmem:[%s153 + $0x190] sm:%s145] %v354
                %v356 = vld [vmem:[%s152 + $0x2cc] sm:%s145]
                %357 = vst [vmem:[%s153 + $0x194] sm:%s145] %v356
                %v358 = vld [vmem:[%s152 + $0x2d0] sm:%s145]
                %359 = vst [vmem:[%s153 + $0x198] sm:%s145] %v358
                %v360 = vld [vmem:[%s152 + $0x2d4] sm:%s145]
                %361 = vst [vmem:[%s153 + $0x19c] sm:%s145] %v360
              $region45: #{net_forward.3} parent=39 // loop_footer
                %s151 = sadd.s32 1, %s147
              $region46: #{net_forward.3} parent=39 // loop_footer_branch
                %146 = sbr.rel target = $region42
              $region47: #{net_forward.3} parent=39 // loop_exit
                _
            $region40: #{net_forward.3} parent=31 // pred_fallthru
              _
          $region32: #{net_forward.3} parent=27 // pred_fallthru
            _
          %590 = vnop
        $region28: #{net_forward.3} parent=23 // pred_fallthru
          _
      $region24: #{net_forward.3} parent=5 // pred_fallthru
        _
      %p591 = scmp.le.s32.totalorder 1, %s9
      %p592 = scmp.lt.s32.totalorder %s9, 3
      %p593 = pnand %p591, %p592
      %p594 = pneg %p593
      // Predicated region
      $region66: #{net_forward.3} parent=5 // pred_check
        _
      $region67: #{net_forward.3} parent=5 // pred_check_branch
        %596 = sbr.rel (%p593) target = $region69
      $region68: #{net_forward.3} parent=5 // pred_region
        %s597 = ssub.s32 %s9, 1
        %s598 = sand.u32 %s22, 1
        %s599 = sand.u32 %s22, 1
        %s600 = smul.addr %s599, 416
        %s601 = scalar_lea.vmem [#allocation2], %s600
        // Predicated region
        $region70: #{net_forward.3} parent=68 // pred_check
          %p602 = pneg %p35
        $region71: #{net_forward.3} parent=68 // pred_check_branch
          %604 = sbr.rel (%p602) target = $region73
        $region72: #{net_forward.3} parent=68 // pred_region
          _
        $region73: #{net_forward.3} parent=68 // pred_fallthru
          _
        %s605 = sand.u32 %s22, 1
        %s606 = sand.u32 %s22, 1
        %s607 = smul.addr %s606, 416
        %s608 = scalar_lea.vmem [#allocation2], %s607
        %p609 = pneg %p35
        %p610 = pneg %p32
        %p611 = pneg %p56
        %p612 = pneg %p53
        %p613 = pneg %p77
        %p614 = pneg %p74
        %p615 = pneg %p103
        %p616 = pneg %p100
        %s617 = smul.u32 26, %s14
        %p618 = scmp.lt.s32.totalorder %s617, 51
        %s619 = scalar_select %p618, %s617, 51
        %s620 = smul.addr %s619, 4
        %s621 = scalar_lea.vmem %s3, %s620
        %s622 = smul.u32 26, %s14
        %s623 = smul.u32 26, %s14
        %p624 = scmp.lt.s32.totalorder %s623, 51
        %s625 = scalar_select %p624, %s623, 51
        %s626 = smul.addr %s625, 4
        %s627 = scalar_lea.vmem %s3, %s626
        %s628 = smul.u32 26, %s14
        %v630 = vld [vmem:[%s1] sm:$0xf]
        %v631 = vld [vmem:[%s1 + $0x4] sm:$0xf]
        %v632 = vld [vmem:[%s1 + $0x8] sm:$0xf]
        %v633 = vld [vmem:[%s1 + $0xc] sm:$0xf]
        %v634 = vld [vmem:[%s1 + $0x10] sm:$0xf]
        %v635 = vld [vmem:[%s1 + $0x14] sm:$0xf]
        %v636 = vld [vmem:[%s1 + $0x18] sm:$0xf]
        %v637 = vld [vmem:[%s1 + $0x1c] sm:$0xf]
        %v638 = vld [vmem:[%s1 + $0x20] sm:$0xf]
        %v639 = vld [vmem:[%s1 + $0x24] sm:$0xf]
        %v640 = vld [vmem:[%s601] sm:$0xf]
        %v641 = vld [vmem:[%s601 + $0x4] sm:$0xf]
        %v642 = vld [vmem:[%s601 + $0x8] sm:$0xf]
        %v643 = vld [vmem:[%s601 + $0xc] sm:$0xf]
        %v644 = vld [vmem:[%s601 + $0x10] sm:$0xf]
        %v645 = vld [vmem:[%s601 + $0x14] sm:$0xf]
        %v646 = vld [vmem:[%s601 + $0x18] sm:$0xf]
        %v647 = vld [vmem:[%s601 + $0x1c] sm:$0xf]
        %v648 = vld [vmem:[%s601 + $0x20] sm:$0xf]
        %v649 = vld [vmem:[%s601 + $0x24] sm:$0xf]
        %v650 = vld [vmem:[%s601 + $0x28] sm:$0xf]
        %v651 = vld [vmem:[%s601 + $0x2c] sm:$0xf]
        %v652 = vld [vmem:[%s601 + $0x30] sm:$0xf]
        %v653 = vld [vmem:[%s601 + $0x34] sm:$0xf]
        %v654 = vld [vmem:[%s601 + $0x38] sm:$0xf]
        %v655 = vld [vmem:[%s601 + $0x3c] sm:$0xf]
        %v656 = vld [vmem:[%s601 + $0x40] sm:$0xf]
        %v657 = vld [vmem:[%s601 + $0x44] sm:$0xf]
        %v658 = vld [vmem:[%s601 + $0x48] sm:$0xf]
        %v659 = vld [vmem:[%s601 + $0x4c] sm:$0xf]
        %v660 = vld [vmem:[%s601 + $0x50] sm:$0xf]
        %v661 = vld [vmem:[%s601 + $0x54] sm:$0xf]
        %v662 = vld [vmem:[%s601 + $0x58] sm:$0xf]
        %v663 = vld [vmem:[%s601 + $0x5c] sm:$0xf]
        %v664 = vld [vmem:[%s601 + $0x60] sm:$0xf]
        %v665 = vld [vmem:[%s601 + $0x64] sm:$0xf]
        %v692 = vunpack.c.l.b16 %v640
        %v693 = vunpack.c.l.b16 %v641
        %v694 = vunpack.c.l.b16 %v642
        %v695 = vunpack.c.l.b16 %v643
        %v696 = vunpack.c.l.b16 %v644
        %v697 = vunpack.c.l.b16 %v645
        %v698 = vunpack.c.l.b16 %v646
        %v699 = vunpack.c.l.b16 %v647
        %v700 = vunpack.c.l.b16 %v648
        %v701 = vunpack.c.l.b16 %v649
        %v702 = vunpack.c.l.b16 %v650
        %v703 = vunpack.c.l.b16 %v651
        %v704 = vunpack.c.l.b16 %v652
        %v705 = vunpack.c.l.b16 %v653
        %v706 = vunpack.c.l.b16 %v654
        %v707 = vunpack.c.l.b16 %v655
        %v708 = vunpack.c.l.b16 %v656
        %v709 = vunpack.c.l.b16 %v657
        %v710 = vunpack.c.l.b16 %v658
        %v711 = vunpack.c.l.b16 %v659
        %v712 = vunpack.c.l.b16 %v660
        %v713 = vunpack.c.l.b16 %v661
        %v714 = vunpack.c.l.b16 %v662
        %v715 = vunpack.c.l.b16 %v663
        %v716 = vunpack.c.l.b16 %v664
        %v717 = vunpack.c.l.b16 %v665
        %v718 = vpack.c.b16 %v693, %v692
        %v719 = vpack.c.b16 %v695, %v694
        %v720 = vpack.c.b16 %v697, %v696
        %v721 = vpack.c.b16 %v699, %v698
        %v722 = vpack.c.b16 %v701, %v700
        %v723 = vpack.c.b16 %v703, %v702
        %v724 = vpack.c.b16 %v705, %v704
        %v725 = vpack.c.b16 %v707, %v706
        %v726 = vpack.c.b16 %v709, %v708
        %v727 = vpack.c.b16 %v711, %v710
        %v728 = vpack.c.b16 %v713, %v712
        %v729 = vpack.c.b16 %v715, %v714
        %v730 = vpack.c.b16 %v717, %v716
        %v741 = vunpack.c.l.b16 %v630
        %v742 = vunpack.c.l.b16 %v631
        %v743 = vunpack.c.l.b16 %v632
        %v744 = vunpack.c.l.b16 %v633
        %v745 = vunpack.c.l.b16 %v634
        %v746 = vunpack.c.l.b16 %v635
        %v747 = vunpack.c.l.b16 %v636
        %v748 = vunpack.c.l.b16 %v637
        %v749 = vunpack.c.l.b16 %v638
        %v750 = vunpack.c.l.b16 %v639
        %v751 = vpack.c.b16 %v742, %v741
        %v752 = vpack.c.b16 %v744, %v743
        %v753 = vpack.c.b16 %v746, %v745
        %v754 = vpack.c.b16 %v748, %v747
        %v755 = vpack.c.b16 %v750, %v749
        %vm761 = vcmask 654336
        %v763 = vsel %vm761, %v718, 0
        %v766 = vsel %vm761, %v719, 0
        %v769 = vsel %vm761, %v720, 0
        %v772 = vsel %vm761, %v721, 0
        %v775 = vsel %vm761, %v722, 0
        %v778 = vsel %vm761, %v723, 0
        %v781 = vsel %vm761, %v724, 0
        %v784 = vsel %vm761, %v725, 0
        %v787 = vsel %vm761, %v726, 0
        %v790 = vsel %vm761, %v727, 0
        %v793 = vsel %vm761, %v728, 0
        %v796 = vsel %vm761, %v729, 0
        %v799 = vsel %vm761, %v730, 0
        %801 = vmatprep.subr.bf16.mxu0 0
        %802 = vmatpush1.bf16.msra.mxu0 0
        %803 = vmatprep.subr.bf16.mxu0 0
        %804 = vmatpush1.bf16.msra.mxu0 0
        %805 = vmatprep.subr.bf16.mxu0 0
        %806 = vmatpush1.bf16.msra.mxu0 0
        %807 = vmatprep.subr.bf16.mxu0 0
        %808 = vmatpush1.bf16.msra.mxu0 %v755
        %809 = vmatprep.subr.bf16.mxu0 0
        %810 = vmatpush1.bf16.msra.mxu0 %v754
        %811 = vmatprep.subr.bf16.mxu0 0
        %812 = vmatpush1.bf16.msra.mxu0 %v753
        %813 = vmatprep.subr.bf16.mxu0 0
        %814 = vmatpush1.bf16.msra.mxu0 %v752
        %815 = vmatprep.subr.bf16.mxu0 0
        %816 = vmatpush1.bf16.msra.mxu0 %v751
        %817 = vmatprep.subr.bf16.mxu0 0
        %818 = vmatpush2.bf16.msra.mxu0 0
        %819 = vmatprep.subr.bf16.mxu0 0
        %820 = vmatpush2.bf16.msra.mxu0 0
        %821 = vmatprep.subr.bf16.mxu0 0
        %822 = vmatpush2.bf16.msra.mxu0 0
        %823 = vmatprep.subr.bf16.mxu0 0
        %824 = vmatpush2.bf16.msra.mxu0 0
        %825 = vmatprep.subr.bf16.mxu0 0
        %826 = vmatpush2.bf16.msra.mxu0 0
        %827 = vmatprep.subr.bf16.mxu0 0
        %828 = vmatpush2.bf16.msra.mxu0 0
        %829 = vmatprep.subr.bf16.mxu0 0
        %830 = vmatpush2.bf16.msra.mxu0 0
        %831 = vmatprep.subr.bf16.mxu0 0
        %832 = vmatpush2.bf16.msra.mxu0 0
        %833 = vmatprep.mubr.bf16.mxu0 0
        %834 = vmatmul.mubr.bf16.gmra.mxu0 %v763
        %v835 = vpop.f32.mrf.mxu0
        %v836 = vadd.f32 0.0, %v835
        %v837 = vpop.f32.mrf.mxu0
        %v838 = vpop.f32.mrf.mxu0
        %v839 = vadd.f32 0.0, %v838
        %v840 = vpop.f32.mrf.mxu0
        %841 = vmatprep.mubr.bf16.mxu0 0
        %842 = vmatmul.mubr.bf16.gmra.mxu0 %v766
        %v843 = vpop.f32.mrf.mxu0
        %v844 = vadd.f32 0.0, %v843
        %v845 = vpop.f32.mrf.mxu0
        %v846 = vpop.f32.mrf.mxu0
        %v847 = vadd.f32 0.0, %v846
        %v848 = vpop.f32.mrf.mxu0
        %849 = vmatprep.mubr.bf16.mxu0 0
        %850 = vmatmul.mubr.bf16.gmra.mxu0 %v769
        %v851 = vpop.f32.mrf.mxu0
        %v852 = vadd.f32 0.0, %v851
        %v853 = vpop.f32.mrf.mxu0
        %v854 = vpop.f32.mrf.mxu0
        %v855 = vadd.f32 0.0, %v854
        %v856 = vpop.f32.mrf.mxu0
        %857 = vmatprep.mubr.bf16.mxu0 0
        %858 = vmatmul.mubr.bf16.gmra.mxu0 %v772
        %v859 = vpop.f32.mrf.mxu0
        %v860 = vadd.f32 0.0, %v859
        %v861 = vpop.f32.mrf.mxu0
        %v862 = vpop.f32.mrf.mxu0
        %v863 = vadd.f32 0.0, %v862
        %v864 = vpop.f32.mrf.mxu0
        %865 = vmatprep.mubr.bf16.mxu0 0
        %866 = vmatmul.mubr.bf16.gmra.mxu0 %v775
        %v867 = vpop.f32.mrf.mxu0
        %v868 = vadd.f32 0.0, %v867
        %v869 = vpop.f32.mrf.mxu0
        %v870 = vpop.f32.mrf.mxu0
        %v871 = vadd.f32 0.0, %v870
        %v872 = vpop.f32.mrf.mxu0
        %873 = vmatprep.mubr.bf16.mxu0 0
        %874 = vmatmul.mubr.bf16.gmra.mxu0 %v778
        %v875 = vpop.f32.mrf.mxu0
        %v876 = vadd.f32 0.0, %v875
        %v877 = vpop.f32.mrf.mxu0
        %v878 = vpop.f32.mrf.mxu0
        %v879 = vadd.f32 0.0, %v878
        %v880 = vpop.f32.mrf.mxu0
        %881 = vmatprep.mubr.bf16.mxu0 0
        %882 = vmatmul.mubr.bf16.gmra.mxu0 %v781
        %v883 = vpop.f32.mrf.mxu0
        %v884 = vadd.f32 0.0, %v883
        %v885 = vpop.f32.mrf.mxu0
        %v886 = vpop.f32.mrf.mxu0
        %v887 = vadd.f32 0.0, %v886
        %v888 = vpop.f32.mrf.mxu0
        %889 = vmatprep.mubr.bf16.mxu0 0
        %890 = vmatmul.mubr.bf16.gmra.mxu0 %v784
        %v891 = vpop.f32.mrf.mxu0
        %v892 = vadd.f32 0.0, %v891
        %v893 = vpop.f32.mrf.mxu0
        %v894 = vpop.f32.mrf.mxu0
        %v895 = vadd.f32 0.0, %v894
        %v896 = vpop.f32.mrf.mxu0
        %897 = vmatprep.mubr.bf16.mxu0 0
        %898 = vmatmul.mubr.bf16.gmra.mxu0 %v787
        %v899 = vpop.f32.mrf.mxu0
        %v900 = vadd.f32 0.0, %v899
        %v901 = vpop.f32.mrf.mxu0
        %v902 = vpop.f32.mrf.mxu0
        %v903 = vadd.f32 0.0, %v902
        %v904 = vpop.f32.mrf.mxu0
        %905 = vmatprep.mubr.bf16.mxu0 0
        %906 = vmatmul.mubr.bf16.gmra.mxu0 %v790
        %v907 = vpop.f32.mrf.mxu0
        %v908 = vadd.f32 0.0, %v907
        %v909 = vpop.f32.mrf.mxu0
        %v910 = vpop.f32.mrf.mxu0
        %v911 = vadd.f32 0.0, %v910
        %v912 = vpop.f32.mrf.mxu0
        %913 = vmatprep.mubr.bf16.mxu0 0
        %914 = vmatmul.mubr.bf16.gmra.mxu0 %v793
        %v915 = vpop.f32.mrf.mxu0
        %v916 = vadd.f32 0.0, %v915
        %v917 = vpop.f32.mrf.mxu0
        %v918 = vpop.f32.mrf.mxu0
        %v919 = vadd.f32 0.0, %v918
        %v920 = vpop.f32.mrf.mxu0
        %921 = vmatprep.mubr.bf16.mxu0 0
        %922 = vmatmul.mubr.bf16.gmra.mxu0 %v796
        %v923 = vpop.f32.mrf.mxu0
        %v924 = vadd.f32 0.0, %v923
        %v925 = vpop.f32.mrf.mxu0
        %v926 = vpop.f32.mrf.mxu0
        %v927 = vadd.f32 0.0, %v926
        %v928 = vpop.f32.mrf.mxu0
        %929 = vmatprep.mubr.bf16.mxu0 0
        %930 = vmatmul.mubr.bf16.gmra.mxu0 %v799
        %v931 = vpop.f32.mrf.mxu0
        %v932 = vadd.f32 0.0, %v931
        %v933 = vpop.f32.mrf.mxu0
        %v934 = vpop.f32.mrf.mxu0
        %v935 = vadd.f32 0.0, %v934
        %v936 = vpop.f32.mrf.mxu0
        %937 = vdwg.mxu0
        %s938 = scalar_lea.vmem %s601, 104 [#allocation2]
        %v939 = vld [vmem:[%s938] sm:$0xf]
        %v940 = vld [vmem:[%s938 + $0x4] sm:$0xf]
        %v941 = vld [vmem:[%s938 + $0x8] sm:$0xf]
        %v942 = vld [vmem:[%s938 + $0xc] sm:$0xf]
        %v943 = vld [vmem:[%s938 + $0x10] sm:$0xf]
        %v944 = vld [vmem:[%s938 + $0x14] sm:$0xf]
        %v945 = vld [vmem:[%s938 + $0x18] sm:$0xf]
        %v946 = vld [vmem:[%s938 + $0x1c] sm:$0xf]
        %v947 = vld [vmem:[%s938 + $0x20] sm:$0xf]
        %v948 = vld [vmem:[%s938 + $0x24] sm:$0xf]
        %v949 = vld [vmem:[%s938 + $0x28] sm:$0xf]
        %v950 = vld [vmem:[%s938 + $0x2c] sm:$0xf]
        %v951 = vld [vmem:[%s938 + $0x30] sm:$0xf]
        %v952 = vld [vmem:[%s938 + $0x34] sm:$0xf]
        %v953 = vld [vmem:[%s938 + $0x38] sm:$0xf]
        %v954 = vld [vmem:[%s938 + $0x3c] sm:$0xf]
        %v955 = vld [vmem:[%s938 + $0x40] sm:$0xf]
        %v956 = vld [vmem:[%s938 + $0x44] sm:$0xf]
        %v957 = vld [vmem:[%s938 + $0x48] sm:$0xf]
        %v958 = vld [vmem:[%s938 + $0x4c] sm:$0xf]
        %v959 = vld [vmem:[%s938 + $0x50] sm:$0xf]
        %v960 = vld [vmem:[%s938 + $0x54] sm:$0xf]
        %v961 = vld [vmem:[%s938 + $0x58] sm:$0xf]
        %v962 = vld [vmem:[%s938 + $0x5c] sm:$0xf]
        %v963 = vld [vmem:[%s938 + $0x60] sm:$0xf]
        %v964 = vld [vmem:[%s938 + $0x64] sm:$0xf]
        %v991 = vunpack.c.l.b16 %v939
        %v992 = vunpack.c.l.b16 %v940
        %v993 = vunpack.c.l.b16 %v941
        %v994 = vunpack.c.l.b16 %v942
        %v995 = vunpack.c.l.b16 %v943
        %v996 = vunpack.c.l.b16 %v944
        %v997 = vunpack.c.l.b16 %v945
        %v998 = vunpack.c.l.b16 %v946
        %v999 = vunpack.c.l.b16 %v947
        %v1000 = vunpack.c.l.b16 %v948
        %v1001 = vunpack.c.l.b16 %v949
        %v1002 = vunpack.c.l.b16 %v950
        %v1003 = vunpack.c.l.b16 %v951
        %v1004 = vunpack.c.l.b16 %v952
        %v1005 = vunpack.c.l.b16 %v953
        %v1006 = vunpack.c.l.b16 %v954
        %v1007 = vunpack.c.l.b16 %v955
        %v1008 = vunpack.c.l.b16 %v956
        %v1009 = vunpack.c.l.b16 %v957
        %v1010 = vunpack.c.l.b16 %v958
        %v1011 = vunpack.c.l.b16 %v959
        %v1012 = vunpack.c.l.b16 %v960
        %v1013 = vunpack.c.l.b16 %v961
        %v1014 = vunpack.c.l.b16 %v962
        %v1015 = vunpack.c.l.b16 %v963
        %v1016 = vunpack.c.l.b16 %v964
        %v1017 = vpack.c.b16 %v992, %v991
        %v1018 = vpack.c.b16 %v994, %v993
        %v1019 = vpack.c.b16 %v996, %v995
        %v1020 = vpack.c.b16 %v998, %v997
        %v1021 = vpack.c.b16 %v1000, %v999
        %v1022 = vpack.c.b16 %v1002, %v1001
        %v1023 = vpack.c.b16 %v1004, %v1003
        %v1024 = vpack.c.b16 %v1006, %v1005
        %v1025 = vpack.c.b16 %v1008, %v1007
        %v1026 = vpack.c.b16 %v1010, %v1009
        %v1027 = vpack.c.b16 %v1012, %v1011
        %v1028 = vpack.c.b16 %v1014, %v1013
        %v1029 = vpack.c.b16 %v1016, %v1015
        %v1031 = vsel %vm761, %v1017, 0
        %v1034 = vsel %vm761, %v1018, 0
        %v1037 = vsel %vm761, %v1019, 0
        %v1040 = vsel %vm761, %v1020, 0
        %v1043 = vsel %vm761, %v1021, 0
        %v1046 = vsel %vm761, %v1022, 0
        %v1049 = vsel %vm761, %v1023, 0
        %v1052 = vsel %vm761, %v1024, 0
        %v1055 = vsel %vm761, %v1025, 0
        %v1058 = vsel %vm761, %v1026, 0
        %v1061 = vsel %vm761, %v1027, 0
        %v1064 = vsel %vm761, %v1028, 0
        %v1067 = vsel %vm761, %v1029, 0
        %1069 = vmatprep.subr.bf16.mxu0 0
        %1070 = vmatpush1.bf16.msra.mxu0 0
        %1071 = vmatprep.subr.bf16.mxu0 0
        %1072 = vmatpush1.bf16.msra.mxu0 0
        %1073 = vmatprep.subr.bf16.mxu0 0
        %1074 = vmatpush1.bf16.msra.mxu0 0
        %1075 = vmatprep.subr.bf16.mxu0 0
        %1076 = vmatpush1.bf16.msra.mxu0 %v755
        %1077 = vmatprep.subr.bf16.mxu0 0
        %1078 = vmatpush1.bf16.msra.mxu0 %v754
        %1079 = vmatprep.subr.bf16.mxu0 0
        %1080 = vmatpush1.bf16.msra.mxu0 %v753
        %1081 = vmatprep.subr.bf16.mxu0 0
        %1082 = vmatpush1.bf16.msra.mxu0 %v752
        %1083 = vmatprep.subr.bf16.mxu0 0
        %1084 = vmatpush1.bf16.msra.mxu0 %v751
        %1085 = vmatprep.subr.bf16.mxu0 0
        %1086 = vmatpush2.bf16.msra.mxu0 0
        %1087 = vmatprep.subr.bf16.mxu0 0
        %1088 = vmatpush2.bf16.msra.mxu0 0
        %1089 = vmatprep.subr.bf16.mxu0 0
        %1090 = vmatpush2.bf16.msra.mxu0 0
        %1091 = vmatprep.subr.bf16.mxu0 0
        %1092 = vmatpush2.bf16.msra.mxu0 0
        %1093 = vmatprep.subr.bf16.mxu0 0
        %1094 = vmatpush2.bf16.msra.mxu0 0
        %1095 = vmatprep.subr.bf16.mxu0 0
        %1096 = vmatpush2.bf16.msra.mxu0 0
        %1097 = vmatprep.subr.bf16.mxu0 0
        %1098 = vmatpush2.bf16.msra.mxu0 0
        %1099 = vmatprep.subr.bf16.mxu0 0
        %1100 = vmatpush2.bf16.msra.mxu0 0
        %1101 = vmatprep.mubr.bf16.mxu0 0
        %1102 = vmatmul.mubr.bf16.gmra.mxu0 %v1031
        %v1103 = vpop.f32.mrf.mxu0
        %v1104 = vadd.f32 0.0, %v1103
        %v1105 = vpop.f32.mrf.mxu0
        %v1106 = vpop.f32.mrf.mxu0
        %v1107 = vadd.f32 0.0, %v1106
        %v1108 = vpop.f32.mrf.mxu0
        %1109 = vmatprep.mubr.bf16.mxu0 0
        %1110 = vmatmul.mubr.bf16.gmra.mxu0 %v1034
        %v1111 = vpop.f32.mrf.mxu0
        %v1112 = vadd.f32 0.0, %v1111
        %v1113 = vpop.f32.mrf.mxu0
        %v1114 = vpop.f32.mrf.mxu0
        %v1115 = vadd.f32 0.0, %v1114
        %v1116 = vpop.f32.mrf.mxu0
        %1117 = vmatprep.mubr.bf16.mxu0 0
        %1118 = vmatmul.mubr.bf16.gmra.mxu0 %v1037
        %v1119 = vpop.f32.mrf.mxu0
        %v1120 = vadd.f32 0.0, %v1119
        %v1121 = vpop.f32.mrf.mxu0
        %v1122 = vpop.f32.mrf.mxu0
        %v1123 = vadd.f32 0.0, %v1122
        %v1124 = vpop.f32.mrf.mxu0
        %1125 = vmatprep.mubr.bf16.mxu0 0
        %1126 = vmatmul.mubr.bf16.gmra.mxu0 %v1040
        %v1127 = vpop.f32.mrf.mxu0
        %v1128 = vadd.f32 0.0, %v1127
        %v1129 = vpop.f32.mrf.mxu0
        %v1130 = vpop.f32.mrf.mxu0
        %v1131 = vadd.f32 0.0, %v1130
        %v1132 = vpop.f32.mrf.mxu0
        %1133 = vmatprep.mubr.bf16.mxu0 0
        %1134 = vmatmul.mubr.bf16.gmra.mxu0 %v1043
        %v1135 = vpop.f32.mrf.mxu0
        %v1136 = vadd.f32 0.0, %v1135
        %v1137 = vpop.f32.mrf.mxu0
        %v1138 = vpop.f32.mrf.mxu0
        %v1139 = vadd.f32 0.0, %v1138
        %v1140 = vpop.f32.mrf.mxu0
        %1141 = vmatprep.mubr.bf16.mxu0 0
        %1142 = vmatmul.mubr.bf16.gmra.mxu0 %v1046
        %v1143 = vpop.f32.mrf.mxu0
        %v1144 = vadd.f32 0.0, %v1143
        %v1145 = vpop.f32.mrf.mxu0
        %v1146 = vpop.f32.mrf.mxu0
        %v1147 = vadd.f32 0.0, %v1146
        %v1148 = vpop.f32.mrf.mxu0
        %1149 = vmatprep.mubr.bf16.mxu0 0
        %1150 = vmatmul.mubr.bf16.gmra.mxu0 %v1049
        %v1151 = vpop.f32.mrf.mxu0
        %v1152 = vadd.f32 0.0, %v1151
        %v1153 = vpop.f32.mrf.mxu0
        %v1154 = vpop.f32.mrf.mxu0
        %v1155 = vadd.f32 0.0, %v1154
        %v1156 = vpop.f32.mrf.mxu0
        %1157 = vmatprep.mubr.bf16.mxu0 0
        %1158 = vmatmul.mubr.bf16.gmra.mxu0 %v1052
        %v1159 = vpop.f32.mrf.mxu0
        %v1160 = vadd.f32 0.0, %v1159
        %v1161 = vpop.f32.mrf.mxu0
        %v1162 = vpop.f32.mrf.mxu0
        %v1163 = vadd.f32 0.0, %v1162
        %v1164 = vpop.f32.mrf.mxu0
        %1165 = vmatprep.mubr.bf16.mxu0 0
        %1166 = vmatmul.mubr.bf16.gmra.mxu0 %v1055
        %v1167 = vpop.f32.mrf.mxu0
        %v1168 = vadd.f32 0.0, %v1167
        %v1169 = vpop.f32.mrf.mxu0
        %v1170 = vpop.f32.mrf.mxu0
        %v1171 = vadd.f32 0.0, %v1170
        %v1172 = vpop.f32.mrf.mxu0
        %1173 = vmatprep.mubr.bf16.mxu0 0
        %1174 = vmatmul.mubr.bf16.gmra.mxu0 %v1058
        %v1175 = vpop.f32.mrf.mxu0
        %v1176 = vadd.f32 0.0, %v1175
        %v1177 = vpop.f32.mrf.mxu0
        %v1178 = vpop.f32.mrf.mxu0
        %v1179 = vadd.f32 0.0, %v1178
        %v1180 = vpop.f32.mrf.mxu0
        %1181 = vmatprep.mubr.bf16.mxu0 0
        %1182 = vmatmul.mubr.bf16.gmra.mxu0 %v1061
        %v1183 = vpop.f32.mrf.mxu0
        %v1184 = vadd.f32 0.0, %v1183
        %v1185 = vpop.f32.mrf.mxu0
        %v1186 = vpop.f32.mrf.mxu0
        %v1187 = vadd.f32 0.0, %v1186
        %v1188 = vpop.f32.mrf.mxu0
        %1189 = vmatprep.mubr.bf16.mxu0 0
        %1190 = vmatmul.mubr.bf16.gmra.mxu0 %v1064
        %v1191 = vpop.f32.mrf.mxu0
        %v1192 = vadd.f32 0.0, %v1191
        %v1193 = vpop.f32.mrf.mxu0
        %v1194 = vpop.f32.mrf.mxu0
        %v1195 = vadd.f32 0.0, %v1194
        %v1196 = vpop.f32.mrf.mxu0
        %1197 = vmatprep.mubr.bf16.mxu0 0
        %1198 = vmatmul.mubr.bf16.gmra.mxu0 %v1067
        %v1199 = vpop.f32.mrf.mxu0
        %v1200 = vadd.f32 0.0, %v1199
        %v1201 = vpop.f32.mrf.mxu0
        %v1202 = vpop.f32.mrf.mxu0
        %v1203 = vadd.f32 0.0, %v1202
        %v1204 = vpop.f32.mrf.mxu0
        %1205 = vdwg.mxu0
        %v1206 = vmax.f32 %v836, %v1104
        %v1207 = vmax.f32 %v839, %v1107
        %v1208 = vmax.f32 %v844, %v1112
        %v1209 = vmax.f32 %v847, %v1115
        %v1210 = vmax.f32 %v852, %v1120
        %v1211 = vmax.f32 %v855, %v1123
        %v1212 = vmax.f32 %v860, %v1128
        %v1213 = vmax.f32 %v863, %v1131
        %v1214 = vmax.f32 %v868, %v1136
        %v1215 = vmax.f32 %v871, %v1139
        %v1216 = vmax.f32 %v876, %v1144
        %v1217 = vmax.f32 %v879, %v1147
        %v1218 = vmax.f32 %v884, %v1152
        %v1219 = vmax.f32 %v887, %v1155
        %v1220 = vmax.f32 %v892, %v1160
        %v1221 = vmax.f32 %v895, %v1163
        %v1222 = vmax.f32 %v900, %v1168
        %v1223 = vmax.f32 %v903, %v1171
        %v1224 = vmax.f32 %v908, %v1176
        %v1225 = vmax.f32 %v911, %v1179
        %v1226 = vmax.f32 %v916, %v1184
        %v1227 = vmax.f32 %v919, %v1187
        %v1228 = vmax.f32 %v924, %v1192
        %v1229 = vmax.f32 %v927, %v1195
        %v1230 = vmax.f32 %v932, %v1200
        %v1231 = vmax.f32 %v935, %v1203
        %s1232 = scalar_lea.vmem %s601, 208 [#allocation2]
        %v1233 = vld [vmem:[%s1232] sm:$0xf]
        %v1234 = vld [vmem:[%s1232 + $0x4] sm:$0xf]
        %v1235 = vld [vmem:[%s1232 + $0x8] sm:$0xf]
        %v1236 = vld [vmem:[%s1232 + $0xc] sm:$0xf]
        %v1237 = vld [vmem:[%s1232 + $0x10] sm:$0xf]
        %v1238 = vld [vmem:[%s1232 + $0x14] sm:$0xf]
        %v1239 = vld [vmem:[%s1232 + $0x18] sm:$0xf]
        %v1240 = vld [vmem:[%s1232 + $0x1c] sm:$0xf]
        %v1241 = vld [vmem:[%s1232 + $0x20] sm:$0xf]
        %v1242 = vld [vmem:[%s1232 + $0x24] sm:$0xf]
        %v1243 = vld [vmem:[%s1232 + $0x28] sm:$0xf]
        %v1244 = vld [vmem:[%s1232 + $0x2c] sm:$0xf]
        %v1245 = vld [vmem:[%s1232 + $0x30] sm:$0xf]
        %v1246 = vld [vmem:[%s1232 + $0x34] sm:$0xf]
        %v1247 = vld [vmem:[%s1232 + $0x38] sm:$0xf]
        %v1248 = vld [vmem:[%s1232 + $0x3c] sm:$0xf]
        %v1249 = vld [vmem:[%s1232 + $0x40] sm:$0xf]
        %v1250 = vld [vmem:[%s1232 + $0x44] sm:$0xf]
        %v1251 = vld [vmem:[%s1232 + $0x48] sm:$0xf]
        %v1252 = vld [vmem:[%s1232 + $0x4c] sm:$0xf]
        %v1253 = vld [vmem:[%s1232 + $0x50] sm:$0xf]
        %v1254 = vld [vmem:[%s1232 + $0x54] sm:$0xf]
        %v1255 = vld [vmem:[%s1232 + $0x58] sm:$0xf]
        %v1256 = vld [vmem:[%s1232 + $0x5c] sm:$0xf]
        %v1257 = vld [vmem:[%s1232 + $0x60] sm:$0xf]
        %v1258 = vld [vmem:[%s1232 + $0x64] sm:$0xf]
        %v1285 = vunpack.c.l.b16 %v1233
        %v1286 = vunpack.c.l.b16 %v1234
        %v1287 = vunpack.c.l.b16 %v1235
        %v1288 = vunpack.c.l.b16 %v1236
        %v1289 = vunpack.c.l.b16 %v1237
        %v1290 = vunpack.c.l.b16 %v1238
        %v1291 = vunpack.c.l.b16 %v1239
        %v1292 = vunpack.c.l.b16 %v1240
        %v1293 = vunpack.c.l.b16 %v1241
        %v1294 = vunpack.c.l.b16 %v1242
        %v1295 = vunpack.c.l.b16 %v1243
        %v1296 = vunpack.c.l.b16 %v1244
        %v1297 = vunpack.c.l.b16 %v1245
        %v1298 = vunpack.c.l.b16 %v1246
        %v1299 = vunpack.c.l.b16 %v1247
        %v1300 = vunpack.c.l.b16 %v1248
        %v1301 = vunpack.c.l.b16 %v1249
        %v1302 = vunpack.c.l.b16 %v1250
        %v1303 = vunpack.c.l.b16 %v1251
        %v1304 = vunpack.c.l.b16 %v1252
        %v1305 = vunpack.c.l.b16 %v1253
        %v1306 = vunpack.c.l.b16 %v1254
        %v1307 = vunpack.c.l.b16 %v1255
        %v1308 = vunpack.c.l.b16 %v1256
        %v1309 = vunpack.c.l.b16 %v1257
        %v1310 = vunpack.c.l.b16 %v1258
        %v1311 = vpack.c.b16 %v1286, %v1285
        %v1312 = vpack.c.b16 %v1288, %v1287
        %v1313 = vpack.c.b16 %v1290, %v1289
        %v1314 = vpack.c.b16 %v1292, %v1291
        %v1315 = vpack.c.b16 %v1294, %v1293
        %v1316 = vpack.c.b16 %v1296, %v1295
        %v1317 = vpack.c.b16 %v1298, %v1297
        %v1318 = vpack.c.b16 %v1300, %v1299
        %v1319 = vpack.c.b16 %v1302, %v1301
        %v1320 = vpack.c.b16 %v1304, %v1303
        %v1321 = vpack.c.b16 %v1306, %v1305
        %v1322 = vpack.c.b16 %v1308, %v1307
        %v1323 = vpack.c.b16 %v1310, %v1309
        %v1325 = vsel %vm761, %v1311, 0
        %v1328 = vsel %vm761, %v1312, 0
        %v1331 = vsel %vm761, %v1313, 0
        %v1334 = vsel %vm761, %v1314, 0
        %v1337 = vsel %vm761, %v1315, 0
        %v1340 = vsel %vm761, %v1316, 0
        %v1343 = vsel %vm761, %v1317, 0
        %v1346 = vsel %vm761, %v1318, 0
        %v1349 = vsel %vm761, %v1319, 0
        %v1352 = vsel %vm761, %v1320, 0
        %v1355 = vsel %vm761, %v1321, 0
        %v1358 = vsel %vm761, %v1322, 0
        %v1361 = vsel %vm761, %v1323, 0
        %1363 = vmatprep.subr.bf16.mxu0 0
        %1364 = vmatpush1.bf16.msra.mxu0 0
        %1365 = vmatprep.subr.bf16.mxu0 0
        %1366 = vmatpush1.bf16.msra.mxu0 0
        %1367 = vmatprep.subr.bf16.mxu0 0
        %1368 = vmatpush1.bf16.msra.mxu0 0
        %1369 = vmatprep.subr.bf16.mxu0 0
        %1370 = vmatpush1.bf16.msra.mxu0 %v755
        %1371 = vmatprep.subr.bf16.mxu0 0
        %1372 = vmatpush1.bf16.msra.mxu0 %v754
        %1373 = vmatprep.subr.bf16.mxu0 0
        %1374 = vmatpush1.bf16.msra.mxu0 %v753
        %1375 = vmatprep.subr.bf16.mxu0 0
        %1376 = vmatpush1.bf16.msra.mxu0 %v752
        %1377 = vmatprep.subr.bf16.mxu0 0
        %1378 = vmatpush1.bf16.msra.mxu0 %v751
        %1379 = vmatprep.subr.bf16.mxu0 0
        %1380 = vmatpush2.bf16.msra.mxu0 0
        %1381 = vmatprep.subr.bf16.mxu0 0
        %1382 = vmatpush2.bf16.msra.mxu0 0
        %1383 = vmatprep.subr.bf16.mxu0 0
        %1384 = vmatpush2.bf16.msra.mxu0 0
        %1385 = vmatprep.subr.bf16.mxu0 0
        %1386 = vmatpush2.bf16.msra.mxu0 0
        %1387 = vmatprep.subr.bf16.mxu0 0
        %1388 = vmatpush2.bf16.msra.mxu0 0
        %1389 = vmatprep.subr.bf16.mxu0 0
        %1390 = vmatpush2.bf16.msra.mxu0 0
        %1391 = vmatprep.subr.bf16.mxu0 0
        %1392 = vmatpush2.bf16.msra.mxu0 0
        %1393 = vmatprep.subr.bf16.mxu0 0
        %1394 = vmatpush2.bf16.msra.mxu0 0
        %1395 = vmatprep.mubr.bf16.mxu0 0
        %1396 = vmatmul.mubr.bf16.gmra.mxu0 %v1325
        %v1397 = vpop.f32.mrf.mxu0
        %v1398 = vadd.f32 0.0, %v1397
        %v1399 = vpop.f32.mrf.mxu0
        %v1400 = vpop.f32.mrf.mxu0
        %v1401 = vadd.f32 0.0, %v1400
        %v1402 = vpop.f32.mrf.mxu0
        %1403 = vmatprep.mubr.bf16.mxu0 0
        %1404 = vmatmul.mubr.bf16.gmra.mxu0 %v1328
        %v1405 = vpop.f32.mrf.mxu0
        %v1406 = vadd.f32 0.0, %v1405
        %v1407 = vpop.f32.mrf.mxu0
        %v1408 = vpop.f32.mrf.mxu0
        %v1409 = vadd.f32 0.0, %v1408
        %v1410 = vpop.f32.mrf.mxu0
        %1411 = vmatprep.mubr.bf16.mxu0 0
        %1412 = vmatmul.mubr.bf16.gmra.mxu0 %v1331
        %v1413 = vpop.f32.mrf.mxu0
        %v1414 = vadd.f32 0.0, %v1413
        %v1415 = vpop.f32.mrf.mxu0
        %v1416 = vpop.f32.mrf.mxu0
        %v1417 = vadd.f32 0.0, %v1416
        %v1418 = vpop.f32.mrf.mxu0
        %1419 = vmatprep.mubr.bf16.mxu0 0
        %1420 = vmatmul.mubr.bf16.gmra.mxu0 %v1334
        %v1421 = vpop.f32.mrf.mxu0
        %v1422 = vadd.f32 0.0, %v1421
        %v1423 = vpop.f32.mrf.mxu0
        %v1424 = vpop.f32.mrf.mxu0
        %v1425 = vadd.f32 0.0, %v1424
        %v1426 = vpop.f32.mrf.mxu0
        %1427 = vmatprep.mubr.bf16.mxu0 0
        %1428 = vmatmul.mubr.bf16.gmra.mxu0 %v1337
        %v1429 = vpop.f32.mrf.mxu0
        %v1430 = vadd.f32 0.0, %v1429
        %v1431 = vpop.f32.mrf.mxu0
        %v1432 = vpop.f32.mrf.mxu0
        %v1433 = vadd.f32 0.0, %v1432
        %v1434 = vpop.f32.mrf.mxu0
        %1435 = vmatprep.mubr.bf16.mxu0 0
        %1436 = vmatmul.mubr.bf16.gmra.mxu0 %v1340
        %v1437 = vpop.f32.mrf.mxu0
        %v1438 = vadd.f32 0.0, %v1437
        %v1439 = vpop.f32.mrf.mxu0
        %v1440 = vpop.f32.mrf.mxu0
        %v1441 = vadd.f32 0.0, %v1440
        %v1442 = vpop.f32.mrf.mxu0
        %1443 = vmatprep.mubr.bf16.mxu0 0
        %1444 = vmatmul.mubr.bf16.gmra.mxu0 %v1343
        %v1445 = vpop.f32.mrf.mxu0
        %v1446 = vadd.f32 0.0, %v1445
        %v1447 = vpop.f32.mrf.mxu0
        %v1448 = vpop.f32.mrf.mxu0
        %v1449 = vadd.f32 0.0, %v1448
        %v1450 = vpop.f32.mrf.mxu0
        %1451 = vmatprep.mubr.bf16.mxu0 0
        %1452 = vmatmul.mubr.bf16.gmra.mxu0 %v1346
        %v1453 = vpop.f32.mrf.mxu0
        %v1454 = vadd.f32 0.0, %v1453
        %v1455 = vpop.f32.mrf.mxu0
        %v1456 = vpop.f32.mrf.mxu0
        %v1457 = vadd.f32 0.0, %v1456
        %v1458 = vpop.f32.mrf.mxu0
        %1459 = vmatprep.mubr.bf16.mxu0 0
        %1460 = vmatmul.mubr.bf16.gmra.mxu0 %v1349
        %v1461 = vpop.f32.mrf.mxu0
        %v1462 = vadd.f32 0.0, %v1461
        %v1463 = vpop.f32.mrf.mxu0
        %v1464 = vpop.f32.mrf.mxu0
        %v1465 = vadd.f32 0.0, %v1464
        %v1466 = vpop.f32.mrf.mxu0
        %1467 = vmatprep.mubr.bf16.mxu0 0
        %1468 = vmatmul.mubr.bf16.gmra.mxu0 %v1352
        %v1469 = vpop.f32.mrf.mxu0
        %v1470 = vadd.f32 0.0, %v1469
        %v1471 = vpop.f32.mrf.mxu0
        %v1472 = vpop.f32.mrf.mxu0
        %v1473 = vadd.f32 0.0, %v1472
        %v1474 = vpop.f32.mrf.mxu0
        %1475 = vmatprep.mubr.bf16.mxu0 0
        %1476 = vmatmul.mubr.bf16.gmra.mxu0 %v1355
        %v1477 = vpop.f32.mrf.mxu0
        %v1478 = vadd.f32 0.0, %v1477
        %v1479 = vpop.f32.mrf.mxu0
        %v1480 = vpop.f32.mrf.mxu0
        %v1481 = vadd.f32 0.0, %v1480
        %v1482 = vpop.f32.mrf.mxu0
        %1483 = vmatprep.mubr.bf16.mxu0 0
        %1484 = vmatmul.mubr.bf16.gmra.mxu0 %v1358
        %v1485 = vpop.f32.mrf.mxu0
        %v1486 = vadd.f32 0.0, %v1485
        %v1487 = vpop.f32.mrf.mxu0
        %v1488 = vpop.f32.mrf.mxu0
        %v1489 = vadd.f32 0.0, %v1488
        %v1490 = vpop.f32.mrf.mxu0
        %1491 = vmatprep.mubr.bf16.mxu0 0
        %1492 = vmatmul.mubr.bf16.gmra.mxu0 %v1361
        %v1493 = vpop.f32.mrf.mxu0
        %v1494 = vadd.f32 0.0, %v1493
        %v1495 = vpop.f32.mrf.mxu0
        %v1496 = vpop.f32.mrf.mxu0
        %v1497 = vadd.f32 0.0, %v1496
        %v1498 = vpop.f32.mrf.mxu0
        %1499 = vdwg.mxu0
        %v1500 = vmax.f32 %v1206, %v1398
        %v1501 = vmax.f32 %v1207, %v1401
        %v1502 = vmax.f32 %v1208, %v1406
        %v1503 = vmax.f32 %v1209, %v1409
        %v1504 = vmax.f32 %v1210, %v1414
        %v1505 = vmax.f32 %v1211, %v1417
        %v1506 = vmax.f32 %v1212, %v1422
        %v1507 = vmax.f32 %v1213, %v1425
        %v1508 = vmax.f32 %v1214, %v1430
        %v1509 = vmax.f32 %v1215, %v1433
        %v1510 = vmax.f32 %v1216, %v1438
        %v1511 = vmax.f32 %v1217, %v1441
        %v1512 = vmax.f32 %v1218, %v1446
        %v1513 = vmax.f32 %v1219, %v1449
        %v1514 = vmax.f32 %v1220, %v1454
        %v1515 = vmax.f32 %v1221, %v1457
        %v1516 = vmax.f32 %v1222, %v1462
        %v1517 = vmax.f32 %v1223, %v1465
        %v1518 = vmax.f32 %v1224, %v1470
        %v1519 = vmax.f32 %v1225, %v1473
        %v1520 = vmax.f32 %v1226, %v1478
        %v1521 = vmax.f32 %v1227, %v1481
        %v1522 = vmax.f32 %v1228, %v1486
        %v1523 = vmax.f32 %v1229, %v1489
        %v1524 = vmax.f32 %v1230, %v1494
        %v1525 = vmax.f32 %v1231, %v1497
        %s1526 = scalar_lea.vmem %s601, 312 [#allocation2]
        %v1527 = vld [vmem:[%s1526] sm:$0xf]
        %v1528 = vld [vmem:[%s1526 + $0x4] sm:$0xf]
        %v1529 = vld [vmem:[%s1526 + $0x8] sm:$0xf]
        %v1530 = vld [vmem:[%s1526 + $0xc] sm:$0xf]
        %v1531 = vld [vmem:[%s1526 + $0x10] sm:$0xf]
        %v1532 = vld [vmem:[%s1526 + $0x14] sm:$0xf]
        %v1533 = vld [vmem:[%s1526 + $0x18] sm:$0xf]
        %v1534 = vld [vmem:[%s1526 + $0x1c] sm:$0xf]
        %v1535 = vld [vmem:[%s1526 + $0x20] sm:$0xf]
        %v1536 = vld [vmem:[%s1526 + $0x24] sm:$0xf]
        %v1537 = vld [vmem:[%s1526 + $0x28] sm:$0xf]
        %v1538 = vld [vmem:[%s1526 + $0x2c] sm:$0xf]
        %v1539 = vld [vmem:[%s1526 + $0x30] sm:$0xf]
        %v1540 = vld [vmem:[%s1526 + $0x34] sm:$0xf]
        %v1541 = vld [vmem:[%s1526 + $0x38] sm:$0xf]
        %v1542 = vld [vmem:[%s1526 + $0x3c] sm:$0xf]
        %v1543 = vld [vmem:[%s1526 + $0x40] sm:$0xf]
        %v1544 = vld [vmem:[%s1526 + $0x44] sm:$0xf]
        %v1545 = vld [vmem:[%s1526 + $0x48] sm:$0xf]
        %v1546 = vld [vmem:[%s1526 + $0x4c] sm:$0xf]
        %v1547 = vld [vmem:[%s1526 + $0x50] sm:$0xf]
        %v1548 = vld [vmem:[%s1526 + $0x54] sm:$0xf]
        %v1549 = vld [vmem:[%s1526 + $0x58] sm:$0xf]
        %v1550 = vld [vmem:[%s1526 + $0x5c] sm:$0xf]
        %v1551 = vld [vmem:[%s1526 + $0x60] sm:$0xf]
        %v1552 = vld [vmem:[%s1526 + $0x64] sm:$0xf]
        %v1579 = vunpack.c.l.b16 %v1527
        %v1580 = vunpack.c.l.b16 %v1528
        %v1581 = vunpack.c.l.b16 %v1529
        %v1582 = vunpack.c.l.b16 %v1530
        %v1583 = vunpack.c.l.b16 %v1531
        %v1584 = vunpack.c.l.b16 %v1532
        %v1585 = vunpack.c.l.b16 %v1533
        %v1586 = vunpack.c.l.b16 %v1534
        %v1587 = vunpack.c.l.b16 %v1535
        %v1588 = vunpack.c.l.b16 %v1536
        %v1589 = vunpack.c.l.b16 %v1537
        %v1590 = vunpack.c.l.b16 %v1538
        %v1591 = vunpack.c.l.b16 %v1539
        %v1592 = vunpack.c.l.b16 %v1540
        %v1593 = vunpack.c.l.b16 %v1541
        %v1594 = vunpack.c.l.b16 %v1542
        %v1595 = vunpack.c.l.b16 %v1543
        %v1596 = vunpack.c.l.b16 %v1544
        %v1597 = vunpack.c.l.b16 %v1545
        %v1598 = vunpack.c.l.b16 %v1546
        %v1599 = vunpack.c.l.b16 %v1547
        %v1600 = vunpack.c.l.b16 %v1548
        %v1601 = vunpack.c.l.b16 %v1549
        %v1602 = vunpack.c.l.b16 %v1550
        %v1603 = vunpack.c.l.b16 %v1551
        %v1604 = vunpack.c.l.b16 %v1552
        %v1605 = vpack.c.b16 %v1580, %v1579
        %v1606 = vpack.c.b16 %v1582, %v1581
        %v1607 = vpack.c.b16 %v1584, %v1583
        %v1608 = vpack.c.b16 %v1586, %v1585
        %v1609 = vpack.c.b16 %v1588, %v1587
        %v1610 = vpack.c.b16 %v1590, %v1589
        %v1611 = vpack.c.b16 %v1592, %v1591
        %v1612 = vpack.c.b16 %v1594, %v1593
        %v1613 = vpack.c.b16 %v1596, %v1595
        %v1614 = vpack.c.b16 %v1598, %v1597
        %v1615 = vpack.c.b16 %v1600, %v1599
        %v1616 = vpack.c.b16 %v1602, %v1601
        %v1617 = vpack.c.b16 %v1604, %v1603
        %v1619 = vsel %vm761, %v1605, 0
        %v1622 = vsel %vm761, %v1606, 0
        %v1625 = vsel %vm761, %v1607, 0
        %v1628 = vsel %vm761, %v1608, 0
        %v1631 = vsel %vm761, %v1609, 0
        %v1634 = vsel %vm761, %v1610, 0
        %v1637 = vsel %vm761, %v1611, 0
        %v1640 = vsel %vm761, %v1612, 0
        %v1643 = vsel %vm761, %v1613, 0
        %v1646 = vsel %vm761, %v1614, 0
        %v1649 = vsel %vm761, %v1615, 0
        %v1652 = vsel %vm761, %v1616, 0
        %v1655 = vsel %vm761, %v1617, 0
        %1657 = vmatprep.subr.bf16.mxu0 0
        %1658 = vmatpush1.bf16.msra.mxu0 0
        %1659 = vmatprep.subr.bf16.mxu0 0
        %1660 = vmatpush1.bf16.msra.mxu0 0
        %1661 = vmatprep.subr.bf16.mxu0 0
        %1662 = vmatpush1.bf16.msra.mxu0 0
        %1663 = vmatprep.subr.bf16.mxu0 0
        %1664 = vmatpush1.bf16.msra.mxu0 %v755
        %1665 = vmatprep.subr.bf16.mxu0 0
        %1666 = vmatpush1.bf16.msra.mxu0 %v754
        %1667 = vmatprep.subr.bf16.mxu0 0
        %1668 = vmatpush1.bf16.msra.mxu0 %v753
        %1669 = vmatprep.subr.bf16.mxu0 0
        %1670 = vmatpush1.bf16.msra.mxu0 %v752
        %1671 = vmatprep.subr.bf16.mxu0 0
        %1672 = vmatpush1.bf16.msra.mxu0 %v751
        %1673 = vmatprep.subr.bf16.mxu0 0
        %1674 = vmatpush2.bf16.msra.mxu0 0
        %1675 = vmatprep.subr.bf16.mxu0 0
        %1676 = vmatpush2.bf16.msra.mxu0 0
        %1677 = vmatprep.subr.bf16.mxu0 0
        %1678 = vmatpush2.bf16.msra.mxu0 0
        %1679 = vmatprep.subr.bf16.mxu0 0
        %1680 = vmatpush2.bf16.msra.mxu0 0
        %1681 = vmatprep.subr.bf16.mxu0 0
        %1682 = vmatpush2.bf16.msra.mxu0 0
        %1683 = vmatprep.subr.bf16.mxu0 0
        %1684 = vmatpush2.bf16.msra.mxu0 0
        %1685 = vmatprep.subr.bf16.mxu0 0
        %1686 = vmatpush2.bf16.msra.mxu0 0
        %1687 = vmatprep.subr.bf16.mxu0 0
        %1688 = vmatpush2.bf16.msra.mxu0 0
        %1689 = vmatprep.mubr.bf16.mxu0 0
        %1690 = vmatmul.mubr.bf16.gmra.mxu0 %v1619
        %v1691 = vpop.f32.mrf.mxu0
        %v1692 = vadd.f32 0.0, %v1691
        %v1693 = vpop.f32.mrf.mxu0
        %v1694 = vpop.f32.mrf.mxu0
        %v1695 = vadd.f32 0.0, %v1694
        %v1696 = vpop.f32.mrf.mxu0
        %1697 = vmatprep.mubr.bf16.mxu0 0
        %1698 = vmatmul.mubr.bf16.gmra.mxu0 %v1622
        %v1699 = vpop.f32.mrf.mxu0
        %v1700 = vadd.f32 0.0, %v1699
        %v1701 = vpop.f32.mrf.mxu0
        %v1702 = vpop.f32.mrf.mxu0
        %v1703 = vadd.f32 0.0, %v1702
        %v1704 = vpop.f32.mrf.mxu0
        %1705 = vmatprep.mubr.bf16.mxu0 0
        %1706 = vmatmul.mubr.bf16.gmra.mxu0 %v1625
        %v1707 = vpop.f32.mrf.mxu0
        %v1708 = vadd.f32 0.0, %v1707
        %v1709 = vpop.f32.mrf.mxu0
        %v1710 = vpop.f32.mrf.mxu0
        %v1711 = vadd.f32 0.0, %v1710
        %v1712 = vpop.f32.mrf.mxu0
        %1713 = vmatprep.mubr.bf16.mxu0 0
        %1714 = vmatmul.mubr.bf16.gmra.mxu0 %v1628
        %v1715 = vpop.f32.mrf.mxu0
        %v1716 = vadd.f32 0.0, %v1715
        %v1717 = vpop.f32.mrf.mxu0
        %v1718 = vpop.f32.mrf.mxu0
        %v1719 = vadd.f32 0.0, %v1718
        %v1720 = vpop.f32.mrf.mxu0
        %1721 = vmatprep.mubr.bf16.mxu0 0
        %1722 = vmatmul.mubr.bf16.gmra.mxu0 %v1631
        %v1723 = vpop.f32.mrf.mxu0
        %v1724 = vadd.f32 0.0, %v1723
        %v1725 = vpop.f32.mrf.mxu0
        %v1726 = vpop.f32.mrf.mxu0
        %v1727 = vadd.f32 0.0, %v1726
        %v1728 = vpop.f32.mrf.mxu0
        %1729 = vmatprep.mubr.bf16.mxu0 0
        %1730 = vmatmul.mubr.bf16.gmra.mxu0 %v1634
        %v1731 = vpop.f32.mrf.mxu0
        %v1732 = vadd.f32 0.0, %v1731
        %v1733 = vpop.f32.mrf.mxu0
        %v1734 = vpop.f32.mrf.mxu0
        %v1735 = vadd.f32 0.0, %v1734
        %v1736 = vpop.f32.mrf.mxu0
        %1737 = vmatprep.mubr.bf16.mxu0 0
        %1738 = vmatmul.mubr.bf16.gmra.mxu0 %v1637
        %v1739 = vpop.f32.mrf.mxu0
        %v1740 = vadd.f32 0.0, %v1739
        %v1741 = vpop.f32.mrf.mxu0
        %v1742 = vpop.f32.mrf.mxu0
        %v1743 = vadd.f32 0.0, %v1742
        %v1744 = vpop.f32.mrf.mxu0
        %1745 = vmatprep.mubr.bf16.mxu0 0
        %1746 = vmatmul.mubr.bf16.gmra.mxu0 %v1640
        %v1747 = vpop.f32.mrf.mxu0
        %v1748 = vadd.f32 0.0, %v1747
        %v1749 = vpop.f32.mrf.mxu0
        %v1750 = vpop.f32.mrf.mxu0
        %v1751 = vadd.f32 0.0, %v1750
        %v1752 = vpop.f32.mrf.mxu0
        %1753 = vmatprep.mubr.bf16.mxu0 0
        %1754 = vmatmul.mubr.bf16.gmra.mxu0 %v1643
        %v1755 = vpop.f32.mrf.mxu0
        %v1756 = vadd.f32 0.0, %v1755
        %v1757 = vpop.f32.mrf.mxu0
        %v1758 = vpop.f32.mrf.mxu0
        %v1759 = vadd.f32 0.0, %v1758
        %v1760 = vpop.f32.mrf.mxu0
        %1761 = vmatprep.mubr.bf16.mxu0 0
        %1762 = vmatmul.mubr.bf16.gmra.mxu0 %v1646
        %v1763 = vpop.f32.mrf.mxu0
        %v1764 = vadd.f32 0.0, %v1763
        %v1765 = vpop.f32.mrf.mxu0
        %v1766 = vpop.f32.mrf.mxu0
        %v1767 = vadd.f32 0.0, %v1766
        %v1768 = vpop.f32.mrf.mxu0
        %1769 = vmatprep.mubr.bf16.mxu0 0
        %1770 = vmatmul.mubr.bf16.gmra.mxu0 %v1649
        %v1771 = vpop.f32.mrf.mxu0
        %v1772 = vadd.f32 0.0, %v1771
        %v1773 = vpop.f32.mrf.mxu0
        %v1774 = vpop.f32.mrf.mxu0
        %v1775 = vadd.f32 0.0, %v1774
        %v1776 = vpop.f32.mrf.mxu0
        %1777 = vmatprep.mubr.bf16.mxu0 0
        %1778 = vmatmul.mubr.bf16.gmra.mxu0 %v1652
        %v1779 = vpop.f32.mrf.mxu0
        %v1780 = vadd.f32 0.0, %v1779
        %v1781 = vpop.f32.mrf.mxu0
        %v1782 = vpop.f32.mrf.mxu0
        %v1783 = vadd.f32 0.0, %v1782
        %v1784 = vpop.f32.mrf.mxu0
        %1785 = vmatprep.mubr.bf16.mxu0 0
        %1786 = vmatmul.mubr.bf16.gmra.mxu0 %v1655
        %v1787 = vpop.f32.mrf.mxu0
        %v1788 = vadd.f32 0.0, %v1787
        %v1789 = vpop.f32.mrf.mxu0
        %v1790 = vpop.f32.mrf.mxu0
        %v1791 = vadd.f32 0.0, %v1790
        %v1792 = vpop.f32.mrf.mxu0
        %1793 = vdwg.mxu0
        %v1794 = vmax.f32 %v1500, %v1692
        %v1795 = vmax.f32 %v1501, %v1695
        %v1796 = vmax.f32 %v1502, %v1700
        %v1797 = vmax.f32 %v1503, %v1703
        %v1798 = vmax.f32 %v1504, %v1708
        %v1799 = vmax.f32 %v1505, %v1711
        %v1800 = vmax.f32 %v1506, %v1716
        %v1801 = vmax.f32 %v1507, %v1719
        %v1802 = vmax.f32 %v1508, %v1724
        %v1803 = vmax.f32 %v1509, %v1727
        %v1804 = vmax.f32 %v1510, %v1732
        %v1805 = vmax.f32 %v1511, %v1735
        %v1806 = vmax.f32 %v1512, %v1740
        %v1807 = vmax.f32 %v1513, %v1743
        %v1808 = vmax.f32 %v1514, %v1748
        %v1809 = vmax.f32 %v1515, %v1751
        %v1810 = vmax.f32 %v1516, %v1756
        %v1811 = vmax.f32 %v1517, %v1759
        %v1812 = vmax.f32 %v1518, %v1764
        %v1813 = vmax.f32 %v1519, %v1767
        %v1814 = vmax.f32 %v1520, %v1772
        %v1815 = vmax.f32 %v1521, %v1775
        %v1816 = vmax.f32 %v1522, %v1780
        %v1817 = vmax.f32 %v1523, %v1783
        %v1818 = vmax.f32 %v1524, %v1788
        %v1819 = vmax.f32 %v1525, %v1791
        %v1820 = vld [vmem:[%s2] sm:$0x1]
        %v1822 = vlaneseq
        %v1823 = vshrl.u32 %v1822, 7
        %v1824 = vsub.s32 0, %v1823
        %v1825 = vrot.slane %v1820, %v1824
        %v1827 = vadd.f32 %v1794, %v1825
        %v1828 = vadd.f32 %v1795, %v1825
        %v1829 = vadd.f32 %v1796, %v1825
        %v1830 = vadd.f32 %v1797, %v1825
        %v1831 = vadd.f32 %v1798, %v1825
        %v1832 = vadd.f32 %v1799, %v1825
        %v1833 = vadd.f32 %v1800, %v1825
        %v1834 = vadd.f32 %v1801, %v1825
        %v1835 = vadd.f32 %v1802, %v1825
        %v1836 = vadd.f32 %v1803, %v1825
        %v1837 = vadd.f32 %v1804, %v1825
        %v1838 = vadd.f32 %v1805, %v1825
        %v1839 = vadd.f32 %v1806, %v1825
        %v1840 = vadd.f32 %v1807, %v1825
        %v1841 = vadd.f32 %v1808, %v1825
        %v1842 = vadd.f32 %v1809, %v1825
        %v1843 = vadd.f32 %v1810, %v1825
        %v1844 = vadd.f32 %v1811, %v1825
        %v1845 = vadd.f32 %v1812, %v1825
        %v1846 = vadd.f32 %v1813, %v1825
        %v1847 = vadd.f32 %v1814, %v1825
        %v1848 = vadd.f32 %v1815, %v1825
        %v1849 = vadd.f32 %v1816, %v1825
        %v1850 = vadd.f32 %v1817, %v1825
        %v1851 = vadd.f32 %v1818, %v1825
        %v1852 = vadd.f32 %v1819, %v1825
        %v1853 = vmax.f32 %v1827, 0.0
        %v1854 = vmax.f32 %v1828, 0.0
        %v1855 = vmax.f32 %v1829, 0.0
        %v1856 = vmax.f32 %v1830, 0.0
        %v1857 = vmax.f32 %v1831, 0.0
        %v1858 = vmax.f32 %v1832, 0.0
        %v1859 = vmax.f32 %v1833, 0.0
        %v1860 = vmax.f32 %v1834, 0.0
        %v1861 = vmax.f32 %v1835, 0.0
        %v1862 = vmax.f32 %v1836, 0.0
        %v1863 = vmax.f32 %v1837, 0.0
        %v1864 = vmax.f32 %v1838, 0.0
        %v1865 = vmax.f32 %v1839, 0.0
        %v1866 = vmax.f32 %v1840, 0.0
        %v1867 = vmax.f32 %v1841, 0.0
        %v1868 = vmax.f32 %v1842, 0.0
        %v1869 = vmax.f32 %v1843, 0.0
        %v1870 = vmax.f32 %v1844, 0.0
        %v1871 = vmax.f32 %v1845, 0.0
        %v1872 = vmax.f32 %v1846, 0.0
        %v1873 = vmax.f32 %v1847, 0.0
        %v1874 = vmax.f32 %v1848, 0.0
        %v1875 = vmax.f32 %v1849, 0.0
        %v1876 = vmax.f32 %v1850, 0.0
        %v1877 = vmax.f32 %v1851, 0.0
        %v1878 = vmax.f32 %v1852, 0.0
        %v1879 = vpack.c.bf16 %v1854, %v1853
        %v1880 = vpack.c.bf16 %v1856, %v1855
        %v1881 = vpack.c.bf16 %v1858, %v1857
        %v1882 = vpack.c.bf16 %v1860, %v1859
        %v1883 = vpack.c.bf16 %v1862, %v1861
        %v1884 = vpack.c.bf16 %v1864, %v1863
        %v1885 = vpack.c.bf16 %v1866, %v1865
        %v1886 = vpack.c.bf16 %v1868, %v1867
        %v1887 = vpack.c.bf16 %v1870, %v1869
        %v1888 = vpack.c.bf16 %v1872, %v1871
        %v1889 = vpack.c.bf16 %v1874, %v1873
        %v1890 = vpack.c.bf16 %v1876, %v1875
        %v1891 = vpack.c.bf16 %v1878, %v1877
        %v1905 = vunpack.c.l.b16 %v1879
        %v1906 = vunpack.c.h.b16 %v1879
        %v1907 = vunpack.c.l.b16 %v1880
        %v1908 = vunpack.c.h.b16 %v1880
        %v1909 = vunpack.c.l.b16 %v1881
        %v1910 = vunpack.c.h.b16 %v1881
        %v1911 = vunpack.c.l.b16 %v1882
        %v1912 = vunpack.c.h.b16 %v1882
        %v1913 = vunpack.c.l.b16 %v1883
        %v1914 = vunpack.c.h.b16 %v1883
        %v1915 = vunpack.c.l.b16 %v1884
        %v1916 = vunpack.c.h.b16 %v1884
        %v1917 = vunpack.c.l.b16 %v1885
        %v1918 = vunpack.c.h.b16 %v1885
        %v1919 = vunpack.c.l.b16 %v1886
        %v1920 = vunpack.c.h.b16 %v1886
        %v1921 = vunpack.c.l.b16 %v1887
        %v1922 = vunpack.c.h.b16 %v1887
        %v1923 = vunpack.c.l.b16 %v1888
        %v1924 = vunpack.c.h.b16 %v1888
        %v1925 = vunpack.c.l.b16 %v1889
        %v1926 = vunpack.c.h.b16 %v1889
        %v1927 = vunpack.c.l.b16 %v1890
        %v1928 = vunpack.c.h.b16 %v1890
        %v1929 = vunpack.c.l.b16 %v1891
        %v1930 = vunpack.c.h.b16 %v1891
        %v1931 = vpack.c.b16 %v1905, %v1905
        %v1932 = vpack.c.b16 %v1906, %v1906
        %v1933 = vpack.c.b16 %v1907, %v1907
        %v1934 = vpack.c.b16 %v1908, %v1908
        %v1935 = vpack.c.b16 %v1909, %v1909
        %v1936 = vpack.c.b16 %v1910, %v1910
        %v1937 = vpack.c.b16 %v1911, %v1911
        %v1938 = vpack.c.b16 %v1912, %v1912
        %v1939 = vpack.c.b16 %v1913, %v1913
        %v1940 = vpack.c.b16 %v1914, %v1914
        %v1941 = vpack.c.b16 %v1915, %v1915
        %v1942 = vpack.c.b16 %v1916, %v1916
        %v1943 = vpack.c.b16 %v1917, %v1917
        %v1944 = vpack.c.b16 %v1918, %v1918
        %v1945 = vpack.c.b16 %v1919, %v1919
        %v1946 = vpack.c.b16 %v1920, %v1920
        %v1947 = vpack.c.b16 %v1921, %v1921
        %v1948 = vpack.c.b16 %v1922, %v1922
        %v1949 = vpack.c.b16 %v1923, %v1923
        %v1950 = vpack.c.b16 %v1924, %v1924
        %v1951 = vpack.c.b16 %v1925, %v1925
        %v1952 = vpack.c.b16 %v1926, %v1926
        %v1953 = vpack.c.b16 %v1927, %v1927
        %v1954 = vpack.c.b16 %v1928, %v1928
        %v1955 = vpack.c.b16 %v1929, %v1929
        %v1956 = vpack.c.b16 %v1930, %v1930
        %1983 = vst [vmem:[%s627] sm:$0xf] %v1931
        %1984 = vst [vmem:[%s627 + $0x4] sm:$0xf] %v1932
        %1985 = vst [vmem:[%s627 + $0x8] sm:$0xf] %v1933
        %1986 = vst [vmem:[%s627 + $0xc] sm:$0xf] %v1934
        %1987 = vst [vmem:[%s627 + $0x10] sm:$0xf] %v1935
        %1988 = vst [vmem:[%s627 + $0x14] sm:$0xf] %v1936
        %1989 = vst [vmem:[%s627 + $0x18] sm:$0xf] %v1937
        %1990 = vst [vmem:[%s627 + $0x1c] sm:$0xf] %v1938
        %1991 = vst [vmem:[%s627 + $0x20] sm:$0xf] %v1939
        %1992 = vst [vmem:[%s627 + $0x24] sm:$0xf] %v1940
        %1993 = vst [vmem:[%s627 + $0x28] sm:$0xf] %v1941
        %1994 = vst [vmem:[%s627 + $0x2c] sm:$0xf] %v1942
        %1995 = vst [vmem:[%s627 + $0x30] sm:$0xf] %v1943
        %1996 = vst [vmem:[%s627 + $0x34] sm:$0xf] %v1944
        %1997 = vst [vmem:[%s627 + $0x38] sm:$0xf] %v1945
        %1998 = vst [vmem:[%s627 + $0x3c] sm:$0xf] %v1946
        %1999 = vst [vmem:[%s627 + $0x40] sm:$0xf] %v1947
        %2000 = vst [vmem:[%s627 + $0x44] sm:$0xf] %v1948
        %2001 = vst [vmem:[%s627 + $0x48] sm:$0xf] %v1949
        %2002 = vst [vmem:[%s627 + $0x4c] sm:$0xf] %v1950
        %2003 = vst [vmem:[%s627 + $0x50] sm:$0xf] %v1951
        %2004 = vst [vmem:[%s627 + $0x54] sm:$0xf] %v1952
        %2005 = vst [vmem:[%s627 + $0x58] sm:$0xf] %v1953
        %2006 = vst [vmem:[%s627 + $0x5c] sm:$0xf] %v1954
        %2007 = vst [vmem:[%s627 + $0x60] sm:$0xf] %v1955
        %2008 = vst [vmem:[%s627 + $0x64] sm:$0xf] %v1956
        %s2009 = smul.u32 26, %s14
        %p2010 = scmp.lt.s32.totalorder %s2009, 51
        %s2011 = scalar_select %p2010, %s2009, 51
        %s2012 = smul.addr %s2011, 4
        %s2013 = scalar_lea.vmem %s3, %s2012
        // Predicated region
        $region74: #{net_forward.3} parent=68 // pred_check
          %p2014 = pneg %p100
        $region75: #{net_forward.3} parent=68 // pred_check_branch
          %2016 = sbr.rel (%p2014) target = $region77
        $region76: #{net_forward.3} parent=68 // pred_region
          %s2017 = smul.u32 26, %s14
        $region77: #{net_forward.3} parent=68 // pred_fallthru
          _
      $region69: #{net_forward.3} parent=5 // pred_fallthru
        _
      %p2018 = scmp.le.s32.totalorder 2, %s9
      // Predicated region
      $region78: #{net_forward.3} parent=5 // pred_check
        %p2019 = pneg %p2018
      $region79: #{net_forward.3} parent=5 // pred_check_branch
        %2021 = sbr.rel (%p2019) target = $region81
      $region80: #{net_forward.3} parent=5 // pred_region
        %s2022 = ssub.s32 %s9, 2
        // Predicated region
        $region82: #{net_forward.3} parent=80 // pred_check
          %p2023 = pneg %p106
        $region83: #{net_forward.3} parent=80 // pred_check_branch
          %2025 = sbr.rel (%p2023) target = $region85
        $region84: #{net_forward.3} parent=80 // pred_region
          %s2026 = smul.u32 26, %s15
          %p2027 = scmp.lt.s32.totalorder %s2026, 51
          %s2028 = scalar_select %p2027, %s2026, 51
          %s2029 = smul.addr %s2028, 4
          %s2030 = scalar_lea.vmem %s3, %s2029
        $region85: #{net_forward.3} parent=80 // pred_fallthru
          _
      $region81: #{net_forward.3} parent=5 // pred_fallthru
        _
    $region6: #{net_forward.3} parent=1 // loop_footer
      %s13 = sadd.s32 1, %s9
    $region7: #{net_forward.3} parent=1 // loop_footer_branch
      %8 = sbr.rel target = $region3
    $region8: #{net_forward.3} parent=1 // loop_exit
      _

// kernel: net_forward.4
$region0: #{net_forward.4}
  #allocation0 [shape = 'u32[]', space=smem, size = 0x4, offset = 0x4, fixed_abs, tag = 'smem constant byte address 0x4 - core index']
  #allocation1 [shape = 'u32[144,128]{1,0:T(1,128)}', space=vmem, size = 0x12000, scoped, tag = 'internal scratch']
  %s0 = inlined_call_operand.vmem [shape: bf16[4,64,160], index: 0, kind: input, shape index: {}]
  %s1 = inlined_call_operand.vmem [shape: bf16[160,128], index: 1, kind: input, shape index: {}]
  %s2 = inlined_call_operand.vmem [shape: f32[1,128], index: 2, kind: input, shape index: {}]
  %s3 = inlined_call_operand.vmem [shape: bf16[64,128], index: 3, kind: output, shape index: {}]
  %s4 = sld [smem:[#allocation0]]
  $region83: #{net_forward.4} parent=0
    _
  %s6 = ssub.s32 1, %s4
  %s7 = scalar_select 0, %s6, %s4
  $region1: #{net_forward.4} parent=0
    #allocation2 [shape = 'u8[131072]{0}', space=vmem, size = 0x20000, scoped, tag = 'input window, operand 0']
    loop: start=0, step=1, limit=4
    $region2: #{net_forward.4} parent=1 // loop_pre_header
      _
    $region3: #{net_forward.4} parent=1 // loop_header
      %s9 = sphi 0, %s13
      %p10 = scmp.ge.s32.totalorder %s9, 4
      %s19 = sphi 0, %s21
      %s22 = sphi 0, %s19
      %s23 = sphi 0, %s22
      %s39 = sphi 0, %s23
      %s43 = sphi 0, %s43
      %s45 = sphi 0, %s43
      %s46 = sphi 0, %s45
      %s60 = sphi 0, %s46
      %s64 = sphi 0, %s64
      %s66 = sphi 0, %s64
      %s67 = sphi 0, %s66
      %s81 = sphi 0, %s67
      %s87 = sphi 0, %s89
      %s90 = sphi 0, %s87
      %s91 = sphi 0, %s90
      %s107 = sphi 0, %s91
    $region4: #{net_forward.4} parent=1 // loop_header_branch
      %12 = sbr.rel (%p10) target = $region8
    $region5: #{net_forward.4} parent=1 // loop_body
      %s14 = ssub.s32 %s9, 1
      %s15 = ssub.s32 %s9, 2
      %s16 = sadd.s32 %s9, 1
      %s17 = ssub.s32 %s9, %s16
      %p18 = scmp.eq.s32.totalorder %s17, 0
      %s20 = sadd.s32 %s19, 1
      %s21 = scalar_select %p18, %s19, %s20
      %p24 = pneg %p18
      %p25 = scmp.eq.s32.totalorder %s9, 1
      %p26 = por %p24, %p25
      %p27 = scmp.ne.s32.totalorder %s19, %s22
      %p28 = scmp.eq.s32.totalorder %s9, 0
      %p29 = por %p27, %p28
      %p30 = scmp.ne.s32.totalorder %s19, %s22
      %p31 = scmp.eq.s32.totalorder %s14, 1
      %p32 = por %p30, %p31
      %p33 = scmp.ne.s32.totalorder %s22, %s23
      %p34 = scmp.eq.s32.totalorder %s14, 0
      %p35 = por %p33, %p34
      %p36 = scmp.ne.s32.totalorder %s22, %s23
      %p37 = scmp.eq.s32.totalorder %s15, 1
      %p38 = por %p36, %p37
      %p40 = scmp.ne.s32.totalorder %s23, %s39
      %p41 = scmp.eq.s32.totalorder %s15, 0
      %p42 = por %p40, %p41
      %s44 = sadd.s32 %s43, 1
      %p47 = scmp.eq.s32.totalorder %s9, 1
      %p48 = scmp.ne.s32.totalorder %s43, %s45
      %p49 = scmp.eq.s32.totalorder %s9, 0
      %p50 = por %p48, %p49
      %p51 = scmp.ne.s32.totalorder %s43, %s45
      %p52 = scmp.eq.s32.totalorder %s14, 1
      %p53 = por %p51, %p52
      %p54 = scmp.ne.s32.totalorder %s45, %s46
      %p55 = scmp.eq.s32.totalorder %s14, 0
      %p56 = por %p54, %p55
      %p57 = scmp.ne.s32.totalorder %s45, %s46
      %p58 = scmp.eq.s32.totalorder %s15, 1
      %p59 = por %p57, %p58
      %p61 = scmp.ne.s32.totalorder %s46, %s60
      %p62 = scmp.eq.s32.totalorder %s15, 0
      %p63 = por %p61, %p62
      %s65 = sadd.s32 %s64, 1
      %p68 = scmp.eq.s32.totalorder %s9, 1
      %p69 = scmp.ne.s32.totalorder %s64, %s66
      %p70 = scmp.eq.s32.totalorder %s9, 0
      %p71 = por %p69, %p70
      %p72 = scmp.ne.s32.totalorder %s64, %s66
      %p73 = scmp.eq.s32.totalorder %s14, 1
      %p74 = por %p72, %p73
      %p75 = scmp.ne.s32.totalorder %s66, %s67
      %p76 = scmp.eq.s32.totalorder %s14, 0
      %p77 = por %p75, %p76
      %p78 = scmp.ne.s32.totalorder %s66, %s67
      %p79 = scmp.eq.s32.totalorder %s15, 1
      %p80 = por %p78, %p79
      %p82 = scmp.ne.s32.totalorder %s67, %s81
      %p83 = scmp.eq.s32.totalorder %s15, 0
      %p84 = por %p82, %p83
      %s85 = ssub.s32 %s9, %s16
      %p86 = scmp.eq.s32.totalorder %s85, 0
      %s88 = sadd.s32 %s87, 1
      %s89 = scalar_select %p86, %s87, %s88
      %p92 = pneg %p86
      %p93 = scmp.eq.s32.totalorder %s9, 1
      %p94 = por %p92, %p93
      %p95 = scmp.ne.s32.totalorder %s87, %s90
      %p96 = scmp.eq.s32.totalorder %s9, 0
      %p97 = por %p95, %p96
      %p98 = scmp.ne.s32.totalorder %s87, %s90
      %p99 = scmp.eq.s32.totalorder %s14, 1
      %p100 = por %p98, %p99
      %p101 = scmp.ne.s32.totalorder %s90, %s91
      %p102 = scmp.eq.s32.totalorder %s14, 0
      %p103 = por %p101, %p102
      %p104 = scmp.ne.s32.totalorder %s90, %s91
      %p105 = scmp.eq.s32.totalorder %s15, 1
      %p106 = por %p104, %p105
      %p108 = scmp.ne.s32.totalorder %s91, %s107
      %p109 = scmp.eq.s32.totalorder %s15, 0
      %p110 = por %p108, %p109
      %p111 = scmp.le.s32.totalorder 1, %s9
      %p112 = scmp.lt.s32.totalorder %s9, 3
      %p113 = pnand %p111, %p112
      %p114 = pneg %p113
      // Predicated region
      $region9: #{net_forward.4} parent=5 // pred_check
        _
      $region10: #{net_forward.4} parent=5 // pred_check_branch
        %116 = sbr.rel (%p113) target = $region12
      $region11: #{net_forward.4} parent=5 // pred_region
        %s117 = ssub.s32 %s9, 1
        // Predicated region
        $region13: #{net_forward.4} parent=11 // pred_check
          %p118 = pneg %p56
        $region14: #{net_forward.4} parent=11 // pred_check_branch
          %120 = sbr.rel (%p118) target = $region16
        $region15: #{net_forward.4} parent=11 // pred_region
          _
        $region16: #{net_forward.4} parent=11 // pred_fallthru
          _
        // Predicated region
        $region17: #{net_forward.4} parent=11 // pred_check
          %p121 = pneg %p77
        $region18: #{net_forward.4} parent=11 // pred_check_branch
          %123 = sbr.rel (%p121) target = $region20
        $region19: #{net_forward.4} parent=11 // pred_region
          _
        $region20: #{net_forward.4} parent=11 // pred_fallthru
          _
      $region12: #{net_forward.4} parent=5 // pred_fallthru
        _
      %p124 = scmp.lt.s32.totalorder %s9, 2
      // Predicated region
      $region21: #{net_forward.4} parent=5 // pred_check
        %p125 = pneg %p124
      $region22: #{net_forward.4} parent=5 // pred_check_branch
        %127 = sbr.rel (%p125) target = $region24
      $region23: #{net_forward.4} parent=5 // pred_region
        // Predicated region
        $region25: #{net_forward.4} parent=23 // pred_check
          %p128 = pneg %p29
        $region26: #{net_forward.4} parent=23 // pred_check_branch
          %130 = sbr.rel (%p128) target = $region28
        $region27: #{net_forward.4} parent=23 // pred_region
          %s131 = sand.u32 %s19, 1
          %s132 = sand.u32 %s19, 1
          %s133 = smul.addr %s132, 128
          %s134 = scalar_lea.vmem [#allocation2], %s133
          %s135 = smul.u32 4, %s9
          %s136 = smul.addr %s135, 2
          %s137 = smul.addr %s136, 4
          %s138 = scalar_lea.vmem %s0, %s137
          // Predicated region
          $region29: #{net_forward.4} parent=27 // pred_check
            _
          $region30: #{net_forward.4} parent=27 // pred_check_branch
            %140 = sbr.rel (0) target = $region32
          $region31: #{net_forward.4} parent=27 // pred_region
            // Predicated region
            $region33: #{net_forward.4} parent=31 // pred_check
              _
            $region34: #{net_forward.4} parent=31 // pred_check_branch
              %142 = sbr.rel (0) target = $region36
            $region35: #{net_forward.4} parent=31 // pred_region
              // Predicated region
              $region48: #{net_forward.4} parent=35 // pred_check
                _
              $region49: #{net_forward.4} parent=35 // pred_check_branch
                %188 = sbr.rel (0) target = $region51
              $region50: #{net_forward.4} parent=35 // pred_region
                loop: start=0, step=1, limit=1
                $region52: #{net_forward.4} parent=50 // loop_pre_header
                  _
                $region53: #{net_forward.4} parent=50 // loop_header
                  %s190 = sphi 0, %s194
                  %p191 = scmp.ge.s32.totalorder %s190, 1
                  %s195 = sphi %s138, %s138
                  %s196 = sphi %s134, %s134
                $region54: #{net_forward.4} parent=50 // loop_header_branch
                  %193 = sbr.rel (%p191) target = $region58
                $region55: #{net_forward.4} parent=50 // loop_body
                  %v197 = vld [vmem:[%s195] sm:$0xff]
                  %198 = vst [vmem:[%s196] sm:$0xff] %v197
                  %v199 = vld [vmem:[%s195 + $0x8] sm:$0xff]
                  %200 = vst [vmem:[%s196 + $0x8] sm:$0xff] %v199
                  %v201 = vld [vmem:[%s195 + $0x10] sm:$0xff]
                  %202 = vst [vmem:[%s196 + $0x10] sm:$0xff] %v201
                  %v203 = vld [vmem:[%s195 + $0x18] sm:$0xff]
                  %204 = vst [vmem:[%s196 + $0x18] sm:$0xff] %v203
                  %v205 = vld [vmem:[%s195 + $0x40] sm:$0xff]
                  %206 = vst [vmem:[%s196 + $0x20] sm:$0xff] %v205
                  %v207 = vld [vmem:[%s195 + $0x48] sm:$0xff]
                  %208 = vst [vmem:[%s196 + $0x28] sm:$0xff] %v207
                  %v209 = vld [vmem:[%s195 + $0x50] sm:$0xff]
                  %210 = vst [vmem:[%s196 + $0x30] sm:$0xff] %v209
                  %v211 = vld [vmem:[%s195 + $0x58] sm:$0xff]
                  %212 = vst [vmem:[%s196 + $0x38] sm:$0xff] %v211
                  %v213 = vld [vmem:[%s195 + $0x80] sm:$0xff]
                  %214 = vst [vmem:[%s196 + $0x40] sm:$0xff] %v213
                  %v215 = vld [vmem:[%s195 + $0x88] sm:$0xff]
                  %216 = vst [vmem:[%s196 + $0x48] sm:$0xff] %v215
                  %v217 = vld [vmem:[%s195 + $0x90] sm:$0xff]
                  %218 = vst [vmem:[%s196 + $0x50] sm:$0xff] %v217
                  %v219 = vld [vmem:[%s195 + $0x98] sm:$0xff]
                  %220 = vst [vmem:[%s196 + $0x58] sm:$0xff] %v219
                  %v221 = vld [vmem:[%s195 + $0xc0] sm:$0xff]
                  %222 = vst [vmem:[%s196 + $0x60] sm:$0xff] %v221
                  %v223 = vld [vmem:[%s195 + $0xc8] sm:$0xff]
                  %224 = vst [vmem:[%s196 + $0x68] sm:$0xff] %v223
                  %v225 = vld [vmem:[%s195 + $0xd0] sm:$0xff]
                  %226 = vst [vmem:[%s196 + $0x70] sm:$0xff] %v225
                  %v227 = vld [vmem:[%s195 + $0xd8] sm:$0xff]
                  %228 = vst [vmem:[%s196 + $0x78] sm:$0xff] %v227
                $region56: #{net_forward.4} parent=50 // loop_footer
                  %s194 = sadd.s32 1, %s190
                $region57: #{net_forward.4} parent=50 // loop_footer_branch
                  %189 = sbr.rel target = $region53
                $region58: #{net_forward.4} parent=50 // loop_exit
                  _
              $region51: #{net_forward.4} parent=35 // pred_fallthru
                _
              // Predicated region
              $region59: #{net_forward.4} parent=35 // pred_check
                _
              $region60: #{net_forward.4} parent=35 // pred_check_branch
                %230 = sbr.rel target = $region62
              $region61: #{net_forward.4} parent=35 // pred_region
                _
              $region62: #{net_forward.4} parent=35 // pred_fallthru
                _
            $region36: #{net_forward.4} parent=31 // pred_fallthru
              _
            // Predicated region
            $region37: #{net_forward.4} parent=31 // pred_check
              _
            $region38: #{net_forward.4} parent=31 // pred_check_branch
              %144 = sbr.rel target = $region40
            $region39: #{net_forward.4} parent=31 // pred_region
              %s146 = ssub.s32 256, 1
              loop: start=0, step=1, limit=1
              $region41: #{net_forward.4} parent=39 // loop_pre_header
                _
              $region42: #{net_forward.4} parent=39 // loop_header
                %s148 = sphi 0, %s152
                %p149 = scmp.ge.s32.totalorder %s148, 1
                %s153 = sphi %s138, %s138
                %s154 = sphi %s134, %s134
              $region43: #{net_forward.4} parent=39 // loop_header_branch
                %151 = sbr.rel (%p149) target = $region47
              $region44: #{net_forward.4} parent=39 // loop_body
                %v155 = vld [vmem:[%s153] sm:%s146]
                %156 = vst [vmem:[%s154] sm:%s146] %v155
                %v157 = vld [vmem:[%s153 + $0x8] sm:%s146]
                %158 = vst [vmem:[%s154 + $0x8] sm:%s146] %v157
                %v159 = vld [vmem:[%s153 + $0x10] sm:%s146]
                %160 = vst [vmem:[%s154 + $0x10] sm:%s146] %v159
                %v161 = vld [vmem:[%s153 + $0x18] sm:%s146]
                %162 = vst [vmem:[%s154 + $0x18] sm:%s146] %v161
                %v163 = vld [vmem:[%s153 + $0x40] sm:%s146]
                %164 = vst [vmem:[%s154 + $0x20] sm:%s146] %v163
                %v165 = vld [vmem:[%s153 + $0x48] sm:%s146]
                %166 = vst [vmem:[%s154 + $0x28] sm:%s146] %v165
                %v167 = vld [vmem:[%s153 + $0x50] sm:%s146]
                %168 = vst [vmem:[%s154 + $0x30] sm:%s146] %v167
                %v169 = vld [vmem:[%s153 + $0x58] sm:%s146]
                %170 = vst [vmem:[%s154 + $0x38] sm:%s146] %v169
                %v171 = vld [vmem:[%s153 + $0x80] sm:%s146]
                %172 = vst [vmem:[%s154 + $0x40] sm:%s146] %v171
                %v173 = vld [vmem:[%s153 + $0x88] sm:%s146]
                %174 = vst [vmem:[%s154 + $0x48] sm:%s146] %v173
                %v175 = vld [vmem:[%s153 + $0x90] sm:%s146]
                %176 = vst [vmem:[%s154 + $0x50] sm:%s146] %v175
                %v177 = vld [vmem:[%s153 + $0x98] sm:%s146]
                %178 = vst [vmem:[%s154 + $0x58] sm:%s146] %v177
                %v179 = vld [vmem:[%s153 + $0xc0] sm:%s146]
                %180 = vst [vmem:[%s154 + $0x60] sm:%s146] %v179
                %v181 = vld [vmem:[%s153 + $0xc8] sm:%s146]
                %182 = vst [vmem:[%s154 + $0x68] sm:%s146] %v181
                %v183 = vld [vmem:[%s153 + $0xd0] sm:%s146]
                %184 = vst [vmem:[%s154 + $0x70] sm:%s146] %v183
                %v185 = vld [vmem:[%s153 + $0xd8] sm:%s146]
                %186 = vst [vmem:[%s154 + $0x78] sm:%s146] %v185
              $region45: #{net_forward.4} parent=39 // loop_footer
                %s152 = sadd.s32 1, %s148
              $region46: #{net_forward.4} parent=39 // loop_footer_branch
                %147 = sbr.rel target = $region42
              $region47: #{net_forward.4} parent=39 // loop_exit
                _
            $region40: #{net_forward.4} parent=31 // pred_fallthru
              _
          $region32: #{net_forward.4} parent=27 // pred_fallthru
            _
          %231 = vnop
        $region28: #{net_forward.4} parent=23 // pred_fallthru
          _
      $region24: #{net_forward.4} parent=5 // pred_fallthru
        _
      %p232 = scmp.le.s32.totalorder 1, %s9
      %p233 = scmp.lt.s32.totalorder %s9, 3
      %p234 = pnand %p232, %p233
      %p235 = pneg %p234
      // Predicated region
      $region63: #{net_forward.4} parent=5 // pred_check
        _
      $region64: #{net_forward.4} parent=5 // pred_check_branch
        %237 = sbr.rel (%p234) target = $region66
      $region65: #{net_forward.4} parent=5 // pred_region
        %s238 = ssub.s32 %s9, 1
        %s239 = sand.u32 %s22, 1
        %s240 = sand.u32 %s22, 1
        %s241 = smul.addr %s240, 128
        %s242 = scalar_lea.vmem [#allocation2], %s241
        // Predicated region
        $region67: #{net_forward.4} parent=65 // pred_check
          %p243 = pneg %p35
        $region68: #{net_forward.4} parent=65 // pred_check_branch
          %245 = sbr.rel (%p243) target = $region70
        $region69: #{net_forward.4} parent=65 // pred_region
          _
        $region70: #{net_forward.4} parent=65 // pred_fallthru
          _
        %s246 = sand.u32 %s22, 1
        %s247 = sand.u32 %s22, 1
        %s248 = smul.addr %s247, 128
        %s249 = scalar_lea.vmem [#allocation2], %s248
        %p250 = pneg %p35
        %p251 = pneg %p32
        %p252 = pneg %p56
        %p253 = pneg %p53
        %p254 = pneg %p77
        %p255 = pneg %p74
        %p256 = pneg %p103
        %p257 = pneg %p100
        %s258 = smul.u32 4, %s14
        %p259 = scmp.lt.s32.totalorder %s258, 7
        %s260 = scalar_select %p259, %s258, 7
        %s261 = smul.addr %s260, 4
        %s262 = scalar_lea.vmem %s3, %s261
        %s263 = smul.u32 4, %s14
        %s264 = smul.u32 4, %s14
        %p265 = scmp.lt.s32.totalorder %s264, 7
        %s266 = scalar_select %p265, %s264, 7
        %s267 = smul.addr %s266, 4
        %s268 = scalar_lea.vmem %s3, %s267
        %s269 = smul.u32 4, %s14
        %v271 = vld [vmem:[%s1] sm:$0xf]
        %v272 = vld [vmem:[%s1 + $0x4] sm:$0xf]
        %v273 = vld [vmem:[%s1 + $0x8] sm:$0xf]
        %v274 = vld [vmem:[%s1 + $0xc] sm:$0xf]
        %v275 = vld [vmem:[%s1 + $0x10] sm:$0xf]
        %v276 = vld [vmem:[%s1 + $0x14] sm:$0xf]
        %v277 = vld [vmem:[%s1 + $0x18] sm:$0xf]
        %v278 = vld [vmem:[%s1 + $0x1c] sm:$0xf]
        %v279 = vld [vmem:[%s1 + $0x20] sm:$0xf]
        %v280 = vld [vmem:[%s1 + $0x24] sm:$0xf]
        %v281 = vld [vmem:[%s1 + $0x28] sm:$0xf]
        %v282 = vld [vmem:[%s1 + $0x2c] sm:$0xf]
        %v283 = vld [vmem:[%s1 + $0x30] sm:$0xf]
        %v284 = vld [vmem:[%s1 + $0x34] sm:$0xf]
        %v285 = vld [vmem:[%s1 + $0x38] sm:$0xf]
        %v286 = vld [vmem:[%s1 + $0x3c] sm:$0xf]
        %v287 = vld [vmem:[%s1 + $0x40] sm:$0xf]
        %v288 = vld [vmem:[%s1 + $0x44] sm:$0xf]
        %v289 = vld [vmem:[%s1 + $0x48] sm:$0xf]
        %v290 = vld [vmem:[%s1 + $0x4c] sm:$0xf]
        %v291 = vld [vmem:[%s242] sm:$0xff]
        %v292 = vld [vmem:[%s242 + $0x8] sm:$0xff]
        %v293 = vld [vmem:[%s242 + $0x10] sm:$0xff]
        %v294 = vld [vmem:[%s242 + $0x18] sm:$0xff]
        %v299 = vunpack.c.l.b16 %v291
        %v300 = vunpack.c.h.b16 %v291
        %v301 = vunpack.c.l.b16 %v292
        %v302 = vunpack.c.h.b16 %v292
        %v303 = vunpack.c.l.b16 %v293
        %v304 = vunpack.c.h.b16 %v293
        %v305 = vunpack.c.l.b16 %v294
        %v306 = vunpack.c.h.b16 %v294
        %v307 = vpack.c.b16 %v301, %v299
        %v308 = vpack.c.b16 %v302, %v300
        %v309 = vpack.c.b16 %v305, %v303
        %v310 = vpack.c.b16 %v306, %v304
        %v333 = vunpack.c.l.b16 %v271
        %v334 = vunpack.c.l.b16 %v272
        %v335 = vunpack.c.l.b16 %v273
        %v336 = vunpack.c.l.b16 %v274
        %v337 = vunpack.c.l.b16 %v275
        %v338 = vunpack.c.l.b16 %v276
        %v339 = vunpack.c.l.b16 %v277
        %v340 = vunpack.c.l.b16 %v278
        %v341 = vunpack.c.l.b16 %v279
        %v342 = vunpack.c.l.b16 %v280
        %v343 = vunpack.c.l.b16 %v281
        %v344 = vunpack.c.l.b16 %v282
        %v345 = vunpack.c.l.b16 %v283
        %v346 = vunpack.c.l.b16 %v284
        %v347 = vunpack.c.l.b16 %v285
        %v348 = vunpack.c.l.b16 %v286
        %v349 = vunpack.c.l.b16 %v287
        %v350 = vunpack.c.l.b16 %v288
        %v351 = vunpack.c.l.b16 %v289
        %v352 = vunpack.c.l.b16 %v290
        %v353 = vpack.c.b16 %v334, %v333
        %v354 = vpack.c.b16 %v336, %v335
        %v355 = vpack.c.b16 %v338, %v337
        %v356 = vpack.c.b16 %v340, %v339
        %v357 = vpack.c.b16 %v342, %v341
        %v358 = vpack.c.b16 %v344, %v343
        %v359 = vpack.c.b16 %v346, %v345
        %v360 = vpack.c.b16 %v348, %v347
        %v361 = vpack.c.b16 %v350, %v349
        %v362 = vpack.c.b16 %v352, %v351
        %vm373 = vcmask 261120
        %v375 = vsel %vm373, %v308, 0
        %v378 = vsel %vm373, %v310, 0
        %380 = vmatprep.subr.bf16.mxu0 0
        %381 = vmatpush1.bf16.msra.mxu0 %v360
        %382 = vmatprep.subr.bf16.mxu0 0
        %383 = vmatpush1.bf16.msra.mxu0 %v359
        %384 = vmatprep.subr.bf16.mxu0 0
        %385 = vmatpush1.bf16.msra.mxu0 %v358
        %386 = vmatprep.subr.bf16.mxu0 0
        %387 = vmatpush1.bf16.msra.mxu0 %v357
        %388 = vmatprep.subr.bf16.mxu0 0
        %389 = vmatpush1.bf16.msra.mxu0 %v356
        %390 = vmatprep.subr.bf16.mxu0 0
        %391 = vmatpush1.bf16.msra.mxu0 %v355
        %392 = vmatprep.subr.bf16.mxu0 0
        %393 = vmatpush1.bf16.msra.mxu0 %v354
        %394 = vmatprep.subr.bf16.mxu0 0
        %395 = vmatpush1.bf16.msra.mxu0 %v353
        %396 = vmatprep.subr.bf16.mxu0 0
        %397 = vmatpush2.bf16.msra.mxu0 0
        %398 = vmatprep.subr.bf16.mxu0 0
        %399 = vmatpush2.bf16.msra.mxu0 0
        %400 = vmatprep.subr.bf16.mxu0 0
        %401 = vmatpush2.bf16.msra.mxu0 0
        %402 = vmatprep.subr.bf16.mxu0 0
        %403 = vmatpush2.bf16.msra.mxu0 0
        %404 = vmatprep.subr.bf16.mxu0 0
        %405 = vmatpush2.bf16.msra.mxu0 0
        %406 = vmatprep.subr.bf16.mxu0 0
        %407 = vmatpush2.bf16.msra.mxu0 0
        %408 = vmatprep.subr.bf16.mxu0 0
        %409 = vmatpush2.bf16.msra.mxu0 %v362
        %410 = vmatprep.subr.bf16.mxu0 0
        %411 = vmatpush2.bf16.msra.mxu0 %v361
        %412 = vmatprep.mubr.bf16.mxu0 %v375
        %413 = vmatmul.mubr.bf16.gmra.mxu0 %v307
        %v414 = vpop.f32.mrf.mxu0
        %v415 = vadd.f32 0.0, %v414
        %v416 = vpop.f32.mrf.mxu0
        %v417 = vpop.f32.mrf.mxu0
        %v418 = vadd.f32 0.0, %v417
        %v419 = vpop.f32.mrf.mxu0
        %420 = vmatprep.mubr.bf16.mxu0 %v378
        %421 = vmatmul.mubr.bf16.gmra.mxu0 %v309
        %v422 = vpop.f32.mrf.mxu0
        %v423 = vadd.f32 0.0, %v422
        %v424 = vpop.f32.mrf.mxu0
        %v425 = vpop.f32.mrf.mxu0
        %v426 = vadd.f32 0.0, %v425
        %v427 = vpop.f32.mrf.mxu0
        %428 = vdwg.mxu0
        %s429 = scalar_lea.vmem %s242, 32 [#allocation2]
        %v430 = vld [vmem:[%s429] sm:$0xff]
        %v431 = vld [vmem:[%s429 + $0x8] sm:$0xff]
        %v432 = vld [vmem:[%s429 + $0x10] sm:$0xff]
        %v433 = vld [vmem:[%s429 + $0x18] sm:$0xff]
        %v438 = vunpack.c.l.b16 %v430
        %v439 = vunpack.c.h.b16 %v430
        %v440 = vunpack.c.l.b16 %v431
        %v441 = vunpack.c.h.b16 %v431
        %v442 = vunpack.c.l.b16 %v432
        %v443 = vunpack.c.h.b16 %v432
        %v444 = vunpack.c.l.b16 %v433
        %v445 = vunpack.c.h.b16 %v433
        %v446 = vpack.c.b16 %v440, %v438
        %v447 = vpack.c.b16 %v441, %v439
        %v448 = vpack.c.b16 %v444, %v442
        %v449 = vpack.c.b16 %v445, %v443
        %v453 = vsel %vm373, %v447, 0
        %v456 = vsel %vm373, %v449, 0
        %458 = vmatprep.subr.bf16.mxu0 0
        %459 = vmatpush1.bf16.msra.mxu0 %v360
        %460 = vmatprep.subr.bf16.mxu0 0
        %461 = vmatpush1.bf16.msra.mxu0 %v359
        %462 = vmatprep.subr.bf16.mxu0 0
        %463 = vmatpush1.bf16.msra.mxu0 %v358
        %464 = vmatprep.subr.bf16.mxu0 0
        %465 = vmatpush1.bf16.msra.mxu0 %v357
        %466 = vmatprep.subr.bf16.mxu0 0
        %467 = vmatpush1.bf16.msra.mxu0 %v356
        %468 = vmatprep.subr.bf16.mxu0 0
        %469 = vmatpush1.bf16.msra.mxu0 %v355
        %470 = vmatprep.subr.bf16.mxu0 0
        %471 = vmatpush1.bf16.msra.mxu0 %v354
        %472 = vmatprep.subr.bf16.mxu0 0
        %473 = vmatpush1.bf16.msra.mxu0 %v353
        %474 = vmatprep.subr.bf16.mxu0 0
        %475 = vmatpush2.bf16.msra.mxu0 0
        %476 = vmatprep.subr.bf16.mxu0 0
        %477 = vmatpush2.bf16.msra.mxu0 0
        %478 = vmatprep.subr.bf16.mxu0 0
        %479 = vmatpush2.bf16.msra.mxu0 0
        %480 = vmatprep.subr.bf16.mxu0 0
        %481 = vmatpush2.bf16.msra.mxu0 0
        %482 = vmatprep.subr.bf16.mxu0 0
        %483 = vmatpush2.bf16.msra.mxu0 0
        %484 = vmatprep.subr.bf16.mxu0 0
        %485 = vmatpush2.bf16.msra.mxu0 0
        %486 = vmatprep.subr.bf16.mxu0 0
        %487 = vmatpush2.bf16.msra.mxu0 %v362
        %488 = vmatprep.subr.bf16.mxu0 0
        %489 = vmatpush2.bf16.msra.mxu0 %v361
        %490 = vmatprep.mubr.bf16.mxu0 %v453
        %491 = vmatmul.mubr.bf16.gmra.mxu0 %v446
        %v492 = vpop.f32.mrf.mxu0
        %v493 = vadd.f32 0.0, %v492
        %v494 = vpop.f32.mrf.mxu0
        %v495 = vpop.f32.mrf.mxu0
        %v496 = vadd.f32 0.0, %v495
        %v497 = vpop.f32.mrf.mxu0
        %498 = vmatprep.mubr.bf16.mxu0 %v456
        %499 = vmatmul.mubr.bf16.gmra.mxu0 %v448
        %v500 = vpop.f32.mrf.mxu0
        %v501 = vadd.f32 0.0, %v500
        %v502 = vpop.f32.mrf.mxu0
        %v503 = vpop.f32.mrf.mxu0
        %v504 = vadd.f32 0.0, %v503
        %v505 = vpop.f32.mrf.mxu0
        %506 = vdwg.mxu0
        %v507 = vmax.f32 %v415, %v493
        %v508 = vmax.f32 %v418, %v496
        %v509 = vmax.f32 %v423, %v501
        %v510 = vmax.f32 %v426, %v504
        %s511 = scalar_lea.vmem %s242, 64 [#allocation2]
        %v512 = vld [vmem:[%s511] sm:$0xff]
        %v513 = vld [vmem:[%s511 + $0x8] sm:$0xff]
        %v514 = vld [vmem:[%s511 + $0x10] sm:$0xff]
        %v515 = vld [vmem:[%s511 + $0x18] sm:$0xff]
        %v520 = vunpack.c.l.b16 %v512
        %v521 = vunpack.c.h.b16 %v512
        %v522 = vunpack.c.l.b16 %v513
        %v523 = vunpack.c.h.b16 %v513
        %v524 = vunpack.c.l.b16 %v514
        %v525 = vunpack.c.h.b16 %v514
        %v526 = vunpack.c.l.b16 %v515
        %v527 = vunpack.c.h.b16 %v515
        %v528 = vpack.c.b16 %v522, %v520
        %v529 = vpack.c.b16 %v523, %v521
        %v530 = vpack.c.b16 %v526, %v524
        %v531 = vpack.c.b16 %v527, %v525
        %v535 = vsel %vm373, %v529, 0
        %v538 = vsel %vm373, %v531, 0
        %540 = vmatprep.subr.bf16.mxu0 0
        %541 = vmatpush1.bf16.msra.mxu0 %v360
        %542 = vmatprep.subr.bf16.mxu0 0
        %543 = vmatpush1.bf16.msra.mxu0 %v359
        %544 = vmatprep.subr.bf16.mxu0 0
        %545 = vmatpush1.bf16.msra.mxu0 %v358
        %546 = vmatprep.subr.bf16.mxu0 0
        %547 = vmatpush1.bf16.msra.mxu0 %v357
        %548 = vmatprep.subr.bf16.mxu0 0
        %549 = vmatpush1.bf16.msra.mxu0 %v356
        %550 = vmatprep.subr.bf16.mxu0 0
        %551 = vmatpush1.bf16.msra.mxu0 %v355
        %552 = vmatprep.subr.bf16.mxu0 0
        %553 = vmatpush1.bf16.msra.mxu0 %v354
        %554 = vmatprep.subr.bf16.mxu0 0
        %555 = vmatpush1.bf16.msra.mxu0 %v353
        %556 = vmatprep.subr.bf16.mxu0 0
        %557 = vmatpush2.bf16.msra.mxu0 0
        %558 = vmatprep.subr.bf16.mxu0 0
        %559 = vmatpush2.bf16.msra.mxu0 0
        %560 = vmatprep.subr.bf16.mxu0 0
        %561 = vmatpush2.bf16.msra.mxu0 0
        %562 = vmatprep.subr.bf16.mxu0 0
        %563 = vmatpush2.bf16.msra.mxu0 0
        %564 = vmatprep.subr.bf16.mxu0 0
        %565 = vmatpush2.bf16.msra.mxu0 0
        %566 = vmatprep.subr.bf16.mxu0 0
        %567 = vmatpush2.bf16.msra.mxu0 0
        %568 = vmatprep.subr.bf16.mxu0 0
        %569 = vmatpush2.bf16.msra.mxu0 %v362
        %570 = vmatprep.subr.bf16.mxu0 0
        %571 = vmatpush2.bf16.msra.mxu0 %v361
        %572 = vmatprep.mubr.bf16.mxu0 %v535
        %573 = vmatmul.mubr.bf16.gmra.mxu0 %v528
        %v574 = vpop.f32.mrf.mxu0
        %v575 = vadd.f32 0.0, %v574
        %v576 = vpop.f32.mrf.mxu0
        %v577 = vpop.f32.mrf.mxu0
        %v578 = vadd.f32 0.0, %v577
        %v579 = vpop.f32.mrf.mxu0
        %580 = vmatprep.mubr.bf16.mxu0 %v538
        %581 = vmatmul.mubr.bf16.gmra.mxu0 %v530
        %v582 = vpop.f32.mrf.mxu0
        %v583 = vadd.f32 0.0, %v582
        %v584 = vpop.f32.mrf.mxu0
        %v585 = vpop.f32.mrf.mxu0
        %v586 = vadd.f32 0.0, %v585
        %v587 = vpop.f32.mrf.mxu0
        %588 = vdwg.mxu0
        %v589 = vmax.f32 %v507, %v575
        %v590 = vmax.f32 %v508, %v578
        %v591 = vmax.f32 %v509, %v583
        %v592 = vmax.f32 %v510, %v586
        %s593 = scalar_lea.vmem %s242, 96 [#allocation2]
        %v594 = vld [vmem:[%s593] sm:$0xff]
        %v595 = vld [vmem:[%s593 + $0x8] sm:$0xff]
        %v596 = vld [vmem:[%s593 + $0x10] sm:$0xff]
        %v597 = vld [vmem:[%s593 + $0x18] sm:$0xff]
        %v602 = vunpack.c.l.b16 %v594
        %v603 = vunpack.c.h.b16 %v594
        %v604 = vunpack.c.l.b16 %v595
        %v605 = vunpack.c.h.b16 %v595
        %v606 = vunpack.c.l.b16 %v596
        %v607 = vunpack.c.h.b16 %v596
        %v608 = vunpack.c.l.b16 %v597
        %v609 = vunpack.c.h.b16 %v597
        %v610 = vpack.c.b16 %v604, %v602
        %v611 = vpack.c.b16 %v605, %v603
        %v612 = vpack.c.b16 %v608, %v606
        %v613 = vpack.c.b16 %v609, %v607
        %v617 = vsel %vm373, %v611, 0
        %v620 = vsel %vm373, %v613, 0
        %622 = vmatprep.subr.bf16.mxu0 0
        %623 = vmatpush1.bf16.msra.mxu0 %v360
        %624 = vmatprep.subr.bf16.mxu0 0
        %625 = vmatpush1.bf16.msra.mxu0 %v359
        %626 = vmatprep.subr.bf16.mxu0 0
        %627 = vmatpush1.bf16.msra.mxu0 %v358
        %628 = vmatprep.subr.bf16.mxu0 0
        %629 = vmatpush1.bf16.msra.mxu0 %v357
        %630 = vmatprep.subr.bf16.mxu0 0
        %631 = vmatpush1.bf16.msra.mxu0 %v356
        %632 = vmatprep.subr.bf16.mxu0 0
        %633 = vmatpush1.bf16.msra.mxu0 %v355
        %634 = vmatprep.subr.bf16.mxu0 0
        %635 = vmatpush1.bf16.msra.mxu0 %v354
        %636 = vmatprep.subr.bf16.mxu0 0
        %637 = vmatpush1.bf16.msra.mxu0 %v353
        %638 = vmatprep.subr.bf16.mxu0 0
        %639 = vmatpush2.bf16.msra.mxu0 0
        %640 = vmatprep.subr.bf16.mxu0 0
        %641 = vmatpush2.bf16.msra.mxu0 0
        %642 = vmatprep.subr.bf16.mxu0 0
        %643 = vmatpush2.bf16.msra.mxu0 0
        %644 = vmatprep.subr.bf16.mxu0 0
        %645 = vmatpush2.bf16.msra.mxu0 0
        %646 = vmatprep.subr.bf16.mxu0 0
        %647 = vmatpush2.bf16.msra.mxu0 0
        %648 = vmatprep.subr.bf16.mxu0 0
        %649 = vmatpush2.bf16.msra.mxu0 0
        %650 = vmatprep.subr.bf16.mxu0 0
        %651 = vmatpush2.bf16.msra.mxu0 %v362
        %652 = vmatprep.subr.bf16.mxu0 0
        %653 = vmatpush2.bf16.msra.mxu0 %v361
        %654 = vmatprep.mubr.bf16.mxu0 %v617
        %655 = vmatmul.mubr.bf16.gmra.mxu0 %v610
        %v656 = vpop.f32.mrf.mxu0
        %v657 = vadd.f32 0.0, %v656
        %v658 = vpop.f32.mrf.mxu0
        %v659 = vpop.f32.mrf.mxu0
        %v660 = vadd.f32 0.0, %v659
        %v661 = vpop.f32.mrf.mxu0
        %662 = vmatprep.mubr.bf16.mxu0 %v620
        %663 = vmatmul.mubr.bf16.gmra.mxu0 %v612
        %v664 = vpop.f32.mrf.mxu0
        %v665 = vadd.f32 0.0, %v664
        %v666 = vpop.f32.mrf.mxu0
        %v667 = vpop.f32.mrf.mxu0
        %v668 = vadd.f32 0.0, %v667
        %v669 = vpop.f32.mrf.mxu0
        %670 = vdwg.mxu0
        %v671 = vmax.f32 %v589, %v657
        %v672 = vmax.f32 %v590, %v660
        %v673 = vmax.f32 %v591, %v665
        %v674 = vmax.f32 %v592, %v668
        %v675 = vld [vmem:[%s2] sm:$0x1]
        %v677 = vlaneseq
        %v678 = vshrl.u32 %v677, 7
        %v679 = vsub.s32 0, %v678
        %v680 = vrot.slane %v675, %v679
        %v682 = vadd.f32 %v671, %v680
        %v683 = vadd.f32 %v672, %v680
        %v684 = vadd.f32 %v673, %v680
        %v685 = vadd.f32 %v674, %v680
        %v686 = vmax.f32 %v682, 0.0
        %v687 = vmax.f32 %v683, 0.0
        %v688 = vmax.f32 %v684, 0.0
        %v689 = vmax.f32 %v685, 0.0
        %v690 = vpack.c.bf16 %v687, %v686
        %v691 = vpack.c.bf16 %v689, %v688
        %v694 = vunpack.c.l.b16 %v690
        %v695 = vunpack.c.h.b16 %v690
        %v696 = vunpack.c.l.b16 %v691
        %v697 = vunpack.c.h.b16 %v691
        %v698 = vpack.c.b16 %v694, %v694
        %v699 = vpack.c.b16 %v695, %v695
        %v700 = vpack.c.b16 %v696, %v696
        %v701 = vpack.c.b16 %v697, %v697
        %706 = vst [vmem:[%s268] sm:$0xf] %v698
        %707 = vst [vmem:[%s268 + $0x4] sm:$0xf] %v699
        %708 = vst [vmem:[%s268 + $0x8] sm:$0xf] %v700
        %709 = vst [vmem:[%s268 + $0xc] sm:$0xf] %v701
        %s710 = smul.u32 4, %s14
        %p711 = scmp.lt.s32.totalorder %s710, 7
        %s712 = scalar_select %p711, %s710, 7
        %s713 = smul.addr %s712, 4
        %s714 = scalar_lea.vmem %s3, %s713
        // Predicated region
        $region71: #{net_forward.4} parent=65 // pred_check
          %p715 = pneg %p100
        $region72: #{net_forward.4} parent=65 // pred_check_branch
          %717 = sbr.rel (%p715) target = $region74
        $region73: #{net_forward.4} parent=65 // pred_region
          %s718 = smul.u32 4, %s14
        $region74: #{net_forward.4} parent=65 // pred_fallthru
          _
      $region66: #{net_forward.4} parent=5 // pred_fallthru
        _
      %p719 = scmp.le.s32.totalorder 2, %s9
      // Predicated region
      $region75: #{net_forward.4} parent=5 // pred_check
        %p720 = pneg %p719
      $region76: #{net_forward.4} parent=5 // pred_check_branch
        %722 = sbr.rel (%p720) target = $region78
      $region77: #{net_forward.4} parent=5 // pred_region
        %s723 = ssub.s32 %s9, 2
        // Predicated region
        $region79: #{net_forward.4} parent=77 // pred_check
          %p724 = pneg %p106
        $region80: #{net_forward.4} parent=77 // pred_check_branch
          %726 = sbr.rel (%p724) target = $region82
        $region81: #{net_forward.4} parent=77 // pred_region
          %s727 = smul.u32 4, %s15
          %p728 = scmp.lt.s32.totalorder %s727, 7
          %s729 = scalar_select %p728, %s727, 7
          %s730 = smul.addr %s729, 4
          %s731 = scalar_lea.vmem %s3, %s730
        $region82: #{net_forward.4} parent=77 // pred_fallthru
          _
      $region78: #{net_forward.4} parent=5 // pred_fallthru
        _
    $region6: #{net_forward.4} parent=1 // loop_footer
      %s13 = sadd.s32 1, %s9
    $region7: #{net_forward.4} parent=1 // loop_footer_branch
      %8 = sbr.rel target = $region3
    $region8: #{net_forward.4} parent=1 // loop_exit
      _

// kernel: net_forward.5
$region0: #{net_forward.5}
  #allocation0 [shape = 'u32[]', space=smem, size = 0x4, offset = 0x4, fixed_abs, tag = 'smem constant byte address 0x4 - core index']
  #allocation1 [shape = 'u32[144,128]{1,0:T(1,128)}', space=vmem, size = 0x12000, scoped, tag = 'internal scratch']
  %s0 = inlined_call_operand.vmem [shape: bf16[16,3200], index: 0, kind: input, shape index: {}]
  %s1 = inlined_call_operand.vmem [shape: bf16[3200,128], index: 1, kind: input, shape index: {}]
  %s2 = inlined_call_operand.vmem [shape: f32[1,128], index: 2, kind: input, shape index: {}]
  %s3 = inlined_call_operand.vmem [shape: bf16[128,128], index: 3, kind: input, shape index: {}]
  %s4 = inlined_call_operand.vmem [shape: f32[1,128], index: 4, kind: input, shape index: {}]
  %s5 = inlined_call_operand.vmem [shape: bf16[128,128], index: 5, kind: input, shape index: {}]
  %s6 = inlined_call_operand.vmem [shape: f32[1,128], index: 6, kind: input, shape index: {}]
  %s7 = inlined_call_operand.vmem [shape: f32[16,128], index: 7, kind: output, shape index: {}]
  %s8 = sld [smem:[#allocation0]]
  $region38: #{net_forward.5} parent=0
    _
  %s10 = ssub.s32 1, %s8
  %s11 = scalar_select 0, %s10, %s8
  // Predicated region
  $region2: #{net_forward.5} parent=0 // pred_check
    _
  $region3: #{net_forward.5} parent=0 // pred_check_branch
    %13 = sbr.rel (0) target = $region5
  $region4: #{net_forward.5} parent=0 // pred_region
    _
  $region5: #{net_forward.5} parent=0 // pred_fallthru
    _
  // Predicated region
  $region6: #{net_forward.5} parent=0 // pred_check
    _
  $region7: #{net_forward.5} parent=0 // pred_check_branch
    %15 = sbr.rel (0) target = $region9
  $region8: #{net_forward.5} parent=0 // pred_region
    _
  $region9: #{net_forward.5} parent=0 // pred_fallthru
    _
  // Predicated region
  $region10: #{net_forward.5} parent=0 // pred_check
    _
  $region11: #{net_forward.5} parent=0 // pred_check_branch
    %17 = sbr.rel (0) target = $region13
  $region12: #{net_forward.5} parent=0 // pred_region
    _
  $region13: #{net_forward.5} parent=0 // pred_fallthru
    _
  // Predicated region
  $region14: #{net_forward.5} parent=0 // pred_check
    _
  $region15: #{net_forward.5} parent=0 // pred_check_branch
    %19 = sbr.rel (0) target = $region17
  $region16: #{net_forward.5} parent=0 // pred_region
    _
  $region17: #{net_forward.5} parent=0 // pred_fallthru
    _
  // Predicated region
  $region18: #{net_forward.5} parent=0 // pred_check
    _
  $region19: #{net_forward.5} parent=0 // pred_check_branch
    %21 = sbr.rel (0) target = $region21
  $region20: #{net_forward.5} parent=0 // pred_region
    _
  $region21: #{net_forward.5} parent=0 // pred_fallthru
    _
  // Predicated region
  $region22: #{net_forward.5} parent=0 // pred_check
    _
  $region23: #{net_forward.5} parent=0 // pred_check_branch
    %23 = sbr.rel (0) target = $region25
  $region24: #{net_forward.5} parent=0 // pred_region
    _
  $region25: #{net_forward.5} parent=0 // pred_fallthru
    _
  // Predicated region
  $region26: #{net_forward.5} parent=0 // pred_check
    _
  $region27: #{net_forward.5} parent=0 // pred_check_branch
    %25 = sbr.rel (0) target = $region29
  $region28: #{net_forward.5} parent=0 // pred_region
    _
  $region29: #{net_forward.5} parent=0 // pred_fallthru
    _
  %v27 = vld [vmem:[%s0] sm:$0xff]
  %v28 = vld [vmem:[%s0 + $0x8] sm:$0xff]
  %v29 = vld [vmem:[%s0 + $0x10] sm:$0xff]
  %v30 = vld [vmem:[%s0 + $0x18] sm:$0xff]
  %v31 = vld [vmem:[%s0 + $0x20] sm:$0xff]
  %v32 = vld [vmem:[%s0 + $0x28] sm:$0xff]
  %v33 = vld [vmem:[%s0 + $0x30] sm:$0xff]
  %v34 = vld [vmem:[%s0 + $0x38] sm:$0xff]
  %v35 = vld [vmem:[%s0 + $0x40] sm:$0xff]
  %v36 = vld [vmem:[%s0 + $0x48] sm:$0xff]
  %v37 = vld [vmem:[%s0 + $0x50] sm:$0xff]
  %v38 = vld [vmem:[%s0 + $0x58] sm:$0xff]
  %v39 = vld [vmem:[%s0 + $0x60] sm:$0xf]
  %v40 = vld [vmem:[%s0 + $0x64] sm:$0xff]
  %v41 = vld [vmem:[%s0 + $0x6c] sm:$0xff]
  %v42 = vld [vmem:[%s0 + $0x74] sm:$0xff]
  %v43 = vld [vmem:[%s0 + $0x7c] sm:$0xff]
  %v44 = vld [vmem:[%s0 + $0x84] sm:$0xff]
  %v45 = vld [vmem:[%s0 + $0x8c] sm:$0xff]
  %v46 = vld [vmem:[%s0 + $0x94] sm:$0xff]
  %v47 = vld [vmem:[%s0 + $0x9c] sm:$0xff]
  %v48 = vld [vmem:[%s0 + $0xa4] sm:$0xff]
  %v49 = vld [vmem:[%s0 + $0xac] sm:$0xff]
  %v50 = vld [vmem:[%s0 + $0xb4] sm:$0xff]
  %v51 = vld [vmem:[%s0 + $0xbc] sm:$0xff]
  %v52 = vld [vmem:[%s0 + $0xc4] sm:$0xf]
  %v53 = vld [vmem:[%s1] sm:$0xf]
  %v54 = vld [vmem:[%s1 + $0x4] sm:$0xf]
  %v55 = vld [vmem:[%s1 + $0x8] sm:$0xf]
  %v56 = vld [vmem:[%s1 + $0xc] sm:$0xf]
  %v57 = vld [vmem:[%s1 + $0x10] sm:$0xf]
  %v58 = vld [vmem:[%s1 + $0x14] sm:$0xf]
  %v59 = vld [vmem:[%s1 + $0x18] sm:$0xf]
  %v60 = vld [vmem:[%s1 + $0x1c] sm:$0xf]
  %v61 = vld [vmem:[%s1 + $0x20] sm:$0xf]
  %v62 = vld [vmem:[%s1 + $0x24] sm:$0xf]
  %v63 = vld [vmem:[%s1 + $0x28] sm:$0xf]
  %v64 = vld [vmem:[%s1 + $0x2c] sm:$0xf]
  %v65 = vld [vmem:[%s1 + $0x30] sm:$0xf]
  %v66 = vld [vmem:[%s1 + $0x34] sm:$0xf]
  %v67 = vld [vmem:[%s1 + $0x38] sm:$0xf]
  %v68 = vld [vmem:[%s1 + $0x3c] sm:$0xf]
  %v69 = vld [vmem:[%s1 + $0x40] sm:$0xf]
  %v70 = vld [vmem:[%s1 + $0x44] sm:$0xf]
  %v71 = vld [vmem:[%s1 + $0x48] sm:$0xf]
  %v72 = vld [vmem:[%s1 + $0x4c] sm:$0xf]
  %v73 = vld [vmem:[%s1 + $0x50] sm:$0xf]
  %v74 = vld [vmem:[%s1 + $0x54] sm:$0xf]
  %v75 = vld [vmem:[%s1 + $0x58] sm:$0xf]
  %v76 = vld [vmem:[%s1 + $0x5c] sm:$0xf]
  %v77 = vld [vmem:[%s1 + $0x60] sm:$0xf]
  %v78 = vld [vmem:[%s1 + $0x64] sm:$0xf]
  %v79 = vld [vmem:[%s1 + $0x68] sm:$0xf]
  %v80 = vld [vmem:[%s1 + $0x6c] sm:$0xf]
  %v81 = vld [vmem:[%s1 + $0x70] sm:$0xf]
  %v82 = vld [vmem:[%s1 + $0x74] sm:$0xf]
  %v83 = vld [vmem:[%s1 + $0x78] sm:$0xf]
  %v84 = vld [vmem:[%s1 + $0x7c] sm:$0xf]
  %v85 = vld [vmem:[%s1 + $0x80] sm:$0xf]
  %v86 = vld [vmem:[%s1 + $0x84] sm:$0xf]
  %v87 = vld [vmem:[%s1 + $0x88] sm:$0xf]
  %v88 = vld [vmem:[%s1 + $0x8c] sm:$0xf]
  %v89 = vld [vmem:[%s1 + $0x90] sm:$0xf]
  %v90 = vld [vmem:[%s1 + $0x94] sm:$0xf]
  %v91 = vld [vmem:[%s1 + $0x98] sm:$0xf]
  %v92 = vld [vmem:[%s1 + $0x9c] sm:$0xf]
  %v93 = vld [vmem:[%s1 + $0xa0] sm:$0xf]
  %v94 = vld [vmem:[%s1 + $0xa4] sm:$0xf]
  %v95 = vld [vmem:[%s1 + $0xa8] sm:$0xf]
  %v96 = vld [vmem:[%s1 + $0xac] sm:$0xf]
  %v97 = vld [vmem:[%s1 + $0xb0] sm:$0xf]
  %v98 = vld [vmem:[%s1 + $0xb4] sm:$0xf]
  %v99 = vld [vmem:[%s1 + $0xb8] sm:$0xf]
  %v100 = vld [vmem:[%s1 + $0xbc] sm:$0xf]
  %v101 = vld [vmem:[%s1 + $0xc0] sm:$0xf]
  %v102 = vld [vmem:[%s1 + $0xc4] sm:$0xf]
  %v103 = vld [vmem:[%s1 + $0xc8] sm:$0xf]
  %v104 = vld [vmem:[%s1 + $0xcc] sm:$0xf]
  %v105 = vld [vmem:[%s1 + $0xd0] sm:$0xf]
  %v106 = vld [vmem:[%s1 + $0xd4] sm:$0xf]
  %v107 = vld [vmem:[%s1 + $0xd8] sm:$0xf]
  %v108 = vld [vmem:[%s1 + $0xdc] sm:$0xf]
  %v109 = vld [vmem:[%s1 + $0xe0] sm:$0xf]
  %v110 = vld [vmem:[%s1 + $0xe4] sm:$0xf]
  %v111 = vld [vmem:[%s1 + $0xe8] sm:$0xf]
  %v112 = vld [vmem:[%s1 + $0xec] sm:$0xf]
  %v113 = vld [vmem:[%s1 + $0xf0] sm:$0xf]
  %v114 = vld [vmem:[%s1 + $0xf4] sm:$0xf]
  %v115 = vld [vmem:[%s1 + $0xf8] sm:$0xf]
  %v116 = vld [vmem:[%s1 + $0xfc] sm:$0xf]
  %v117 = vld [vmem:[%s1 + $0x100] sm:$0xf]
  %v118 = vld [vmem:[%s1 + $0x104] sm:$0xf]
  %v119 = vld [vmem:[%s1 + $0x108] sm:$0xf]
  %v120 = vld [vmem:[%s1 + $0x10c] sm:$0xf]
  %v121 = vld [vmem:[%s1 + $0x110] sm:$0xf]
  %v122 = vld [vmem:[%s1 + $0x114] sm:$0xf]
  %v123 = vld [vmem:[%s1 + $0x118] sm:$0xf]
  %v124 = vld [vmem:[%s1 + $0x11c] sm:$0xf]
  %v125 = vld [vmem:[%s1 + $0x120] sm:$0xf]
  %v126 = vld [vmem:[%s1 + $0x124] sm:$0xf]
  %v127 = vld [vmem:[%s1 + $0x128] sm:$0xf]
  %v128 = vld [vmem:[%s1 + $0x12c] sm:$0xf]
  %v129 = vld [vmem:[%s1 + $0x130] sm:$0xf]
  %v130 = vld [vmem:[%s1 + $0x134] sm:$0xf]
  %v131 = vld [vmem:[%s1 + $0x138] sm:$0xf]
  %v132 = vld [vmem:[%s1 + $0x13c] sm:$0xf]
  %v133 = vld [vmem:[%s1 + $0x140] sm:$0xf]
  %v134 = vld [vmem:[%s1 + $0x144] sm:$0xf]
  %v135 = vld [vmem:[%s1 + $0x148] sm:$0xf]
  %v136 = vld [vmem:[%s1 + $0x14c] sm:$0xf]
  %v137 = vld [vmem:[%s1 + $0x150] sm:$0xf]
  %v138 = vld [vmem:[%s1 + $0x154] sm:$0xf]
  %v139 = vld [vmem:[%s1 + $0x158] sm:$0xf]
  %v140 = vld [vmem:[%s1 + $0x15c] sm:$0xf]
  %v141 = vld [vmem:[%s1 + $0x160] sm:$0xf]
  %v142 = vld [vmem:[%s1 + $0x164] sm:$0xf]
  %v143 = vld [vmem:[%s1 + $0x168] sm:$0xf]
  %v144 = vld [vmem:[%s1 + $0x16c] sm:$0xf]
  %v145 = vld [vmem:[%s1 + $0x170] sm:$0xf]
  %v146 = vld [vmem:[%s1 + $0x174] sm:$0xf]
  %v147 = vld [vmem:[%s1 + $0x178] sm:$0xf]
  %v148 = vld [vmem:[%s1 + $0x17c] sm:$0xf]
  %v149 = vld [vmem:[%s1 + $0x180] sm:$0xf]
  %v150 = vld [vmem:[%s1 + $0x184] sm:$0xf]
  %v151 = vld [vmem:[%s1 + $0x188] sm:$0xf]
  %v152 = vld [vmem:[%s1 + $0x18c] sm:$0xf]
  %v153 = vld [vmem:[%s1 + $0x190] sm:$0xf]
  %v154 = vld [vmem:[%s1 + $0x194] sm:$0xf]
  %v155 = vld [vmem:[%s1 + $0x198] sm:$0xf]
  %v156 = vld [vmem:[%s1 + $0x19c] sm:$0xf]
  %v157 = vld [vmem:[%s1 + $0x1a0] sm:$0xf]
  %v158 = vld [vmem:[%s1 + $0x1a4] sm:$0xf]
  %v159 = vld [vmem:[%s1 + $0x1a8] sm:$0xf]
  %v160 = vld [vmem:[%s1 + $0x1ac] sm:$0xf]
  %v161 = vld [vmem:[%s1 + $0x1b0] sm:$0xf]
  %v162 = vld [vmem:[%s1 + $0x1b4] sm:$0xf]
  %v163 = vld [vmem:[%s1 + $0x1b8] sm:$0xf]
  %v164 = vld [vmem:[%s1 + $0x1bc] sm:$0xf]
  %v165 = vld [vmem:[%s1 + $0x1c0] sm:$0xf]
  %v166 = vld [vmem:[%s1 + $0x1c4] sm:$0xf]
  %v167 = vld [vmem:[%s1 + $0x1c8] sm:$0xf]
  %v168 = vld [vmem:[%s1 + $0x1cc] sm:$0xf]
  %v169 = vld [vmem:[%s1 + $0x1d0] sm:$0xf]
  %v170 = vld [vmem:[%s1 + $0x1d4] sm:$0xf]
  %v171 = vld [vmem:[%s1 + $0x1d8] sm:$0xf]
  %v172 = vld [vmem:[%s1 + $0x1dc] sm:$0xf]
  %v173 = vld [vmem:[%s1 + $0x1e0] sm:$0xf]
  %v174 = vld [vmem:[%s1 + $0x1e4] sm:$0xf]
  %v175 = vld [vmem:[%s1 + $0x1e8] sm:$0xf]
  %v176 = vld [vmem:[%s1 + $0x1ec] sm:$0xf]
  %v177 = vld [vmem:[%s1 + $0x1f0] sm:$0xf]
  %v178 = vld [vmem:[%s1 + $0x1f4] sm:$0xf]
  %v179 = vld [vmem:[%s1 + $0x1f8] sm:$0xf]
  %v180 = vld [vmem:[%s1 + $0x1fc] sm:$0xf]
  %v181 = vld [vmem:[%s1 + $0x200] sm:$0xf]
  %v182 = vld [vmem:[%s1 + $0x204] sm:$0xf]
  %v183 = vld [vmem:[%s1 + $0x208] sm:$0xf]
  %v184 = vld [vmem:[%s1 + $0x20c] sm:$0xf]
  %v185 = vld [vmem:[%s1 + $0x210] sm:$0xf]
  %v186 = vld [vmem:[%s1 + $0x214] sm:$0xf]
  %v187 = vld [vmem:[%s1 + $0x218] sm:$0xf]
  %v188 = vld [vmem:[%s1 + $0x21c] sm:$0xf]
  %v189 = vld [vmem:[%s1 + $0x220] sm:$0xf]
  %v190 = vld [vmem:[%s1 + $0x224] sm:$0xf]
  %v191 = vld [vmem:[%s1 + $0x228] sm:$0xf]
  %v192 = vld [vmem:[%s1 + $0x22c] sm:$0xf]
  %v193 = vld [vmem:[%s1 + $0x230] sm:$0xf]
  %v194 = vld [vmem:[%s1 + $0x234] sm:$0xf]
  %v195 = vld [vmem:[%s1 + $0x238] sm:$0xf]
  %v196 = vld [vmem:[%s1 + $0x23c] sm:$0xf]
  %v197 = vld [vmem:[%s1 + $0x240] sm:$0xf]
  %v198 = vld [vmem:[%s1 + $0x244] sm:$0xf]
  %v199 = vld [vmem:[%s1 + $0x248] sm:$0xf]
  %v200 = vld [vmem:[%s1 + $0x24c] sm:$0xf]
  %v201 = vld [vmem:[%s1 + $0x250] sm:$0xf]
  %v202 = vld [vmem:[%s1 + $0x254] sm:$0xf]
  %v203 = vld [vmem:[%s1 + $0x258] sm:$0xf]
  %v204 = vld [vmem:[%s1 + $0x25c] sm:$0xf]
  %v205 = vld [vmem:[%s1 + $0x260] sm:$0xf]
  %v206 = vld [vmem:[%s1 + $0x264] sm:$0xf]
  %v207 = vld [vmem:[%s1 + $0x268] sm:$0xf]
  %v208 = vld [vmem:[%s1 + $0x26c] sm:$0xf]
  %v209 = vld [vmem:[%s1 + $0x270] sm:$0xf]
  %v210 = vld [vmem:[%s1 + $0x274] sm:$0xf]
  %v211 = vld [vmem:[%s1 + $0x278] sm:$0xf]
  %v212 = vld [vmem:[%s1 + $0x27c] sm:$0xf]
  %v213 = vld [vmem:[%s1 + $0x280] sm:$0xf]
  %v214 = vld [vmem:[%s1 + $0x284] sm:$0xf]
  %v215 = vld [vmem:[%s1 + $0x288] sm:$0xf]
  %v216 = vld [vmem:[%s1 + $0x28c] sm:$0xf]
  %v217 = vld [vmem:[%s1 + $0x290] sm:$0xf]
  %v218 = vld [vmem:[%s1 + $0x294] sm:$0xf]
  %v219 = vld [vmem:[%s1 + $0x298] sm:$0xf]
  %v220 = vld [vmem:[%s1 + $0x29c] sm:$0xf]
  %v221 = vld [vmem:[%s1 + $0x2a0] sm:$0xf]
  %v222 = vld [vmem:[%s1 + $0x2a4] sm:$0xf]
  %v223 = vld [vmem:[%s1 + $0x2a8] sm:$0xf]
  %v224 = vld [vmem:[%s1 + $0x2ac] sm:$0xf]
  %v225 = vld [vmem:[%s1 + $0x2b0] sm:$0xf]
  %v226 = vld [vmem:[%s1 + $0x2b4] sm:$0xf]
  %v227 = vld [vmem:[%s1 + $0x2b8] sm:$0xf]
  %v228 = vld [vmem:[%s1 + $0x2bc] sm:$0xf]
  %v229 = vld [vmem:[%s1 + $0x2c0] sm:$0xf]
  %v230 = vld [vmem:[%s1 + $0x2c4] sm:$0xf]
  %v231 = vld [vmem:[%s1 + $0x2c8] sm:$0xf]
  %v232 = vld [vmem:[%s1 + $0x2cc] sm:$0xf]
  %v233 = vld [vmem:[%s1 + $0x2d0] sm:$0xf]
  %v234 = vld [vmem:[%s1 + $0x2d4] sm:$0xf]
  %v235 = vld [vmem:[%s1 + $0x2d8] sm:$0xf]
  %v236 = vld [vmem:[%s1 + $0x2dc] sm:$0xf]
  %v237 = vld [vmem:[%s1 + $0x2e0] sm:$0xf]
  %v238 = vld [vmem:[%s1 + $0x2e4] sm:$0xf]
  %v239 = vld [vmem:[%s1 + $0x2e8] sm:$0xf]
  %v240 = vld [vmem:[%s1 + $0x2ec] sm:$0xf]
  %v241 = vld [vmem:[%s1 + $0x2f0] sm:$0xf]
  %v242 = vld [vmem:[%s1 + $0x2f4] sm:$0xf]
  %v243 = vld [vmem:[%s1 + $0x2f8] sm:$0xf]
  %v244 = vld [vmem:[%s1 + $0x2fc] sm:$0xf]
  %v245 = vld [vmem:[%s1 + $0x300] sm:$0xf]
  %v246 = vld [vmem:[%s1 + $0x304] sm:$0xf]
  %v247 = vld [vmem:[%s1 + $0x308] sm:$0xf]
  %v248 = vld [vmem:[%s1 + $0x30c] sm:$0xf]
  %v249 = vld [vmem:[%s1 + $0x310] sm:$0xf]
  %v250 = vld [vmem:[%s1 + $0x314] sm:$0xf]
  %v251 = vld [vmem:[%s1 + $0x318] sm:$0xf]
  %v252 = vld [vmem:[%s1 + $0x31c] sm:$0xf]
  %v253 = vld [vmem:[%s1 + $0x320] sm:$0xf]
  %v254 = vld [vmem:[%s1 + $0x324] sm:$0xf]
  %v255 = vld [vmem:[%s1 + $0x328] sm:$0xf]
  %v256 = vld [vmem:[%s1 + $0x32c] sm:$0xf]
  %v257 = vld [vmem:[%s1 + $0x330] sm:$0xf]
  %v258 = vld [vmem:[%s1 + $0x334] sm:$0xf]
  %v259 = vld [vmem:[%s1 + $0x338] sm:$0xf]
  %v260 = vld [vmem:[%s1 + $0x33c] sm:$0xf]
  %v261 = vld [vmem:[%s1 + $0x340] sm:$0xf]
  %v262 = vld [vmem:[%s1 + $0x344] sm:$0xf]
  %v263 = vld [vmem:[%s1 + $0x348] sm:$0xf]
  %v264 = vld [vmem:[%s1 + $0x34c] sm:$0xf]
  %v265 = vld [vmem:[%s1 + $0x350] sm:$0xf]
  %v266 = vld [vmem:[%s1 + $0x354] sm:$0xf]
  %v267 = vld [vmem:[%s1 + $0x358] sm:$0xf]
  %v268 = vld [vmem:[%s1 + $0x35c] sm:$0xf]
  %v269 = vld [vmem:[%s1 + $0x360] sm:$0xf]
  %v270 = vld [vmem:[%s1 + $0x364] sm:$0xf]
  %v271 = vld [vmem:[%s1 + $0x368] sm:$0xf]
  %v272 = vld [vmem:[%s1 + $0x36c] sm:$0xf]
  %v273 = vld [vmem:[%s1 + $0x370] sm:$0xf]
  %v274 = vld [vmem:[%s1 + $0x374] sm:$0xf]
  %v275 = vld [vmem:[%s1 + $0x378] sm:$0xf]
  %v276 = vld [vmem:[%s1 + $0x37c] sm:$0xf]
  %v277 = vld [vmem:[%s1 + $0x380] sm:$0xf]
  %v278 = vld [vmem:[%s1 + $0x384] sm:$0xf]
  %v279 = vld [vmem:[%s1 + $0x388] sm:$0xf]
  %v280 = vld [vmem:[%s1 + $0x38c] sm:$0xf]
  %v281 = vld [vmem:[%s1 + $0x390] sm:$0xf]
  %v282 = vld [vmem:[%s1 + $0x394] sm:$0xf]
  %v283 = vld [vmem:[%s1 + $0x398] sm:$0xf]
  %v284 = vld [vmem:[%s1 + $0x39c] sm:$0xf]
  %v285 = vld [vmem:[%s1 + $0x3a0] sm:$0xf]
  %v286 = vld [vmem:[%s1 + $0x3a4] sm:$0xf]
  %v287 = vld [vmem:[%s1 + $0x3a8] sm:$0xf]
  %v288 = vld [vmem:[%s1 + $0x3ac] sm:$0xf]
  %v289 = vld [vmem:[%s1 + $0x3b0] sm:$0xf]
  %v290 = vld [vmem:[%s1 + $0x3b4] sm:$0xf]
  %v291 = vld [vmem:[%s1 + $0x3b8] sm:$0xf]
  %v292 = vld [vmem:[%s1 + $0x3bc] sm:$0xf]
  %v293 = vld [vmem:[%s1 + $0x3c0] sm:$0xf]
  %v294 = vld [vmem:[%s1 + $0x3c4] sm:$0xf]
  %v295 = vld [vmem:[%s1 + $0x3c8] sm:$0xf]
  %v296 = vld [vmem:[%s1 + $0x3cc] sm:$0xf]
  %v297 = vld [vmem:[%s1 + $0x3d0] sm:$0xf]
  %v298 = vld [vmem:[%s1 + $0x3d4] sm:$0xf]
  %v299 = vld [vmem:[%s1 + $0x3d8] sm:$0xf]
  %v300 = vld [vmem:[%s1 + $0x3dc] sm:$0xf]
  %v301 = vld [vmem:[%s1 + $0x3e0] sm:$0xf]
  %v302 = vld [vmem:[%s1 + $0x3e4] sm:$0xf]
  %v303 = vld [vmem:[%s1 + $0x3e8] sm:$0xf]
  %v304 = vld [vmem:[%s1 + $0x3ec] sm:$0xf]
  %v305 = vld [vmem:[%s1 + $0x3f0] sm:$0xf]
  %v306 = vld [vmem:[%s1 + $0x3f4] sm:$0xf]
  %v307 = vld [vmem:[%s1 + $0x3f8] sm:$0xf]
  %v308 = vld [vmem:[%s1 + $0x3fc] sm:$0xf]
  %v309 = vld [vmem:[%s1 + $0x400] sm:$0xf]
  %v310 = vld [vmem:[%s1 + $0x404] sm:$0xf]
  %v311 = vld [vmem:[%s1 + $0x408] sm:$0xf]
  %v312 = vld [vmem:[%s1 + $0x40c] sm:$0xf]
  %v313 = vld [vmem:[%s1 + $0x410] sm:$0xf]
  %v314 = vld [vmem:[%s1 + $0x414] sm:$0xf]
  %v315 = vld [vmem:[%s1 + $0x418] sm:$0xf]
  %v316 = vld [vmem:[%s1 + $0x41c] sm:$0xf]
  %v317 = vld [vmem:[%s1 + $0x420] sm:$0xf]
  %v318 = vld [vmem:[%s1 + $0x424] sm:$0xf]
  %v319 = vld [vmem:[%s1 + $0x428] sm:$0xf]
  %v320 = vld [vmem:[%s1 + $0x42c] sm:$0xf]
  %v321 = vld [vmem:[%s1 + $0x430] sm:$0xf]
  %v322 = vld [vmem:[%s1 + $0x434] sm:$0xf]
  %v323 = vld [vmem:[%s1 + $0x438] sm:$0xf]
  %v324 = vld [vmem:[%s1 + $0x43c] sm:$0xf]
  %v325 = vld [vmem:[%s1 + $0x440] sm:$0xf]
  %v326 = vld [vmem:[%s1 + $0x444] sm:$0xf]
  %v327 = vld [vmem:[%s1 + $0x448] sm:$0xf]
  %v328 = vld [vmem:[%s1 + $0x44c] sm:$0xf]
  %v329 = vld [vmem:[%s1 + $0x450] sm:$0xf]
  %v330 = vld [vmem:[%s1 + $0x454] sm:$0xf]
  %v331 = vld [vmem:[%s1 + $0x458] sm:$0xf]
  %v332 = vld [vmem:[%s1 + $0x45c] sm:$0xf]
  %v333 = vld [vmem:[%s1 + $0x460] sm:$0xf]
  %v334 = vld [vmem:[%s1 + $0x464] sm:$0xf]
  %v335 = vld [vmem:[%s1 + $0x468] sm:$0xf]
  %v336 = vld [vmem:[%s1 + $0x46c] sm:$0xf]
  %v337 = vld [vmem:[%s1 + $0x470] sm:$0xf]
  %v338 = vld [vmem:[%s1 + $0x474] sm:$0xf]
  %v339 = vld [vmem:[%s1 + $0x478] sm:$0xf]
  %v340 = vld [vmem:[%s1 + $0x47c] sm:$0xf]
  %v341 = vld [vmem:[%s1 + $0x480] sm:$0xf]
  %v342 = vld [vmem:[%s1 + $0x484] sm:$0xf]
  %v343 = vld [vmem:[%s1 + $0x488] sm:$0xf]
  %v344 = vld [vmem:[%s1 + $0x48c] sm:$0xf]
  %v345 = vld [vmem:[%s1 + $0x490] sm:$0xf]
  %v346 = vld [vmem:[%s1 + $0x494] sm:$0xf]
  %v347 = vld [vmem:[%s1 + $0x498] sm:$0xf]
  %v348 = vld [vmem:[%s1 + $0x49c] sm:$0xf]
  %v349 = vld [vmem:[%s1 + $0x4a0] sm:$0xf]
  %v350 = vld [vmem:[%s1 + $0x4a4] sm:$0xf]
  %v351 = vld [vmem:[%s1 + $0x4a8] sm:$0xf]
  %v352 = vld [vmem:[%s1 + $0x4ac] sm:$0xf]
  %v353 = vld [vmem:[%s1 + $0x4b0] sm:$0xf]
  %v354 = vld [vmem:[%s1 + $0x4b4] sm:$0xf]
  %v355 = vld [vmem:[%s1 + $0x4b8] sm:$0xf]
  %v356 = vld [vmem:[%s1 + $0x4bc] sm:$0xf]
  %v357 = vld [vmem:[%s1 + $0x4c0] sm:$0xf]
  %v358 = vld [vmem:[%s1 + $0x4c4] sm:$0xf]
  %v359 = vld [vmem:[%s1 + $0x4c8] sm:$0xf]
  %v360 = vld [vmem:[%s1 + $0x4cc] sm:$0xf]
  %v361 = vld [vmem:[%s1 + $0x4d0] sm:$0xf]
  %v362 = vld [vmem:[%s1 + $0x4d4] sm:$0xf]
  %v363 = vld [vmem:[%s1 + $0x4d8] sm:$0xf]
  %v364 = vld [vmem:[%s1 + $0x4dc] sm:$0xf]
  %v365 = vld [vmem:[%s1 + $0x4e0] sm:$0xf]
  %v366 = vld [vmem:[%s1 + $0x4e4] sm:$0xf]
  %v367 = vld [vmem:[%s1 + $0x4e8] sm:$0xf]
  %v368 = vld [vmem:[%s1 + $0x4ec] sm:$0xf]
  %v369 = vld [vmem:[%s1 + $0x4f0] sm:$0xf]
  %v370 = vld [vmem:[%s1 + $0x4f4] sm:$0xf]
  %v371 = vld [vmem:[%s1 + $0x4f8] sm:$0xf]
  %v372 = vld [vmem:[%s1 + $0x4fc] sm:$0xf]
  %v373 = vld [vmem:[%s1 + $0x500] sm:$0xf]
  %v374 = vld [vmem:[%s1 + $0x504] sm:$0xf]
  %v375 = vld [vmem:[%s1 + $0x508] sm:$0xf]
  %v376 = vld [vmem:[%s1 + $0x50c] sm:$0xf]
  %v377 = vld [vmem:[%s1 + $0x510] sm:$0xf]
  %v378 = vld [vmem:[%s1 + $0x514] sm:$0xf]
  %v379 = vld [vmem:[%s1 + $0x518] sm:$0xf]
  %v380 = vld [vmem:[%s1 + $0x51c] sm:$0xf]
  %v381 = vld [vmem:[%s1 + $0x520] sm:$0xf]
  %v382 = vld [vmem:[%s1 + $0x524] sm:$0xf]
  %v383 = vld [vmem:[%s1 + $0x528] sm:$0xf]
  %v384 = vld [vmem:[%s1 + $0x52c] sm:$0xf]
  %v385 = vld [vmem:[%s1 + $0x530] sm:$0xf]
  %v386 = vld [vmem:[%s1 + $0x534] sm:$0xf]
  %v387 = vld [vmem:[%s1 + $0x538] sm:$0xf]
  %v388 = vld [vmem:[%s1 + $0x53c] sm:$0xf]
  %v389 = vld [vmem:[%s1 + $0x540] sm:$0xf]
  %v390 = vld [vmem:[%s1 + $0x544] sm:$0xf]
  %v391 = vld [vmem:[%s1 + $0x548] sm:$0xf]
  %v392 = vld [vmem:[%s1 + $0x54c] sm:$0xf]
  %v393 = vld [vmem:[%s1 + $0x550] sm:$0xf]
  %v394 = vld [vmem:[%s1 + $0x554] sm:$0xf]
  %v395 = vld [vmem:[%s1 + $0x558] sm:$0xf]
  %v396 = vld [vmem:[%s1 + $0x55c] sm:$0xf]
  %v397 = vld [vmem:[%s1 + $0x560] sm:$0xf]
  %v398 = vld [vmem:[%s1 + $0x564] sm:$0xf]
  %v399 = vld [vmem:[%s1 + $0x568] sm:$0xf]
  %v400 = vld [vmem:[%s1 + $0x56c] sm:$0xf]
  %v401 = vld [vmem:[%s1 + $0x570] sm:$0xf]
  %v402 = vld [vmem:[%s1 + $0x574] sm:$0xf]
  %v403 = vld [vmem:[%s1 + $0x578] sm:$0xf]
  %v404 = vld [vmem:[%s1 + $0x57c] sm:$0xf]
  %v405 = vld [vmem:[%s1 + $0x580] sm:$0xf]
  %v406 = vld [vmem:[%s1 + $0x584] sm:$0xf]
  %v407 = vld [vmem:[%s1 + $0x588] sm:$0xf]
  %v408 = vld [vmem:[%s1 + $0x58c] sm:$0xf]
  %v409 = vld [vmem:[%s1 + $0x590] sm:$0xf]
  %v410 = vld [vmem:[%s1 + $0x594] sm:$0xf]
  %v411 = vld [vmem:[%s1 + $0x598] sm:$0xf]
  %v412 = vld [vmem:[%s1 + $0x59c] sm:$0xf]
  %v413 = vld [vmem:[%s1 + $0x5a0] sm:$0xf]
  %v414 = vld [vmem:[%s1 + $0x5a4] sm:$0xf]
  %v415 = vld [vmem:[%s1 + $0x5a8] sm:$0xf]
  %v416 = vld [vmem:[%s1 + $0x5ac] sm:$0xf]
  %v417 = vld [vmem:[%s1 + $0x5b0] sm:$0xf]
  %v418 = vld [vmem:[%s1 + $0x5b4] sm:$0xf]
  %v419 = vld [vmem:[%s1 + $0x5b8] sm:$0xf]
  %v420 = vld [vmem:[%s1 + $0x5bc] sm:$0xf]
  %v421 = vld [vmem:[%s1 + $0x5c0] sm:$0xf]
  %v422 = vld [vmem:[%s1 + $0x5c4] sm:$0xf]
  %v423 = vld [vmem:[%s1 + $0x5c8] sm:$0xf]
  %v424 = vld [vmem:[%s1 + $0x5cc] sm:$0xf]
  %v425 = vld [vmem:[%s1 + $0x5d0] sm:$0xf]
  %v426 = vld [vmem:[%s1 + $0x5d4] sm:$0xf]
  %v427 = vld [vmem:[%s1 + $0x5d8] sm:$0xf]
  %v428 = vld [vmem:[%s1 + $0x5dc] sm:$0xf]
  %v429 = vld [vmem:[%s1 + $0x5e0] sm:$0xf]
  %v430 = vld [vmem:[%s1 + $0x5e4] sm:$0xf]
  %v431 = vld [vmem:[%s1 + $0x5e8] sm:$0xf]
  %v432 = vld [vmem:[%s1 + $0x5ec] sm:$0xf]
  %v433 = vld [vmem:[%s1 + $0x5f0] sm:$0xf]
  %v434 = vld [vmem:[%s1 + $0x5f4] sm:$0xf]
  %v435 = vld [vmem:[%s1 + $0x5f8] sm:$0xf]
  %v436 = vld [vmem:[%s1 + $0x5fc] sm:$0xf]
  %v437 = vld [vmem:[%s1 + $0x600] sm:$0xf]
  %v438 = vld [vmem:[%s1 + $0x604] sm:$0xf]
  %v439 = vld [vmem:[%s1 + $0x608] sm:$0xf]
  %v440 = vld [vmem:[%s1 + $0x60c] sm:$0xf]
  %v441 = vld [vmem:[%s1 + $0x610] sm:$0xf]
  %v442 = vld [vmem:[%s1 + $0x614] sm:$0xf]
  %v443 = vld [vmem:[%s1 + $0x618] sm:$0xf]
  %v444 = vld [vmem:[%s1 + $0x61c] sm:$0xf]
  %v445 = vld [vmem:[%s1 + $0x620] sm:$0xf]
  %v446 = vld [vmem:[%s1 + $0x624] sm:$0xf]
  %v447 = vld [vmem:[%s1 + $0x628] sm:$0xf]
  %v448 = vld [vmem:[%s1 + $0x62c] sm:$0xf]
  %v449 = vld [vmem:[%s1 + $0x630] sm:$0xf]
  %v450 = vld [vmem:[%s1 + $0x634] sm:$0xf]
  %v451 = vld [vmem:[%s1 + $0x638] sm:$0xf]
  %v452 = vld [vmem:[%s1 + $0x63c] sm:$0xf]
  %v453 = vld [vmem:[%s2] sm:$0x1]
  %v455 = vlaneseq
  %v456 = vshrl.u32 %v455, 7
  %v457 = vsub.s32 0, %v456
  %v458 = vrot.slane %v453, %v457
  %v486 = vunpack.c.l.b16 %v27
  %v487 = vunpack.c.h.b16 %v27
  %v488 = vunpack.c.l.b16 %v28
  %v489 = vunpack.c.h.b16 %v28
  %v490 = vunpack.c.l.b16 %v29
  %v491 = vunpack.c.h.b16 %v29
  %v492 = vunpack.c.l.b16 %v30
  %v493 = vunpack.c.h.b16 %v30
  %v494 = vunpack.c.l.b16 %v31
  %v495 = vunpack.c.h.b16 %v31
  %v496 = vunpack.c.l.b16 %v32
  %v497 = vunpack.c.h.b16 %v32
  %v498 = vunpack.c.l.b16 %v33
  %v499 = vunpack.c.h.b16 %v33
  %v500 = vunpack.c.l.b16 %v34
  %v501 = vunpack.c.h.b16 %v34
  %v502 = vunpack.c.l.b16 %v35
  %v503 = vunpack.c.h.b16 %v35
  %v504 = vunpack.c.l.b16 %v36
  %v505 = vunpack.c.h.b16 %v36
  %v506 = vunpack.c.l.b16 %v37
  %v507 = vunpack.c.h.b16 %v37
  %v508 = vunpack.c.l.b16 %v38
  %v509 = vunpack.c.h.b16 %v38
  %v510 = vunpack.c.l.b16 %v39
  %v511 = vunpack.c.l.b16 %v40
  %v512 = vunpack.c.h.b16 %v40
  %v513 = vunpack.c.l.b16 %v41
  %v514 = vunpack.c.h.b16 %v41
  %v515 = vunpack.c.l.b16 %v42
  %v516 = vunpack.c.h.b16 %v42
  %v517 = vunpack.c.l.b16 %v43
  %v518 = vunpack.c.h.b16 %v43
  %v519 = vunpack.c.l.b16 %v44
  %v520 = vunpack.c.h.b16 %v44
  %v521 = vunpack.c.l.b16 %v45
  %v522 = vunpack.c.h.b16 %v45
  %v523 = vunpack.c.l.b16 %v46
  %v524 = vunpack.c.h.b16 %v46
  %v525 = vunpack.c.l.b16 %v47
  %v526 = vunpack.c.h.b16 %v47
  %v527 = vunpack.c.l.b16 %v48
  %v528 = vunpack.c.h.b16 %v48
  %v529 = vunpack.c.l.b16 %v49
  %v530 = vunpack.c.h.b16 %v49
  %v531 = vunpack.c.l.b16 %v50
  %v532 = vunpack.c.h.b16 %v50
  %v533 = vunpack.c.l.b16 %v51
  %v534 = vunpack.c.h.b16 %v51
  %v535 = vunpack.c.l.b16 %v52
  %v536 = vpack.c.b16 %v511, %v486
  %v537 = vpack.c.b16 %v512, %v487
  %v538 = vpack.c.b16 %v513, %v488
  %v539 = vpack.c.b16 %v514, %v489
  %v540 = vpack.c.b16 %v515, %v490
  %v541 = vpack.c.b16 %v516, %v491
  %v542 = vpack.c.b16 %v517, %v492
  %v543 = vpack.c.b16 %v518, %v493
  %v544 = vpack.c.b16 %v519, %v494
  %v545 = vpack.c.b16 %v520, %v495
  %v546 = vpack.c.b16 %v521, %v496
  %v547 = vpack.c.b16 %v522, %v497
  %v548 = vpack.c.b16 %v523, %v498
  %v549 = vpack.c.b16 %v524, %v499
  %v550 = vpack.c.b16 %v525, %v500
  %v551 = vpack.c.b16 %v526, %v501
  %v552 = vpack.c.b16 %v527, %v502
  %v553 = vpack.c.b16 %v528, %v503
  %v554 = vpack.c.b16 %v529, %v504
  %v555 = vpack.c.b16 %v530, %v505
  %v556 = vpack.c.b16 %v531, %v506
  %v557 = vpack.c.b16 %v532, %v507
  %v558 = vpack.c.b16 %v533, %v508
  %v559 = vpack.c.b16 %v534, %v509
  %v560 = vpack.c.b16 %v535, %v510
  %v986 = vunpack.c.l.b16 %v53
  %v987 = vunpack.c.l.b16 %v54
  %v988 = vunpack.c.l.b16 %v55
  %v989 = vunpack.c.l.b16 %v56
  %v990 = vunpack.c.l.b16 %v57
  %v991 = vunpack.c.l.b16 %v58
  %v992 = vunpack.c.l.b16 %v59
  %v993 = vunpack.c.l.b16 %v60
  %v994 = vunpack.c.l.b16 %v61
  %v995 = vunpack.c.l.b16 %v62
  %v996 = vunpack.c.l.b16 %v63
  %v997 = vunpack.c.l.b16 %v64
  %v998 = vunpack.c.l.b16 %v65
  %v999 = vunpack.c.l.b16 %v66
  %v1000 = vunpack.c.l.b16 %v67
  %v1001 = vunpack.c.l.b16 %v68
  %v1002 = vunpack.c.l.b16 %v69
  %v1003 = vunpack.c.l.b16 %v70
  %v1004 = vunpack.c.l.b16 %v71
  %v1005 = vunpack.c.l.b16 %v72
  %v1006 = vunpack.c.l.b16 %v73
  %v1007 = vunpack.c.l.b16 %v74
  %v1008 = vunpack.c.l.b16 %v75
  %v1009 = vunpack.c.l.b16 %v76
  %v1010 = vunpack.c.l.b16 %v77
  %v1011 = vunpack.c.l.b16 %v78
  %v1012 = vunpack.c.l.b16 %v79
  %v1013 = vunpack.c.l.b16 %v80
  %v1014 = vunpack.c.l.b16 %v81
  %v1015 = vunpack.c.l.b16 %v82
  %v1016 = vunpack.c.l.b16 %v83
  %v1017 = vunpack.c.l.b16 %v84
  %v1018 = vunpack.c.l.b16 %v85
  %v1019 = vunpack.c.l.b16 %v86
  %v1020 = vunpack.c.l.b16 %v87
  %v1021 = vunpack.c.l.b16 %v88
  %v1022 = vunpack.c.l.b16 %v89
  %v1023 = vunpack.c.l.b16 %v90
  %v1024 = vunpack.c.l.b16 %v91
  %v1025 = vunpack.c.l.b16 %v92
  %v1026 = vunpack.c.l.b16 %v93
  %v1027 = vunpack.c.l.b16 %v94
  %v1028 = vunpack.c.l.b16 %v95
  %v1029 = vunpack.c.l.b16 %v96
  %v1030 = vunpack.c.l.b16 %v97
  %v1031 = vunpack.c.l.b16 %v98
  %v1032 = vunpack.c.l.b16 %v99
  %v1033 = vunpack.c.l.b16 %v100
  %v1034 = vunpack.c.l.b16 %v101
  %v1035 = vunpack.c.l.b16 %v102
  %v1036 = vunpack.c.l.b16 %v103
  %v1037 = vunpack.c.l.b16 %v104
  %v1038 = vunpack.c.l.b16 %v105
  %v1039 = vunpack.c.l.b16 %v106
  %v1040 = vunpack.c.l.b16 %v107
  %v1041 = vunpack.c.l.b16 %v108
  %v1042 = vunpack.c.l.b16 %v109
  %v1043 = vunpack.c.l.b16 %v110
  %v1044 = vunpack.c.l.b16 %v111
  %v1045 = vunpack.c.l.b16 %v112
  %v1046 = vunpack.c.l.b16 %v113
  %v1047 = vunpack.c.l.b16 %v114
  %v1048 = vunpack.c.l.b16 %v115
  %v1049 = vunpack.c.l.b16 %v116
  %v1050 = vunpack.c.l.b16 %v117
  %v1051 = vunpack.c.l.b16 %v118
  %v1052 = vunpack.c.l.b16 %v119
  %v1053 = vunpack.c.l.b16 %v120
  %v1054 = vunpack.c.l.b16 %v121
  %v1055 = vunpack.c.l.b16 %v122
  %v1056 = vunpack.c.l.b16 %v123
  %v1057 = vunpack.c.l.b16 %v124
  %v1058 = vunpack.c.l.b16 %v125
  %v1059 = vunpack.c.l.b16 %v126
  %v1060 = vunpack.c.l.b16 %v127
  %v1061 = vunpack.c.l.b16 %v128
  %v1062 = vunpack.c.l.b16 %v129
  %v1063 = vunpack.c.l.b16 %v130
  %v1064 = vunpack.c.l.b16 %v131
  %v1065 = vunpack.c.l.b16 %v132
  %v1066 = vunpack.c.l.b16 %v133
  %v1067 = vunpack.c.l.b16 %v134
  %v1068 = vunpack.c.l.b16 %v135
  %v1069 = vunpack.c.l.b16 %v136
  %v1070 = vunpack.c.l.b16 %v137
  %v1071 = vunpack.c.l.b16 %v138
  %v1072 = vunpack.c.l.b16 %v139
  %v1073 = vunpack.c.l.b16 %v140
  %v1074 = vunpack.c.l.b16 %v141
  %v1075 = vunpack.c.l.b16 %v142
  %v1076 = vunpack.c.l.b16 %v143
  %v1077 = vunpack.c.l.b16 %v144
  %v1078 = vunpack.c.l.b16 %v145
  %v1079 = vunpack.c.l.b16 %v146
  %v1080 = vunpack.c.l.b16 %v147
  %v1081 = vunpack.c.l.b16 %v148
  %v1082 = vunpack.c.l.b16 %v149
  %v1083 = vunpack.c.l.b16 %v150
  %v1084 = vunpack.c.l.b16 %v151
  %v1085 = vunpack.c.l.b16 %v152
  %v1086 = vunpack.c.l.b16 %v153
  %v1087 = vunpack.c.l.b16 %v154
  %v1088 = vunpack.c.l.b16 %v155
  %v1089 = vunpack.c.l.b16 %v156
  %v1090 = vunpack.c.l.b16 %v157
  %v1091 = vunpack.c.l.b16 %v158
  %v1092 = vunpack.c.l.b16 %v159
  %v1093 = vunpack.c.l.b16 %v160
  %v1094 = vunpack.c.l.b16 %v161
  %v1095 = vunpack.c.l.b16 %v162
  %v1096 = vunpack.c.l.b16 %v163
  %v1097 = vunpack.c.l.b16 %v164
  %v1098 = vunpack.c.l.b16 %v165
  %v1099 = vunpack.c.l.b16 %v166
  %v1100 = vunpack.c.l.b16 %v167
  %v1101 = vunpack.c.l.b16 %v168
  %v1102 = vunpack.c.l.b16 %v169
  %v1103 = vunpack.c.l.b16 %v170
  %v1104 = vunpack.c.l.b16 %v171
  %v1105 = vunpack.c.l.b16 %v172
  %v1106 = vunpack.c.l.b16 %v173
  %v1107 = vunpack.c.l.b16 %v174
  %v1108 = vunpack.c.l.b16 %v175
  %v1109 = vunpack.c.l.b16 %v176
  %v1110 = vunpack.c.l.b16 %v177
  %v1111 = vunpack.c.l.b16 %v178
  %v1112 = vunpack.c.l.b16 %v179
  %v1113 = vunpack.c.l.b16 %v180
  %v1114 = vunpack.c.l.b16 %v181
  %v1115 = vunpack.c.l.b16 %v182
  %v1116 = vunpack.c.l.b16 %v183
  %v1117 = vunpack.c.l.b16 %v184
  %v1118 = vunpack.c.l.b16 %v185
  %v1119 = vunpack.c.l.b16 %v186
  %v1120 = vunpack.c.l.b16 %v187
  %v1121 = vunpack.c.l.b16 %v188
  %v1122 = vunpack.c.l.b16 %v189
  %v1123 = vunpack.c.l.b16 %v190
  %v1124 = vunpack.c.l.b16 %v191
  %v1125 = vunpack.c.l.b16 %v192
  %v1126 = vunpack.c.l.b16 %v193
  %v1127 = vunpack.c.l.b16 %v194
  %v1128 = vunpack.c.l.b16 %v195
  %v1129 = vunpack.c.l.b16 %v196
  %v1130 = vunpack.c.l.b16 %v197
  %v1131 = vunpack.c.l.b16 %v198
  %v1132 = vunpack.c.l.b16 %v199
  %v1133 = vunpack.c.l.b16 %v200
  %v1134 = vunpack.c.l.b16 %v201
  %v1135 = vunpack.c.l.b16 %v202
  %v1136 = vunpack.c.l.b16 %v203
  %v1137 = vunpack.c.l.b16 %v204
  %v1138 = vunpack.c.l.b16 %v205
  %v1139 = vunpack.c.l.b16 %v206
  %v1140 = vunpack.c.l.b16 %v207
  %v1141 = vunpack.c.l.b16 %v208
  %v1142 = vunpack.c.l.b16 %v209
  %v1143 = vunpack.c.l.b16 %v210
  %v1144 = vunpack.c.l.b16 %v211
  %v1145 = vunpack.c.l.b16 %v212
  %v1146 = vunpack.c.l.b16 %v213
  %v1147 = vunpack.c.l.b16 %v214
  %v1148 = vunpack.c.l.b16 %v215
  %v1149 = vunpack.c.l.b16 %v216
  %v1150 = vunpack.c.l.b16 %v217
  %v1151 = vunpack.c.l.b16 %v218
  %v1152 = vunpack.c.l.b16 %v219
  %v1153 = vunpack.c.l.b16 %v220
  %v1154 = vunpack.c.l.b16 %v221
  %v1155 = vunpack.c.l.b16 %v222
  %v1156 = vunpack.c.l.b16 %v223
  %v1157 = vunpack.c.l.b16 %v224
  %v1158 = vunpack.c.l.b16 %v225
  %v1159 = vunpack.c.l.b16 %v226
  %v1160 = vunpack.c.l.b16 %v227
  %v1161 = vunpack.c.l.b16 %v228
  %v1162 = vunpack.c.l.b16 %v229
  %v1163 = vunpack.c.l.b16 %v230
  %v1164 = vunpack.c.l.b16 %v231
  %v1165 = vunpack.c.l.b16 %v232
  %v1166 = vunpack.c.l.b16 %v233
  %v1167 = vunpack.c.l.b16 %v234
  %v1168 = vunpack.c.l.b16 %v235
  %v1169 = vunpack.c.l.b16 %v236
  %v1170 = vunpack.c.l.b16 %v237
  %v1171 = vunpack.c.l.b16 %v238
  %v1172 = vunpack.c.l.b16 %v239
  %v1173 = vunpack.c.l.b16 %v240
  %v1174 = vunpack.c.l.b16 %v241
  %v1175 = vunpack.c.l.b16 %v242
  %v1176 = vunpack.c.l.b16 %v243
  %v1177 = vunpack.c.l.b16 %v244
  %v1178 = vunpack.c.l.b16 %v245
  %v1179 = vunpack.c.l.b16 %v246
  %v1180 = vunpack.c.l.b16 %v247
  %v1181 = vunpack.c.l.b16 %v248
  %v1182 = vunpack.c.l.b16 %v249
  %v1183 = vunpack.c.l.b16 %v250
  %v1184 = vunpack.c.l.b16 %v251
  %v1185 = vunpack.c.l.b16 %v252
  %v1186 = vunpack.c.l.b16 %v253
  %v1187 = vunpack.c.l.b16 %v254
  %v1188 = vunpack.c.l.b16 %v255
  %v1189 = vunpack.c.l.b16 %v256
  %v1190 = vunpack.c.l.b16 %v257
  %v1191 = vunpack.c.l.b16 %v258
  %v1192 = vunpack.c.l.b16 %v259
  %v1193 = vunpack.c.l.b16 %v260
  %v1194 = vunpack.c.l.b16 %v261
  %v1195 = vunpack.c.l.b16 %v262
  %v1196 = vunpack.c.l.b16 %v263
  %v1197 = vunpack.c.l.b16 %v264
  %v1198 = vunpack.c.l.b16 %v265
  %v1199 = vunpack.c.l.b16 %v266
  %v1200 = vunpack.c.l.b16 %v267
  %v1201 = vunpack.c.l.b16 %v268
  %v1202 = vunpack.c.l.b16 %v269
  %v1203 = vunpack.c.l.b16 %v270
  %v1204 = vunpack.c.l.b16 %v271
  %v1205 = vunpack.c.l.b16 %v272
  %v1206 = vunpack.c.l.b16 %v273
  %v1207 = vunpack.c.l.b16 %v274
  %v1208 = vunpack.c.l.b16 %v275
  %v1209 = vunpack.c.l.b16 %v276
  %v1210 = vunpack.c.l.b16 %v277
  %v1211 = vunpack.c.l.b16 %v278
  %v1212 = vunpack.c.l.b16 %v279
  %v1213 = vunpack.c.l.b16 %v280
  %v1214 = vunpack.c.l.b16 %v281
  %v1215 = vunpack.c.l.b16 %v282
  %v1216 = vunpack.c.l.b16 %v283
  %v1217 = vunpack.c.l.b16 %v284
  %v1218 = vunpack.c.l.b16 %v285
  %v1219 = vunpack.c.l.b16 %v286
  %v1220 = vunpack.c.l.b16 %v287
  %v1221 = vunpack.c.l.b16 %v288
  %v1222 = vunpack.c.l.b16 %v289
  %v1223 = vunpack.c.l.b16 %v290
  %v1224 = vunpack.c.l.b16 %v291
  %v1225 = vunpack.c.l.b16 %v292
  %v1226 = vunpack.c.l.b16 %v293
  %v1227 = vunpack.c.l.b16 %v294
  %v1228 = vunpack.c.l.b16 %v295
  %v1229 = vunpack.c.l.b16 %v296
  %v1230 = vunpack.c.l.b16 %v297
  %v1231 = vunpack.c.l.b16 %v298
  %v1232 = vunpack.c.l.b16 %v299
  %v1233 = vunpack.c.l.b16 %v300
  %v1234 = vunpack.c.l.b16 %v301
  %v1235 = vunpack.c.l.b16 %v302
  %v1236 = vunpack.c.l.b16 %v303
  %v1237 = vunpack.c.l.b16 %v304
  %v1238 = vunpack.c.l.b16 %v305
  %v1239 = vunpack.c.l.b16 %v306
  %v1240 = vunpack.c.l.b16 %v307
  %v1241 = vunpack.c.l.b16 %v308
  %v1242 = vunpack.c.l.b16 %v309
  %v1243 = vunpack.c.l.b16 %v310
  %v1244 = vunpack.c.l.b16 %v311
  %v1245 = vunpack.c.l.b16 %v312
  %v1246 = vunpack.c.l.b16 %v313
  %v1247 = vunpack.c.l.b16 %v314
  %v1248 = vunpack.c.l.b16 %v315
  %v1249 = vunpack.c.l.b16 %v316
  %v1250 = vunpack.c.l.b16 %v317
  %v1251 = vunpack.c.l.b16 %v318
  %v1252 = vunpack.c.l.b16 %v319
  %v1253 = vunpack.c.l.b16 %v320
  %v1254 = vunpack.c.l.b16 %v321
  %v1255 = vunpack.c.l.b16 %v322
  %v1256 = vunpack.c.l.b16 %v323
  %v1257 = vunpack.c.l.b16 %v324
  %v1258 = vunpack.c.l.b16 %v325
  %v1259 = vunpack.c.l.b16 %v326
  %v1260 = vunpack.c.l.b16 %v327
  %v1261 = vunpack.c.l.b16 %v328
  %v1262 = vunpack.c.l.b16 %v329
  %v1263 = vunpack.c.l.b16 %v330
  %v1264 = vunpack.c.l.b16 %v331
  %v1265 = vunpack.c.l.b16 %v332
  %v1266 = vunpack.c.l.b16 %v333
  %v1267 = vunpack.c.l.b16 %v334
  %v1268 = vunpack.c.l.b16 %v335
  %v1269 = vunpack.c.l.b16 %v336
  %v1270 = vunpack.c.l.b16 %v337
  %v1271 = vunpack.c.l.b16 %v338
  %v1272 = vunpack.c.l.b16 %v339
  %v1273 = vunpack.c.l.b16 %v340
  %v1274 = vunpack.c.l.b16 %v341
  %v1275 = vunpack.c.l.b16 %v342
  %v1276 = vunpack.c.l.b16 %v343
  %v1277 = vunpack.c.l.b16 %v344
  %v1278 = vunpack.c.l.b16 %v345
  %v1279 = vunpack.c.l.b16 %v346
  %v1280 = vunpack.c.l.b16 %v347
  %v1281 = vunpack.c.l.b16 %v348
  %v1282 = vunpack.c.l.b16 %v349
  %v1283 = vunpack.c.l.b16 %v350
  %v1284 = vunpack.c.l.b16 %v351
  %v1285 = vunpack.c.l.b16 %v352
  %v1286 = vunpack.c.l.b16 %v353
  %v1287 = vunpack.c.l.b16 %v354
  %v1288 = vunpack.c.l.b16 %v355
  %v1289 = vunpack.c.l.b16 %v356
  %v1290 = vunpack.c.l.b16 %v357
  %v1291 = vunpack.c.l.b16 %v358
  %v1292 = vunpack.c.l.b16 %v359
  %v1293 = vunpack.c.l.b16 %v360
  %v1294 = vunpack.c.l.b16 %v361
  %v1295 = vunpack.c.l.b16 %v362
  %v1296 = vunpack.c.l.b16 %v363
  %v1297 = vunpack.c.l.b16 %v364
  %v1298 = vunpack.c.l.b16 %v365
  %v1299 = vunpack.c.l.b16 %v366
  %v1300 = vunpack.c.l.b16 %v367
  %v1301 = vunpack.c.l.b16 %v368
  %v1302 = vunpack.c.l.b16 %v369
  %v1303 = vunpack.c.l.b16 %v370
  %v1304 = vunpack.c.l.b16 %v371
  %v1305 = vunpack.c.l.b16 %v372
  %v1306 = vunpack.c.l.b16 %v373
  %v1307 = vunpack.c.l.b16 %v374
  %v1308 = vunpack.c.l.b16 %v375
  %v1309 = vunpack.c.l.b16 %v376
  %v1310 = vunpack.c.l.b16 %v377
  %v1311 = vunpack.c.l.b16 %v378
  %v1312 = vunpack.c.l.b16 %v379
  %v1313 = vunpack.c.l.b16 %v380
  %v1314 = vunpack.c.l.b16 %v381
  %v1315 = vunpack.c.l.b16 %v382
  %v1316 = vunpack.c.l.b16 %v383
  %v1317 = vunpack.c.l.b16 %v384
  %v1318 = vunpack.c.l.b16 %v385
  %v1319 = vunpack.c.l.b16 %v386
  %v1320 = vunpack.c.l.b16 %v387
  %v1321 = vunpack.c.l.b16 %v388
  %v1322 = vunpack.c.l.b16 %v389
  %v1323 = vunpack.c.l.b16 %v390
  %v1324 = vunpack.c.l.b16 %v391
  %v1325 = vunpack.c.l.b16 %v392
  %v1326 = vunpack.c.l.b16 %v393
  %v1327 = vunpack.c.l.b16 %v394
  %v1328 = vunpack.c.l.b16 %v395
  %v1329 = vunpack.c.l.b16 %v396
  %v1330 = vunpack.c.l.b16 %v397
  %v1331 = vunpack.c.l.b16 %v398
  %v1332 = vunpack.c.l.b16 %v399
  %v1333 = vunpack.c.l.b16 %v400
  %v1334 = vunpack.c.l.b16 %v401
  %v1335 = vunpack.c.l.b16 %v402
  %v1336 = vunpack.c.l.b16 %v403
  %v1337 = vunpack.c.l.b16 %v404
  %v1338 = vunpack.c.l.b16 %v405
  %v1339 = vunpack.c.l.b16 %v406
  %v1340 = vunpack.c.l.b16 %v407
  %v1341 = vunpack.c.l.b16 %v408
  %v1342 = vunpack.c.l.b16 %v409
  %v1343 = vunpack.c.l.b16 %v410
  %v1344 = vunpack.c.l.b16 %v411
  %v1345 = vunpack.c.l.b16 %v412
  %v1346 = vunpack.c.l.b16 %v413
  %v1347 = vunpack.c.l.b16 %v414
  %v1348 = vunpack.c.l.b16 %v415
  %v1349 = vunpack.c.l.b16 %v416
  %v1350 = vunpack.c.l.b16 %v417
  %v1351 = vunpack.c.l.b16 %v418
  %v1352 = vunpack.c.l.b16 %v419
  %v1353 = vunpack.c.l.b16 %v420
  %v1354 = vunpack.c.l.b16 %v421
  %v1355 = vunpack.c.l.b16 %v422
  %v1356 = vunpack.c.l.b16 %v423
  %v1357 = vunpack.c.l.b16 %v424
  %v1358 = vunpack.c.l.b16 %v425
  %v1359 = vunpack.c.l.b16 %v426
  %v1360 = vunpack.c.l.b16 %v427
  %v1361 = vunpack.c.l.b16 %v428
  %v1362 = vunpack.c.l.b16 %v429
  %v1363 = vunpack.c.l.b16 %v430
  %v1364 = vunpack.c.l.b16 %v431
  %v1365 = vunpack.c.l.b16 %v432
  %v1366 = vunpack.c.l.b16 %v433
  %v1367 = vunpack.c.l.b16 %v434
  %v1368 = vunpack.c.l.b16 %v435
  %v1369 = vunpack.c.l.b16 %v436
  %v1370 = vunpack.c.l.b16 %v437
  %v1371 = vunpack.c.l.b16 %v438
  %v1372 = vunpack.c.l.b16 %v439
  %v1373 = vunpack.c.l.b16 %v440
  %v1374 = vunpack.c.l.b16 %v441
  %v1375 = vunpack.c.l.b16 %v442
  %v1376 = vunpack.c.l.b16 %v443
  %v1377 = vunpack.c.l.b16 %v444
  %v1378 = vunpack.c.l.b16 %v445
  %v1379 = vunpack.c.l.b16 %v446
  %v1380 = vunpack.c.l.b16 %v447
  %v1381 = vunpack.c.l.b16 %v448
  %v1382 = vunpack.c.l.b16 %v449
  %v1383 = vunpack.c.l.b16 %v450
  %v1384 = vunpack.c.l.b16 %v451
  %v1385 = vunpack.c.l.b16 %v452
  %v1386 = vpack.c.b16 %v987, %v986
  %v1387 = vpack.c.b16 %v989, %v988
  %v1388 = vpack.c.b16 %v991, %v990
  %v1389 = vpack.c.b16 %v993, %v992
  %v1390 = vpack.c.b16 %v995, %v994
  %v1391 = vpack.c.b16 %v997, %v996
  %v1392 = vpack.c.b16 %v999, %v998
  %v1393 = vpack.c.b16 %v1001, %v1000
  %v1394 = vpack.c.b16 %v1003, %v1002
  %v1395 = vpack.c.b16 %v1005, %v1004
  %v1396 = vpack.c.b16 %v1007, %v1006
  %v1397 = vpack.c.b16 %v1009, %v1008
  %v1398 = vpack.c.b16 %v1011, %v1010
  %v1399 = vpack.c.b16 %v1013, %v1012
  %v1400 = vpack.c.b16 %v1015, %v1014
  %v1401 = vpack.c.b16 %v1017, %v1016
  %v1402 = vpack.c.b16 %v1019, %v1018
  %v1403 = vpack.c.b16 %v1021, %v1020
  %v1404 = vpack.c.b16 %v1023, %v1022
  %v1405 = vpack.c.b16 %v1025, %v1024
  %v1406 = vpack.c.b16 %v1027, %v1026
  %v1407 = vpack.c.b16 %v1029, %v1028
  %v1408 = vpack.c.b16 %v1031, %v1030
  %v1409 = vpack.c.b16 %v1033, %v1032
  %v1410 = vpack.c.b16 %v1035, %v1034
  %v1411 = vpack.c.b16 %v1037, %v1036
  %v1412 = vpack.c.b16 %v1039, %v1038
  %v1413 = vpack.c.b16 %v1041, %v1040
  %v1414 = vpack.c.b16 %v1043, %v1042
  %v1415 = vpack.c.b16 %v1045, %v1044
  %v1416 = vpack.c.b16 %v1047, %v1046
  %v1417 = vpack.c.b16 %v1049, %v1048
  %v1418 = vpack.c.b16 %v1051, %v1050
  %v1419 = vpack.c.b16 %v1053, %v1052
  %v1420 = vpack.c.b16 %v1055, %v1054
  %v1421 = vpack.c.b16 %v1057, %v1056
  %v1422 = vpack.c.b16 %v1059, %v1058
  %v1423 = vpack.c.b16 %v1061, %v1060
  %v1424 = vpack.c.b16 %v1063, %v1062
  %v1425 = vpack.c.b16 %v1065, %v1064
  %v1426 = vpack.c.b16 %v1067, %v1066
  %v1427 = vpack.c.b16 %v1069, %v1068
  %v1428 = vpack.c.b16 %v1071, %v1070
  %v1429 = vpack.c.b16 %v1073, %v1072
  %v1430 = vpack.c.b16 %v1075, %v1074
  %v1431 = vpack.c.b16 %v1077, %v1076
  %v1432 = vpack.c.b16 %v1079, %v1078
  %v1433 = vpack.c.b16 %v1081, %v1080
  %v1434 = vpack.c.b16 %v1083, %v1082
  %v1435 = vpack.c.b16 %v1085, %v1084
  %v1436 = vpack.c.b16 %v1087, %v1086
  %v1437 = vpack.c.b16 %v1089, %v1088
  %v1438 = vpack.c.b16 %v1091, %v1090
  %v1439 = vpack.c.b16 %v1093, %v1092
  %v1440 = vpack.c.b16 %v1095, %v1094
  %v1441 = vpack.c.b16 %v1097, %v1096
  %v1442 = vpack.c.b16 %v1099, %v1098
  %v1443 = vpack.c.b16 %v1101, %v1100
  %v1444 = vpack.c.b16 %v1103, %v1102
  %v1445 = vpack.c.b16 %v1105, %v1104
  %v1446 = vpack.c.b16 %v1107, %v1106
  %v1447 = vpack.c.b16 %v1109, %v1108
  %v1448 = vpack.c.b16 %v1111, %v1110
  %v1449 = vpack.c.b16 %v1113, %v1112
  %v1450 = vpack.c.b16 %v1115, %v1114
  %v1451 = vpack.c.b16 %v1117, %v1116
  %v1452 = vpack.c.b16 %v1119, %v1118
  %v1453 = vpack.c.b16 %v1121, %v1120
  %v1454 = vpack.c.b16 %v1123, %v1122
  %v1455 = vpack.c.b16 %v1125, %v1124
  %v1456 = vpack.c.b16 %v1127, %v1126
  %v1457 = vpack.c.b16 %v1129, %v1128
  %v1458 = vpack.c.b16 %v1131, %v1130
  %v1459 = vpack.c.b16 %v1133, %v1132
  %v1460 = vpack.c.b16 %v1135, %v1134
  %v1461 = vpack.c.b16 %v1137, %v1136
  %v1462 = vpack.c.b16 %v1139, %v1138
  %v1463 = vpack.c.b16 %v1141, %v1140
  %v1464 = vpack.c.b16 %v1143, %v1142
  %v1465 = vpack.c.b16 %v1145, %v1144
  %v1466 = vpack.c.b16 %v1147, %v1146
  %v1467 = vpack.c.b16 %v1149, %v1148
  %v1468 = vpack.c.b16 %v1151, %v1150
  %v1469 = vpack.c.b16 %v1153, %v1152
  %v1470 = vpack.c.b16 %v1155, %v1154
  %v1471 = vpack.c.b16 %v1157, %v1156
  %v1472 = vpack.c.b16 %v1159, %v1158
  %v1473 = vpack.c.b16 %v1161, %v1160
  %v1474 = vpack.c.b16 %v1163, %v1162
  %v1475 = vpack.c.b16 %v1165, %v1164
  %v1476 = vpack.c.b16 %v1167, %v1166
  %v1477 = vpack.c.b16 %v1169, %v1168
  %v1478 = vpack.c.b16 %v1171, %v1170
  %v1479 = vpack.c.b16 %v1173, %v1172
  %v1480 = vpack.c.b16 %v1175, %v1174
  %v1481 = vpack.c.b16 %v1177, %v1176
  %v1482 = vpack.c.b16 %v1179, %v1178
  %v1483 = vpack.c.b16 %v1181, %v1180
  %v1484 = vpack.c.b16 %v1183, %v1182
  %v1485 = vpack.c.b16 %v1185, %v1184
  %v1486 = vpack.c.b16 %v1187, %v1186
  %v1487 = vpack.c.b16 %v1189, %v1188
  %v1488 = vpack.c.b16 %v1191, %v1190
  %v1489 = vpack.c.b16 %v1193, %v1192
  %v1490 = vpack.c.b16 %v1195, %v1194
  %v1491 = vpack.c.b16 %v1197, %v1196
  %v1492 = vpack.c.b16 %v1199, %v1198
  %v1493 = vpack.c.b16 %v1201, %v1200
  %v1494 = vpack.c.b16 %v1203, %v1202
  %v1495 = vpack.c.b16 %v1205, %v1204
  %v1496 = vpack.c.b16 %v1207, %v1206
  %v1497 = vpack.c.b16 %v1209, %v1208
  %v1498 = vpack.c.b16 %v1211, %v1210
  %v1499 = vpack.c.b16 %v1213, %v1212
  %v1500 = vpack.c.b16 %v1215, %v1214
  %v1501 = vpack.c.b16 %v1217, %v1216
  %v1502 = vpack.c.b16 %v1219, %v1218
  %v1503 = vpack.c.b16 %v1221, %v1220
  %v1504 = vpack.c.b16 %v1223, %v1222
  %v1505 = vpack.c.b16 %v1225, %v1224
  %v1506 = vpack.c.b16 %v1227, %v1226
  %v1507 = vpack.c.b16 %v1229, %v1228
  %v1508 = vpack.c.b16 %v1231, %v1230
  %v1509 = vpack.c.b16 %v1233, %v1232
  %v1510 = vpack.c.b16 %v1235, %v1234
  %v1511 = vpack.c.b16 %v1237, %v1236
  %v1512 = vpack.c.b16 %v1239, %v1238
  %v1513 = vpack.c.b16 %v1241, %v1240
  %v1514 = vpack.c.b16 %v1243, %v1242
  %v1515 = vpack.c.b16 %v1245, %v1244
  %v1516 = vpack.c.b16 %v1247, %v1246
  %v1517 = vpack.c.b16 %v1249, %v1248
  %v1518 = vpack.c.b16 %v1251, %v1250
  %v1519 = vpack.c.b16 %v1253, %v1252
  %v1520 = vpack.c.b16 %v1255, %v1254
  %v1521 = vpack.c.b16 %v1257, %v1256
  %v1522 = vpack.c.b16 %v1259, %v1258
  %v1523 = vpack.c.b16 %v1261, %v1260
  %v1524 = vpack.c.b16 %v1263, %v1262
  %v1525 = vpack.c.b16 %v1265, %v1264
  %v1526 = vpack.c.b16 %v1267, %v1266
  %v1527 = vpack.c.b16 %v1269, %v1268
  %v1528 = vpack.c.b16 %v1271, %v1270
  %v1529 = vpack.c.b16 %v1273, %v1272
  %v1530 = vpack.c.b16 %v1275, %v1274
  %v1531 = vpack.c.b16 %v1277, %v1276
  %v1532 = vpack.c.b16 %v1279, %v1278
  %v1533 = vpack.c.b16 %v1281, %v1280
  %v1534 = vpack.c.b16 %v1283, %v1282
  %v1535 = vpack.c.b16 %v1285, %v1284
  %v1536 = vpack.c.b16 %v1287, %v1286
  %v1537 = vpack.c.b16 %v1289, %v1288
  %v1538 = vpack.c.b16 %v1291, %v1290
  %v1539 = vpack.c.b16 %v1293, %v1292
  %v1540 = vpack.c.b16 %v1295, %v1294
  %v1541 = vpack.c.b16 %v1297, %v1296
  %v1542 = vpack.c.b16 %v1299, %v1298
  %v1543 = vpack.c.b16 %v1301, %v1300
  %v1544 = vpack.c.b16 %v1303, %v1302
  %v1545 = vpack.c.b16 %v1305, %v1304
  %v1546 = vpack.c.b16 %v1307, %v1306
  %v1547 = vpack.c.b16 %v1309, %v1308
  %v1548 = vpack.c.b16 %v1311, %v1310
  %v1549 = vpack.c.b16 %v1313, %v1312
  %v1550 = vpack.c.b16 %v1315, %v1314
  %v1551 = vpack.c.b16 %v1317, %v1316
  %v1552 = vpack.c.b16 %v1319, %v1318
  %v1553 = vpack.c.b16 %v1321, %v1320
  %v1554 = vpack.c.b16 %v1323, %v1322
  %v1555 = vpack.c.b16 %v1325, %v1324
  %v1556 = vpack.c.b16 %v1327, %v1326
  %v1557 = vpack.c.b16 %v1329, %v1328
  %v1558 = vpack.c.b16 %v1331, %v1330
  %v1559 = vpack.c.b16 %v1333, %v1332
  %v1560 = vpack.c.b16 %v1335, %v1334
  %v1561 = vpack.c.b16 %v1337, %v1336
  %v1562 = vpack.c.b16 %v1339, %v1338
  %v1563 = vpack.c.b16 %v1341, %v1340
  %v1564 = vpack.c.b16 %v1343, %v1342
  %v1565 = vpack.c.b16 %v1345, %v1344
  %v1566 = vpack.c.b16 %v1347, %v1346
  %v1567 = vpack.c.b16 %v1349, %v1348
  %v1568 = vpack.c.b16 %v1351, %v1350
  %v1569 = vpack.c.b16 %v1353, %v1352
  %v1570 = vpack.c.b16 %v1355, %v1354
  %v1571 = vpack.c.b16 %v1357, %v1356
  %v1572 = vpack.c.b16 %v1359, %v1358
  %v1573 = vpack.c.b16 %v1361, %v1360
  %v1574 = vpack.c.b16 %v1363, %v1362
  %v1575 = vpack.c.b16 %v1365, %v1364
  %v1576 = vpack.c.b16 %v1367, %v1366
  %v1577 = vpack.c.b16 %v1369, %v1368
  %v1578 = vpack.c.b16 %v1371, %v1370
  %v1579 = vpack.c.b16 %v1373, %v1372
  %v1580 = vpack.c.b16 %v1375, %v1374
  %v1581 = vpack.c.b16 %v1377, %v1376
  %v1582 = vpack.c.b16 %v1379, %v1378
  %v1583 = vpack.c.b16 %v1381, %v1380
  %v1584 = vpack.c.b16 %v1383, %v1382
  %v1585 = vpack.c.b16 %v1385, %v1384
  %1786 = vmatprep.subr.bf16.mxu0 0
  %1787 = vmatpush1.bf16.msra.mxu0 %v1393
  %1788 = vmatprep.subr.bf16.mxu0 0
  %1789 = vmatpush1.bf16.msra.mxu0 %v1392
  %1790 = vmatprep.subr.bf16.mxu0 0
  %1791 = vmatpush1.bf16.msra.mxu0 %v1391
  %1792 = vmatprep.subr.bf16.mxu0 0
  %1793 = vmatpush1.bf16.msra.mxu0 %v1390
  %1794 = vmatprep.subr.bf16.mxu0 0
  %1795 = vmatpush1.bf16.msra.mxu0 %v1389
  %1796 = vmatprep.subr.bf16.mxu0 0
  %1797 = vmatpush1.bf16.msra.mxu0 %v1388
  %1798 = vmatprep.subr.bf16.mxu0 0
  %1799 = vmatpush1.bf16.msra.mxu0 %v1387
  %1800 = vmatprep.subr.bf16.mxu0 0
  %1801 = vmatpush1.bf16.msra.mxu0 %v1386
  %1802 = vmatprep.subr.bf16.mxu0 0
  %1803 = vmatpush2.bf16.msra.mxu0 %v1401
  %1804 = vmatprep.subr.bf16.mxu0 0
  %1805 = vmatpush2.bf16.msra.mxu0 %v1400
  %1806 = vmatprep.subr.bf16.mxu0 0
  %1807 = vmatpush2.bf16.msra.mxu0 %v1399
  %1808 = vmatprep.subr.bf16.mxu0 0
  %1809 = vmatpush2.bf16.msra.mxu0 %v1398
  %1810 = vmatprep.subr.bf16.mxu0 0
  %1811 = vmatpush2.bf16.msra.mxu0 %v1397
  %1812 = vmatprep.subr.bf16.mxu0 0
  %1813 = vmatpush2.bf16.msra.mxu0 %v1396
  %1814 = vmatprep.subr.bf16.mxu0 0
  %1815 = vmatpush2.bf16.msra.mxu0 %v1395
  %1816 = vmatprep.subr.bf16.mxu0 0
  %1817 = vmatpush2.bf16.msra.mxu0 %v1394
  %1818 = vmatprep.mubr.bf16.mxu0 %v537
  %1819 = vmatmul.mubr.bf16.gmra.mxu0 %v536
  %v1820 = vpop.f32.mrf.mxu0
  %v1821 = vadd.f32 %v458, %v1820
  %v1822 = vpop.f32.mrf.mxu0
  %v1823 = vpop.f32.mrf.mxu0
  %v1824 = vadd.f32 %v458, %v1823
  %v1825 = vpop.f32.mrf.mxu0
  %1826 = vdwg.mxu0
  %1827 = vmatprep.subr.bf16.mxu0 0
  %1828 = vmatpush1.bf16.msra.mxu0 %v1409
  %1829 = vmatprep.subr.bf16.mxu0 0
  %1830 = vmatpush1.bf16.msra.mxu0 %v1408
  %1831 = vmatprep.subr.bf16.mxu0 0
  %1832 = vmatpush1.bf16.msra.mxu0 %v1407
  %1833 = vmatprep.subr.bf16.mxu0 0
  %1834 = vmatpush1.bf16.msra.mxu0 %v1406
  %1835 = vmatprep.subr.bf16.mxu0 0
  %1836 = vmatpush1.bf16.msra.mxu0 %v1405
  %1837 = vmatprep.subr.bf16.mxu0 0
  %1838 = vmatpush1.bf16.msra.mxu0 %v1404
  %1839 = vmatprep.subr.bf16.mxu0 0
  %1840 = vmatpush1.bf16.msra.mxu0 %v1403
  %1841 = vmatprep.subr.bf16.mxu0 0
  %1842 = vmatpush1.bf16.msra.mxu0 %v1402
  %1843 = vmatprep.subr.bf16.mxu0 0
  %1844 = vmatpush2.bf16.msra.mxu0 %v1417
  %1845 = vmatprep.subr.bf16.mxu0 0
  %1846 = vmatpush2.bf16.msra.mxu0 %v1416
  %1847 = vmatprep.subr.bf16.mxu0 0
  %1848 = vmatpush2.bf16.msra.mxu0 %v1415
  %1849 = vmatprep.subr.bf16.mxu0 0
  %1850 = vmatpush2.bf16.msra.mxu0 %v1414
  %1851 = vmatprep.subr.bf16.mxu0 0
  %1852 = vmatpush2.bf16.msra.mxu0 %v1413
  %1853 = vmatprep.subr.bf16.mxu0 0
  %1854 = vmatpush2.bf16.msra.mxu0 %v1412
  %1855 = vmatprep.subr.bf16.mxu0 0
  %1856 = vmatpush2.bf16.msra.mxu0 %v1411
  %1857 = vmatprep.subr.bf16.mxu0 0
  %1858 = vmatpush2.bf16.msra.mxu0 %v1410
  %1859 = vmatprep.mubr.bf16.mxu0 %v539
  %1860 = vmatmul.mubr.bf16.gmra.mxu0 %v538
  %v1861 = vpop.f32.mrf.mxu0
  %v1862 = vadd.f32 %v1821, %v1861
  %v1863 = vpop.f32.mrf.mxu0
  %v1864 = vpop.f32.mrf.mxu0
  %v1865 = vadd.f32 %v1824, %v1864
  %v1866 = vpop.f32.mrf.mxu0
  %1867 = vdwg.mxu0
  %1868 = vmatprep.subr.bf16.mxu0 0
  %1869 = vmatpush1.bf16.msra.mxu0 %v1425
  %1870 = vmatprep.subr.bf16.mxu0 0
  %1871 = vmatpush1.bf16.msra.mxu0 %v1424
  %1872 = vmatprep.subr.bf16.mxu0 0
  %1873 = vmatpush1.bf16.msra.mxu0 %v1423
  %1874 = vmatprep.subr.bf16.mxu0 0
  %1875 = vmatpush1.bf16.msra.mxu0 %v1422
  %1876 = vmatprep.subr.bf16.mxu0 0
  %1877 = vmatpush1.bf16.msra.mxu0 %v1421
  %1878 = vmatprep.subr.bf16.mxu0 0
  %1879 = vmatpush1.bf16.msra.mxu0 %v1420
  %1880 = vmatprep.subr.bf16.mxu0 0
  %1881 = vmatpush1.bf16.msra.mxu0 %v1419
  %1882 = vmatprep.subr.bf16.mxu0 0
  %1883 = vmatpush1.bf16.msra.mxu0 %v1418
  %1884 = vmatprep.subr.bf16.mxu0 0
  %1885 = vmatpush2.bf16.msra.mxu0 %v1433
  %1886 = vmatprep.subr.bf16.mxu0 0
  %1887 = vmatpush2.bf16.msra.mxu0 %v1432
  %1888 = vmatprep.subr.bf16.mxu0 0
  %1889 = vmatpush2.bf16.msra.mxu0 %v1431
  %1890 = vmatprep.subr.bf16.mxu0 0
  %1891 = vmatpush2.bf16.msra.mxu0 %v1430
  %1892 = vmatprep.subr.bf16.mxu0 0
  %1893 = vmatpush2.bf16.msra.mxu0 %v1429
  %1894 = vmatprep.subr.bf16.mxu0 0
  %1895 = vmatpush2.bf16.msra.mxu0 %v1428
  %1896 = vmatprep.subr.bf16.mxu0 0
  %1897 = vmatpush2.bf16.msra.mxu0 %v1427
  %1898 = vmatprep.subr.bf16.mxu0 0
  %1899 = vmatpush2.bf16.msra.mxu0 %v1426
  %1900 = vmatprep.mubr.bf16.mxu0 %v541
  %1901 = vmatmul.mubr.bf16.gmra.mxu0 %v540
  %v1902 = vpop.f32.mrf.mxu0
  %v1903 = vadd.f32 %v1862, %v1902
  %v1904 = vpop.f32.mrf.mxu0
  %v1905 = vpop.f32.mrf.mxu0
  %v1906 = vadd.f32 %v1865, %v1905
  %v1907 = vpop.f32.mrf.mxu0
  %1908 = vdwg.mxu0
  %1909 = vmatprep.subr.bf16.mxu0 0
  %1910 = vmatpush1.bf16.msra.mxu0 %v1441
  %1911 = vmatprep.subr.bf16.mxu0 0
  %1912 = vmatpush1.bf16.msra.mxu0 %v1440
  %1913 = vmatprep.subr.bf16.mxu0 0
  %1914 = vmatpush1.bf16.msra.mxu0 %v1439
  %1915 = vmatprep.subr.bf16.mxu0 0
  %1916 = vmatpush1.bf16.msra.mxu0 %v1438
  %1917 = vmatprep.subr.bf16.mxu0 0
  %1918 = vmatpush1.bf16.msra.mxu0 %v1437
  %1919 = vmatprep.subr.bf16.mxu0 0
  %1920 = vmatpush1.bf16.msra.mxu0 %v1436
  %1921 = vmatprep.subr.bf16.mxu0 0
  %1922 = vmatpush1.bf16.msra.mxu0 %v1435
  %1923 = vmatprep.subr.bf16.mxu0 0
  %1924 = vmatpush1.bf16.msra.mxu0 %v1434
  %1925 = vmatprep.subr.bf16.mxu0 0
  %1926 = vmatpush2.bf16.msra.mxu0 %v1449
  %1927 = vmatprep.subr.bf16.mxu0 0
  %1928 = vmatpush2.bf16.msra.mxu0 %v1448
  %1929 = vmatprep.subr.bf16.mxu0 0
  %1930 = vmatpush2.bf16.msra.mxu0 %v1447
  %1931 = vmatprep.subr.bf16.mxu0 0
  %1932 = vmatpush2.bf16.msra.mxu0 %v1446
  %1933 = vmatprep.subr.bf16.mxu0 0
  %1934 = vmatpush2.bf16.msra.mxu0 %v1445
  %1935 = vmatprep.subr.bf16.mxu0 0
  %1936 = vmatpush2.bf16.msra.mxu0 %v1444
  %1937 = vmatprep.subr.bf16.mxu0 0
  %1938 = vmatpush2.bf16.msra.mxu0 %v1443
  %1939 = vmatprep.subr.bf16.mxu0 0
  %1940 = vmatpush2.bf16.msra.mxu0 %v1442
  %1941 = vmatprep.mubr.bf16.mxu0 %v543
  %1942 = vmatmul.mubr.bf16.gmra.mxu0 %v542
  %v1943 = vpop.f32.mrf.mxu0
  %v1944 = vadd.f32 %v1903, %v1943
  %v1945 = vpop.f32.mrf.mxu0
  %v1946 = vpop.f32.mrf.mxu0
  %v1947 = vadd.f32 %v1906, %v1946
  %v1948 = vpop.f32.mrf.mxu0
  %1949 = vdwg.mxu0
  %1950 = vmatprep.subr.bf16.mxu0 0
  %1951 = vmatpush1.bf16.msra.mxu0 %v1457
  %1952 = vmatprep.subr.bf16.mxu0 0
  %1953 = vmatpush1.bf16.msra.mxu0 %v1456
  %1954 = vmatprep.subr.bf16.mxu0 0
  %1955 = vmatpush1.bf16.msra.mxu0 %v1455
  %1956 = vmatprep.subr.bf16.mxu0 0
  %1957 = vmatpush1.bf16.msra.mxu0 %v1454
  %1958 = vmatprep.subr.bf16.mxu0 0
  %1959 = vmatpush1.bf16.msra.mxu0 %v1453
  %1960 = vmatprep.subr.bf16.mxu0 0
  %1961 = vmatpush1.bf16.msra.mxu0 %v1452
  %1962 = vmatprep.subr.bf16.mxu0 0
  %1963 = vmatpush1.bf16.msra.mxu0 %v1451
  %1964 = vmatprep.subr.bf16.mxu0 0
  %1965 = vmatpush1.bf16.msra.mxu0 %v1450
  %1966 = vmatprep.subr.bf16.mxu0 0
  %1967 = vmatpush2.bf16.msra.mxu0 %v1465
  %1968 = vmatprep.subr.bf16.mxu0 0
  %1969 = vmatpush2.bf16.msra.mxu0 %v1464
  %1970 = vmatprep.subr.bf16.mxu0 0
  %1971 = vmatpush2.bf16.msra.mxu0 %v1463
  %1972 = vmatprep.subr.bf16.mxu0 0
  %1973 = vmatpush2.bf16.msra.mxu0 %v1462
  %1974 = vmatprep.subr.bf16.mxu0 0
  %1975 = vmatpush2.bf16.msra.mxu0 %v1461
  %1976 = vmatprep.subr.bf16.mxu0 0
  %1977 = vmatpush2.bf16.msra.mxu0 %v1460
  %1978 = vmatprep.subr.bf16.mxu0 0
  %1979 = vmatpush2.bf16.msra.mxu0 %v1459
  %1980 = vmatprep.subr.bf16.mxu0 0
  %1981 = vmatpush2.bf16.msra.mxu0 %v1458
  %1982 = vmatprep.mubr.bf16.mxu0 %v545
  %1983 = vmatmul.mubr.bf16.gmra.mxu0 %v544
  %v1984 = vpop.f32.mrf.mxu0
  %v1985 = vadd.f32 %v1944, %v1984
  %v1986 = vpop.f32.mrf.mxu0
  %v1987 = vpop.f32.mrf.mxu0
  %v1988 = vadd.f32 %v1947, %v1987
  %v1989 = vpop.f32.mrf.mxu0
  %1990 = vdwg.mxu0
  %1991 = vmatprep.subr.bf16.mxu0 0
  %1992 = vmatpush1.bf16.msra.mxu0 %v1473
  %1993 = vmatprep.subr.bf16.mxu0 0
  %1994 = vmatpush1.bf16.msra.mxu0 %v1472
  %1995 = vmatprep.subr.bf16.mxu0 0
  %1996 = vmatpush1.bf16.msra.mxu0 %v1471
  %1997 = vmatprep.subr.bf16.mxu0 0
  %1998 = vmatpush1.bf16.msra.mxu0 %v1470
  %1999 = vmatprep.subr.bf16.mxu0 0
  %2000 = vmatpush1.bf16.msra.mxu0 %v1469
  %2001 = vmatprep.subr.bf16.mxu0 0
  %2002 = vmatpush1.bf16.msra.mxu0 %v1468
  %2003 = vmatprep.subr.bf16.mxu0 0
  %2004 = vmatpush1.bf16.msra.mxu0 %v1467
  %2005 = vmatprep.subr.bf16.mxu0 0
  %2006 = vmatpush1.bf16.msra.mxu0 %v1466
  %2007 = vmatprep.subr.bf16.mxu0 0
  %2008 = vmatpush2.bf16.msra.mxu0 %v1481
  %2009 = vmatprep.subr.bf16.mxu0 0
  %2010 = vmatpush2.bf16.msra.mxu0 %v1480
  %2011 = vmatprep.subr.bf16.mxu0 0
  %2012 = vmatpush2.bf16.msra.mxu0 %v1479
  %2013 = vmatprep.subr.bf16.mxu0 0
  %2014 = vmatpush2.bf16.msra.mxu0 %v1478
  %2015 = vmatprep.subr.bf16.mxu0 0
  %2016 = vmatpush2.bf16.msra.mxu0 %v1477
  %2017 = vmatprep.subr.bf16.mxu0 0
  %2018 = vmatpush2.bf16.msra.mxu0 %v1476
  %2019 = vmatprep.subr.bf16.mxu0 0
  %2020 = vmatpush2.bf16.msra.mxu0 %v1475
  %2021 = vmatprep.subr.bf16.mxu0 0
  %2022 = vmatpush2.bf16.msra.mxu0 %v1474
  %2023 = vmatprep.mubr.bf16.mxu0 %v547
  %2024 = vmatmul.mubr.bf16.gmra.mxu0 %v546
  %v2025 = vpop.f32.mrf.mxu0
  %v2026 = vadd.f32 %v1985, %v2025
  %v2027 = vpop.f32.mrf.mxu0
  %v2028 = vpop.f32.mrf.mxu0
  %v2029 = vadd.f32 %v1988, %v2028
  %v2030 = vpop.f32.mrf.mxu0
  %2031 = vdwg.mxu0
  %2032 = vmatprep.subr.bf16.mxu0 0
  %2033 = vmatpush1.bf16.msra.mxu0 %v1489
  %2034 = vmatprep.subr.bf16.mxu0 0
  %2035 = vmatpush1.bf16.msra.mxu0 %v1488
  %2036 = vmatprep.subr.bf16.mxu0 0
  %2037 = vmatpush1.bf16.msra.mxu0 %v1487
  %2038 = vmatprep.subr.bf16.mxu0 0
  %2039 = vmatpush1.bf16.msra.mxu0 %v1486
  %2040 = vmatprep.subr.bf16.mxu0 0
  %2041 = vmatpush1.bf16.msra.mxu0 %v1485
  %2042 = vmatprep.subr.bf16.mxu0 0
  %2043 = vmatpush1.bf16.msra.mxu0 %v1484
  %2044 = vmatprep.subr.bf16.mxu0 0
  %2045 = vmatpush1.bf16.msra.mxu0 %v1483
  %2046 = vmatprep.subr.bf16.mxu0 0
  %2047 = vmatpush1.bf16.msra.mxu0 %v1482
  %2048 = vmatprep.subr.bf16.mxu0 0
  %2049 = vmatpush2.bf16.msra.mxu0 %v1497
  %2050 = vmatprep.subr.bf16.mxu0 0
  %2051 = vmatpush2.bf16.msra.mxu0 %v1496
  %2052 = vmatprep.subr.bf16.mxu0 0
  %2053 = vmatpush2.bf16.msra.mxu0 %v1495
  %2054 = vmatprep.subr.bf16.mxu0 0
  %2055 = vmatpush2.bf16.msra.mxu0 %v1494
  %2056 = vmatprep.subr.bf16.mxu0 0
  %2057 = vmatpush2.bf16.msra.mxu0 %v1493
  %2058 = vmatprep.subr.bf16.mxu0 0
  %2059 = vmatpush2.bf16.msra.mxu0 %v1492
  %2060 = vmatprep.subr.bf16.mxu0 0
  %2061 = vmatpush2.bf16.msra.mxu0 %v1491
  %2062 = vmatprep.subr.bf16.mxu0 0
  %2063 = vmatpush2.bf16.msra.mxu0 %v1490
  %2064 = vmatprep.mubr.bf16.mxu0 %v549
  %2065 = vmatmul.mubr.bf16.gmra.mxu0 %v548
  %v2066 = vpop.f32.mrf.mxu0
  %v2067 = vadd.f32 %v2026, %v2066
  %v2068 = vpop.f32.mrf.mxu0
  %v2069 = vpop.f32.mrf.mxu0
  %v2070 = vadd.f32 %v2029, %v2069
  %v2071 = vpop.f32.mrf.mxu0
  %2072 = vdwg.mxu0
  %2073 = vmatprep.subr.bf16.mxu0 0
  %2074 = vmatpush1.bf16.msra.mxu0 %v1505
  %2075 = vmatprep.subr.bf16.mxu0 0
  %2076 = vmatpush1.bf16.msra.mxu0 %v1504
  %2077 = vmatprep.subr.bf16.mxu0 0
  %2078 = vmatpush1.bf16.msra.mxu0 %v1503
  %2079 = vmatprep.subr.bf16.mxu0 0
  %2080 = vmatpush1.bf16.msra.mxu0 %v1502
  %2081 = vmatprep.subr.bf16.mxu0 0
  %2082 = vmatpush1.bf16.msra.mxu0 %v1501
  %2083 = vmatprep.subr.bf16.mxu0 0
  %2084 = vmatpush1.bf16.msra.mxu0 %v1500
  %2085 = vmatprep.subr.bf16.mxu0 0
  %2086 = vmatpush1.bf16.msra.mxu0 %v1499
  %2087 = vmatprep.subr.bf16.mxu0 0
  %2088 = vmatpush1.bf16.msra.mxu0 %v1498
  %2089 = vmatprep.subr.bf16.mxu0 0
  %2090 = vmatpush2.bf16.msra.mxu0 %v1513
  %2091 = vmatprep.subr.bf16.mxu0 0
  %2092 = vmatpush2.bf16.msra.mxu0 %v1512
  %2093 = vmatprep.subr.bf16.mxu0 0
  %2094 = vmatpush2.bf16.msra.mxu0 %v1511
  %2095 = vmatprep.subr.bf16.mxu0 0
  %2096 = vmatpush2.bf16.msra.mxu0 %v1510
  %2097 = vmatprep.subr.bf16.mxu0 0
  %2098 = vmatpush2.bf16.msra.mxu0 %v1509
  %2099 = vmatprep.subr.bf16.mxu0 0
  %2100 = vmatpush2.bf16.msra.mxu0 %v1508
  %2101 = vmatprep.subr.bf16.mxu0 0
  %2102 = vmatpush2.bf16.msra.mxu0 %v1507
  %2103 = vmatprep.subr.bf16.mxu0 0
  %2104 = vmatpush2.bf16.msra.mxu0 %v1506
  %2105 = vmatprep.mubr.bf16.mxu0 %v551
  %2106 = vmatmul.mubr.bf16.gmra.mxu0 %v550
  %v2107 = vpop.f32.mrf.mxu0
  %v2108 = vadd.f32 %v2067, %v2107
  %v2109 = vpop.f32.mrf.mxu0
  %v2110 = vpop.f32.mrf.mxu0
  %v2111 = vadd.f32 %v2070, %v2110
  %v2112 = vpop.f32.mrf.mxu0
  %2113 = vdwg.mxu0
  %2114 = vmatprep.subr.bf16.mxu0 0
  %2115 = vmatpush1.bf16.msra.mxu0 %v1521
  %2116 = vmatprep.subr.bf16.mxu0 0
  %2117 = vmatpush1.bf16.msra.mxu0 %v1520
  %2118 = vmatprep.subr.bf16.mxu0 0
  %2119 = vmatpush1.bf16.msra.mxu0 %v1519
  %2120 = vmatprep.subr.bf16.mxu0 0
  %2121 = vmatpush1.bf16.msra.mxu0 %v1518
  %2122 = vmatprep.subr.bf16.mxu0 0
  %2123 = vmatpush1.bf16.msra.mxu0 %v1517
  %2124 = vmatprep.subr.bf16.mxu0 0
  %2125 = vmatpush1.bf16.msra.mxu0 %v1516
  %2126 = vmatprep.subr.bf16.mxu0 0
  %2127 = vmatpush1.bf16.msra.mxu0 %v1515
  %2128 = vmatprep.subr.bf16.mxu0 0
  %2129 = vmatpush1.bf16.msra.mxu0 %v1514
  %2130 = vmatprep.subr.bf16.mxu0 0
  %2131 = vmatpush2.bf16.msra.mxu0 %v1529
  %2132 = vmatprep.subr.bf16.mxu0 0
  %2133 = vmatpush2.bf16.msra.mxu0 %v1528
  %2134 = vmatprep.subr.bf16.mxu0 0
  %2135 = vmatpush2.bf16.msra.mxu0 %v1527
  %2136 = vmatprep.subr.bf16.mxu0 0
  %2137 = vmatpush2.bf16.msra.mxu0 %v1526
  %2138 = vmatprep.subr.bf16.mxu0 0
  %2139 = vmatpush2.bf16.msra.mxu0 %v1525
  %2140 = vmatprep.subr.bf16.mxu0 0
  %2141 = vmatpush2.bf16.msra.mxu0 %v1524
  %2142 = vmatprep.subr.bf16.mxu0 0
  %2143 = vmatpush2.bf16.msra.mxu0 %v1523
  %2144 = vmatprep.subr.bf16.mxu0 0
  %2145 = vmatpush2.bf16.msra.mxu0 %v1522
  %2146 = vmatprep.mubr.bf16.mxu0 %v553
  %2147 = vmatmul.mubr.bf16.gmra.mxu0 %v552
  %v2148 = vpop.f32.mrf.mxu0
  %v2149 = vadd.f32 %v2108, %v2148
  %v2150 = vpop.f32.mrf.mxu0
  %v2151 = vpop.f32.mrf.mxu0
  %v2152 = vadd.f32 %v2111, %v2151
  %v2153 = vpop.f32.mrf.mxu0
  %2154 = vdwg.mxu0
  %2155 = vmatprep.subr.bf16.mxu0 0
  %2156 = vmatpush1.bf16.msra.mxu0 %v1537
  %2157 = vmatprep.subr.bf16.mxu0 0
  %2158 = vmatpush1.bf16.msra.mxu0 %v1536
  %2159 = vmatprep.subr.bf16.mxu0 0
  %2160 = vmatpush1.bf16.msra.mxu0 %v1535
  %2161 = vmatprep.subr.bf16.mxu0 0
  %2162 = vmatpush1.bf16.msra.mxu0 %v1534
  %2163 = vmatprep.subr.bf16.mxu0 0
  %2164 = vmatpush1.bf16.msra.mxu0 %v1533
  %2165 = vmatprep.subr.bf16.mxu0 0
  %2166 = vmatpush1.bf16.msra.mxu0 %v1532
  %2167 = vmatprep.subr.bf16.mxu0 0
  %2168 = vmatpush1.bf16.msra.mxu0 %v1531
  %2169 = vmatprep.subr.bf16.mxu0 0
  %2170 = vmatpush1.bf16.msra.mxu0 %v1530
  %2171 = vmatprep.subr.bf16.mxu0 0
  %2172 = vmatpush2.bf16.msra.mxu0 %v1545
  %2173 = vmatprep.subr.bf16.mxu0 0
  %2174 = vmatpush2.bf16.msra.mxu0 %v1544
  %2175 = vmatprep.subr.bf16.mxu0 0
  %2176 = vmatpush2.bf16.msra.mxu0 %v1543
  %2177 = vmatprep.subr.bf16.mxu0 0
  %2178 = vmatpush2.bf16.msra.mxu0 %v1542
  %2179 = vmatprep.subr.bf16.mxu0 0
  %2180 = vmatpush2.bf16.msra.mxu0 %v1541
  %2181 = vmatprep.subr.bf16.mxu0 0
  %2182 = vmatpush2.bf16.msra.mxu0 %v1540
  %2183 = vmatprep.subr.bf16.mxu0 0
  %2184 = vmatpush2.bf16.msra.mxu0 %v1539
  %2185 = vmatprep.subr.bf16.mxu0 0
  %2186 = vmatpush2.bf16.msra.mxu0 %v1538
  %2187 = vmatprep.mubr.bf16.mxu0 %v555
  %2188 = vmatmul.mubr.bf16.gmra.mxu0 %v554
  %v2189 = vpop.f32.mrf.mxu0
  %v2190 = vadd.f32 %v2149, %v2189
  %v2191 = vpop.f32.mrf.mxu0
  %v2192 = vpop.f32.mrf.mxu0
  %v2193 = vadd.f32 %v2152, %v2192
  %v2194 = vpop.f32.mrf.mxu0
  %2195 = vdwg.mxu0
  %2196 = vmatprep.subr.bf16.mxu0 0
  %2197 = vmatpush1.bf16.msra.mxu0 %v1553
  %2198 = vmatprep.subr.bf16.mxu0 0
  %2199 = vmatpush1.bf16.msra.mxu0 %v1552
  %2200 = vmatprep.subr.bf16.mxu0 0
  %2201 = vmatpush1.bf16.msra.mxu0 %v1551
  %2202 = vmatprep.subr.bf16.mxu0 0
  %2203 = vmatpush1.bf16.msra.mxu0 %v1550
  %2204 = vmatprep.subr.bf16.mxu0 0
  %2205 = vmatpush1.bf16.msra.mxu0 %v1549
  %2206 = vmatprep.subr.bf16.mxu0 0
  %2207 = vmatpush1.bf16.msra.mxu0 %v1548
  %2208 = vmatprep.subr.bf16.mxu0 0
  %2209 = vmatpush1.bf16.msra.mxu0 %v1547
  %2210 = vmatprep.subr.bf16.mxu0 0
  %2211 = vmatpush1.bf16.msra.mxu0 %v1546
  %2212 = vmatprep.subr.bf16.mxu0 0
  %2213 = vmatpush2.bf16.msra.mxu0 %v1561
  %2214 = vmatprep.subr.bf16.mxu0 0
  %2215 = vmatpush2.bf16.msra.mxu0 %v1560
  %2216 = vmatprep.subr.bf16.mxu0 0
  %2217 = vmatpush2.bf16.msra.mxu0 %v1559
  %2218 = vmatprep.subr.bf16.mxu0 0
  %2219 = vmatpush2.bf16.msra.mxu0 %v1558
  %2220 = vmatprep.subr.bf16.mxu0 0
  %2221 = vmatpush2.bf16.msra.mxu0 %v1557
  %2222 = vmatprep.subr.bf16.mxu0 0
  %2223 = vmatpush2.bf16.msra.mxu0 %v1556
  %2224 = vmatprep.subr.bf16.mxu0 0
  %2225 = vmatpush2.bf16.msra.mxu0 %v1555
  %2226 = vmatprep.subr.bf16.mxu0 0
  %2227 = vmatpush2.bf16.msra.mxu0 %v1554
  %2228 = vmatprep.mubr.bf16.mxu0 %v557
  %2229 = vmatmul.mubr.bf16.gmra.mxu0 %v556
  %v2230 = vpop.f32.mrf.mxu0
  %v2231 = vadd.f32 %v2190, %v2230
  %v2232 = vpop.f32.mrf.mxu0
  %v2233 = vpop.f32.mrf.mxu0
  %v2234 = vadd.f32 %v2193, %v2233
  %v2235 = vpop.f32.mrf.mxu0
  %2236 = vdwg.mxu0
  %2237 = vmatprep.subr.bf16.mxu0 0
  %2238 = vmatpush1.bf16.msra.mxu0 %v1569
  %2239 = vmatprep.subr.bf16.mxu0 0
  %2240 = vmatpush1.bf16.msra.mxu0 %v1568
  %2241 = vmatprep.subr.bf16.mxu0 0
  %2242 = vmatpush1.bf16.msra.mxu0 %v1567
  %2243 = vmatprep.subr.bf16.mxu0 0
  %2244 = vmatpush1.bf16.msra.mxu0 %v1566
  %2245 = vmatprep.subr.bf16.mxu0 0
  %2246 = vmatpush1.bf16.msra.mxu0 %v1565
  %2247 = vmatprep.subr.bf16.mxu0 0
  %2248 = vmatpush1.bf16.msra.mxu0 %v1564
  %2249 = vmatprep.subr.bf16.mxu0 0
  %2250 = vmatpush1.bf16.msra.mxu0 %v1563
  %2251 = vmatprep.subr.bf16.mxu0 0
  %2252 = vmatpush1.bf16.msra.mxu0 %v1562
  %2253 = vmatprep.subr.bf16.mxu0 0
  %2254 = vmatpush2.bf16.msra.mxu0 %v1577
  %2255 = vmatprep.subr.bf16.mxu0 0
  %2256 = vmatpush2.bf16.msra.mxu0 %v1576
  %2257 = vmatprep.subr.bf16.mxu0 0
  %2258 = vmatpush2.bf16.msra.mxu0 %v1575
  %2259 = vmatprep.subr.bf16.mxu0 0
  %2260 = vmatpush2.bf16.msra.mxu0 %v1574
  %2261 = vmatprep.subr.bf16.mxu0 0
  %2262 = vmatpush2.bf16.msra.mxu0 %v1573
  %2263 = vmatprep.subr.bf16.mxu0 0
  %2264 = vmatpush2.bf16.msra.mxu0 %v1572
  %2265 = vmatprep.subr.bf16.mxu0 0
  %2266 = vmatpush2.bf16.msra.mxu0 %v1571
  %2267 = vmatprep.subr.bf16.mxu0 0
  %2268 = vmatpush2.bf16.msra.mxu0 %v1570
  %2269 = vmatprep.mubr.bf16.mxu0 %v559
  %2270 = vmatmul.mubr.bf16.gmra.mxu0 %v558
  %v2271 = vpop.f32.mrf.mxu0
  %v2272 = vadd.f32 %v2231, %v2271
  %v2273 = vpop.f32.mrf.mxu0
  %v2274 = vpop.f32.mrf.mxu0
  %v2275 = vadd.f32 %v2234, %v2274
  %v2276 = vpop.f32.mrf.mxu0
  %2277 = vdwg.mxu0
  %2278 = vmatprep.subr.bf16.mxu0 0
  %2279 = vmatpush1.bf16.msra.mxu0 %v1585
  %2280 = vmatprep.subr.bf16.mxu0 0
  %2281 = vmatpush1.bf16.msra.mxu0 %v1584
  %2282 = vmatprep.subr.bf16.mxu0 0
  %2283 = vmatpush1.bf16.msra.mxu0 %v1583
  %2284 = vmatprep.subr.bf16.mxu0 0
  %2285 = vmatpush1.bf16.msra.mxu0 %v1582
  %2286 = vmatprep.subr.bf16.mxu0 0
  %2287 = vmatpush1.bf16.msra.mxu0 %v1581
  %2288 = vmatprep.subr.bf16.mxu0 0
  %2289 = vmatpush1.bf16.msra.mxu0 %v1580
  %2290 = vmatprep.subr.bf16.mxu0 0
  %2291 = vmatpush1.bf16.msra.mxu0 %v1579
  %2292 = vmatprep.subr.bf16.mxu0 0
  %2293 = vmatpush1.bf16.msra.mxu0 %v1578
  %2294 = vmatprep.subr.bf16.mxu0 0
  %2295 = vmatpush2.bf16.msra.mxu0 0
  %2296 = vmatprep.subr.bf16.mxu0 0
  %2297 = vmatpush2.bf16.msra.mxu0 0
  %2298 = vmatprep.subr.bf16.mxu0 0
  %2299 = vmatpush2.bf16.msra.mxu0 0
  %2300 = vmatprep.subr.bf16.mxu0 0
  %2301 = vmatpush2.bf16.msra.mxu0 0
  %2302 = vmatprep.subr.bf16.mxu0 0
  %2303 = vmatpush2.bf16.msra.mxu0 0
  %2304 = vmatprep.subr.bf16.mxu0 0
  %2305 = vmatpush2.bf16.msra.mxu0 0
  %2306 = vmatprep.subr.bf16.mxu0 0
  %2307 = vmatpush2.bf16.msra.mxu0 0
  %2308 = vmatprep.subr.bf16.mxu0 0
  %2309 = vmatpush2.bf16.msra.mxu0 0
  %2310 = vmatprep.mubr.bf16.mxu0 0
  %2311 = vmatmul.mubr.bf16.gmra.mxu0 %v560
  %v2312 = vpop.f32.mrf.mxu0
  %v2313 = vadd.f32 %v2272, %v2312
  %v2314 = vpop.f32.mrf.mxu0
  %v2315 = vpop.f32.mrf.mxu0
  %v2316 = vadd.f32 %v2275, %v2315
  %v2317 = vpop.f32.mrf.mxu0
  %2318 = vdwg.mxu0
  %v2319 = vmax.f32 %v2313, 0.0
  %v2320 = vmax.f32 %v2316, 0.0
  %v2321 = vpack.c.bf16 %v2320, %v2319
  %v2322 = vld [vmem:[%s3] sm:$0xf]
  %v2323 = vld [vmem:[%s3 + $0x4] sm:$0xf]
  %v2324 = vld [vmem:[%s3 + $0x8] sm:$0xf]
  %v2325 = vld [vmem:[%s3 + $0xc] sm:$0xf]
  %v2326 = vld [vmem:[%s3 + $0x10] sm:$0xf]
  %v2327 = vld [vmem:[%s3 + $0x14] sm:$0xf]
  %v2328 = vld [vmem:[%s3 + $0x18] sm:$0xf]
  %v2329 = vld [vmem:[%s3 + $0x1c] sm:$0xf]
  %v2330 = vld [vmem:[%s3 + $0x20] sm:$0xf]
  %v2331 = vld [vmem:[%s3 + $0x24] sm:$0xf]
  %v2332 = vld [vmem:[%s3 + $0x28] sm:$0xf]
  %v2333 = vld [vmem:[%s3 + $0x2c] sm:$0xf]
  %v2334 = vld [vmem:[%s3 + $0x30] sm:$0xf]
  %v2335 = vld [vmem:[%s3 + $0x34] sm:$0xf]
  %v2336 = vld [vmem:[%s3 + $0x38] sm:$0xf]
  %v2337 = vld [vmem:[%s3 + $0x3c] sm:$0xf]
  %v2338 = vld [vmem:[%s4] sm:$0x1]
  %v2340 = vlaneseq
  %v2341 = vshrl.u32 %v2340, 7
  %v2342 = vsub.s32 0, %v2341
  %v2343 = vrot.slane %v2338, %v2342
  %v2361 = vunpack.c.l.b16 %v2322
  %v2362 = vunpack.c.l.b16 %v2323
  %v2363 = vunpack.c.l.b16 %v2324
  %v2364 = vunpack.c.l.b16 %v2325
  %v2365 = vunpack.c.l.b16 %v2326
  %v2366 = vunpack.c.l.b16 %v2327
  %v2367 = vunpack.c.l.b16 %v2328
  %v2368 = vunpack.c.l.b16 %v2329
  %v2369 = vunpack.c.l.b16 %v2330
  %v2370 = vunpack.c.l.b16 %v2331
  %v2371 = vunpack.c.l.b16 %v2332
  %v2372 = vunpack.c.l.b16 %v2333
  %v2373 = vunpack.c.l.b16 %v2334
  %v2374 = vunpack.c.l.b16 %v2335
  %v2375 = vunpack.c.l.b16 %v2336
  %v2376 = vunpack.c.l.b16 %v2337
  %v2377 = vpack.c.b16 %v2362, %v2361
  %v2378 = vpack.c.b16 %v2364, %v2363
  %v2379 = vpack.c.b16 %v2366, %v2365
  %v2380 = vpack.c.b16 %v2368, %v2367
  %v2381 = vpack.c.b16 %v2370, %v2369
  %v2382 = vpack.c.b16 %v2372, %v2371
  %v2383 = vpack.c.b16 %v2374, %v2373
  %v2384 = vpack.c.b16 %v2376, %v2375
  %2393 = vmatprep.subr.bf16.mxu0 0
  %2394 = vmatpush1.bf16.msra.mxu0 %v2384
  %2395 = vmatprep.subr.bf16.mxu0 0
  %2396 = vmatpush1.bf16.msra.mxu0 %v2383
  %2397 = vmatprep.subr.bf16.mxu0 0
  %2398 = vmatpush1.bf16.msra.mxu0 %v2382
  %2399 = vmatprep.subr.bf16.mxu0 0
  %2400 = vmatpush1.bf16.msra.mxu0 %v2381
  %2401 = vmatprep.subr.bf16.mxu0 0
  %2402 = vmatpush1.bf16.msra.mxu0 %v2380
  %2403 = vmatprep.subr.bf16.mxu0 0
  %2404 = vmatpush1.bf16.msra.mxu0 %v2379
  %2405 = vmatprep.subr.bf16.mxu0 0
  %2406 = vmatpush1.bf16.msra.mxu0 %v2378
  %2407 = vmatprep.subr.bf16.mxu0 0
  %2408 = vmatpush1.bf16.msra.mxu0 %v2377
  %2409 = vmatprep.subr.bf16.mxu0 0
  %2410 = vmatpush2.bf16.msra.mxu0 0
  %2411 = vmatprep.subr.bf16.mxu0 0
  %2412 = vmatpush2.bf16.msra.mxu0 0
  %2413 = vmatprep.subr.bf16.mxu0 0
  %2414 = vmatpush2.bf16.msra.mxu0 0
  %2415 = vmatprep.subr.bf16.mxu0 0
  %2416 = vmatpush2.bf16.msra.mxu0 0
  %2417 = vmatprep.subr.bf16.mxu0 0
  %2418 = vmatpush2.bf16.msra.mxu0 0
  %2419 = vmatprep.subr.bf16.mxu0 0
  %2420 = vmatpush2.bf16.msra.mxu0 0
  %2421 = vmatprep.subr.bf16.mxu0 0
  %2422 = vmatpush2.bf16.msra.mxu0 0
  %2423 = vmatprep.subr.bf16.mxu0 0
  %2424 = vmatpush2.bf16.msra.mxu0 0
  %2425 = vmatprep.mubr.bf16.mxu0 0
  %2426 = vmatmul.mubr.bf16.gmra.mxu0 %v2321
  %v2427 = vpop.f32.mrf.mxu0
  %v2428 = vadd.f32 %v2343, %v2427
  %v2429 = vpop.f32.mrf.mxu0
  %v2430 = vpop.f32.mrf.mxu0
  %v2431 = vadd.f32 %v2343, %v2430
  %v2432 = vpop.f32.mrf.mxu0
  %2433 = vdwg.mxu0
  %v2434 = vmax.f32 %v2428, 0.0
  %v2435 = vmax.f32 %v2431, 0.0
  %v2436 = vpack.c.bf16 %v2435, %v2434
  %v2437 = vld [vmem:[%s5] sm:$0xf]
  %v2438 = vld [vmem:[%s5 + $0x4] sm:$0xf]
  %v2439 = vld [vmem:[%s5 + $0x8] sm:$0xf]
  %v2440 = vld [vmem:[%s5 + $0xc] sm:$0xf]
  %v2441 = vld [vmem:[%s5 + $0x10] sm:$0xf]
  %v2442 = vld [vmem:[%s5 + $0x14] sm:$0xf]
  %v2443 = vld [vmem:[%s5 + $0x18] sm:$0xf]
  %v2444 = vld [vmem:[%s5 + $0x1c] sm:$0xf]
  %v2445 = vld [vmem:[%s5 + $0x20] sm:$0xf]
  %v2446 = vld [vmem:[%s5 + $0x24] sm:$0xf]
  %v2447 = vld [vmem:[%s5 + $0x28] sm:$0xf]
  %v2448 = vld [vmem:[%s5 + $0x2c] sm:$0xf]
  %v2449 = vld [vmem:[%s5 + $0x30] sm:$0xf]
  %v2450 = vld [vmem:[%s5 + $0x34] sm:$0xf]
  %v2451 = vld [vmem:[%s5 + $0x38] sm:$0xf]
  %v2452 = vld [vmem:[%s5 + $0x3c] sm:$0xf]
  %v2453 = vld [vmem:[%s6] sm:$0x1]
  %v2455 = vlaneseq
  %v2456 = vshrl.u32 %v2455, 7
  %v2457 = vsub.s32 0, %v2456
  %v2458 = vrot.slane %v2453, %v2457
  %v2476 = vunpack.c.l.b16 %v2437
  %v2477 = vunpack.c.l.b16 %v2438
  %v2478 = vunpack.c.l.b16 %v2439
  %v2479 = vunpack.c.l.b16 %v2440
  %v2480 = vunpack.c.l.b16 %v2441
  %v2481 = vunpack.c.l.b16 %v2442
  %v2482 = vunpack.c.l.b16 %v2443
  %v2483 = vunpack.c.l.b16 %v2444
  %v2484 = vunpack.c.l.b16 %v2445
  %v2485 = vunpack.c.l.b16 %v2446
  %v2486 = vunpack.c.l.b16 %v2447
  %v2487 = vunpack.c.l.b16 %v2448
  %v2488 = vunpack.c.l.b16 %v2449
  %v2489 = vunpack.c.l.b16 %v2450
  %v2490 = vunpack.c.l.b16 %v2451
  %v2491 = vunpack.c.l.b16 %v2452
  %v2492 = vpack.c.b16 %v2477, %v2476
  %v2493 = vpack.c.b16 %v2479, %v2478
  %v2494 = vpack.c.b16 %v2481, %v2480
  %v2495 = vpack.c.b16 %v2483, %v2482
  %v2496 = vpack.c.b16 %v2485, %v2484
  %v2497 = vpack.c.b16 %v2487, %v2486
  %v2498 = vpack.c.b16 %v2489, %v2488
  %v2499 = vpack.c.b16 %v2491, %v2490
  %2508 = vmatprep.subr.bf16.mxu0 0
  %2509 = vmatpush1.bf16.msra.mxu0 %v2499
  %2510 = vmatprep.subr.bf16.mxu0 0
  %2511 = vmatpush1.bf16.msra.mxu0 %v2498
  %2512 = vmatprep.subr.bf16.mxu0 0
  %2513 = vmatpush1.bf16.msra.mxu0 %v2497
  %2514 = vmatprep.subr.bf16.mxu0 0
  %2515 = vmatpush1.bf16.msra.mxu0 %v2496
  %2516 = vmatprep.subr.bf16.mxu0 0
  %2517 = vmatpush1.bf16.msra.mxu0 %v2495
  %2518 = vmatprep.subr.bf16.mxu0 0
  %2519 = vmatpush1.bf16.msra.mxu0 %v2494
  %2520 = vmatprep.subr.bf16.mxu0 0
  %2521 = vmatpush1.bf16.msra.mxu0 %v2493
  %2522 = vmatprep.subr.bf16.mxu0 0
  %2523 = vmatpush1.bf16.msra.mxu0 %v2492
  %2524 = vmatprep.subr.bf16.mxu0 0
  %2525 = vmatpush2.bf16.msra.mxu0 0
  %2526 = vmatprep.subr.bf16.mxu0 0
  %2527 = vmatpush2.bf16.msra.mxu0 0
  %2528 = vmatprep.subr.bf16.mxu0 0
  %2529 = vmatpush2.bf16.msra.mxu0 0
  %2530 = vmatprep.subr.bf16.mxu0 0
  %2531 = vmatpush2.bf16.msra.mxu0 0
  %2532 = vmatprep.subr.bf16.mxu0 0
  %2533 = vmatpush2.bf16.msra.mxu0 0
  %2534 = vmatprep.subr.bf16.mxu0 0
  %2535 = vmatpush2.bf16.msra.mxu0 0
  %2536 = vmatprep.subr.bf16.mxu0 0
  %2537 = vmatpush2.bf16.msra.mxu0 0
  %2538 = vmatprep.subr.bf16.mxu0 0
  %2539 = vmatpush2.bf16.msra.mxu0 0
  %2540 = vmatprep.mubr.bf16.mxu0 0
  %2541 = vmatmul.mubr.bf16.gmra.mxu0 %v2436
  %v2542 = vpop.f32.mrf.mxu0
  %v2543 = vadd.f32 %v2458, %v2542
  %v2544 = vpop.f32.mrf.mxu0
  %v2545 = vpop.f32.mrf.mxu0
  %v2546 = vadd.f32 %v2458, %v2545
  %v2547 = vpop.f32.mrf.mxu0
  %2548 = vdwg.mxu0
  %2549 = vst [vmem:[%s7] sm:$0xff] %v2543
  %2550 = vst [vmem:[%s7 + $0x8] sm:$0xff] %v2546
  // Predicated region
  $region30: #{net_forward.5} parent=0 // pred_check
    _
  $region31: #{net_forward.5} parent=0 // pred_check_branch
    %2552 = sbr.rel (0) target = $region33
  $region32: #{net_forward.5} parent=0 // pred_region
    _
  $region33: #{net_forward.5} parent=0 // pred_fallthru
    _
  // Predicated region
  $region34: #{net_forward.5} parent=0 // pred_check
    _
  $region35: #{net_forward.5} parent=0 // pred_check_branch
    %2554 = sbr.rel (0) target = $region37
  $region36: #{net_forward.5} parent=0 // pred_region
    _
  $region37: #{net_forward.5} parent=0 // pred_fallthru
    _

</llo_original>
